<compile_context>
chip_gen: v6e
topology: v6e:2x2x1
jax: 0.10.0
libtpu: 0.0.40
codegen_flags: <defaults>
</compile_context>

<pallas_src>
import functools

import jax
import jax.numpy as jnp
import numpy as np
from jax.experimental import pallas as pl
from jax.experimental.pallas import tpu as pltpu


def _gelu_tanh(x):
    # TODO(synk): torch.nn.functional.gelu defaults to the exact erf form; the tanh
    # approximation is used here (erf has no guaranteed Mosaic lowering).
    c = 0.7978845608028654  # sqrt(2/pi)
    return 0.5 * x * (1.0 + jnp.tanh(c * (x + 0.044715 * (x * x * x))))


def _conv3x3_masks(H, W):
    """(9, H*W) f32 validity masks for a zero-padded 3x3 conv on a flattened image."""
    idx = np.arange(H * W)
    row, col = idx // W, idx % W
    ms = []
    for dy in (-1, 0, 1):
        for dx in (-1, 0, 1):
            valid = ((col + dx >= 0) & (col + dx < W) &
                     (row + dy >= 0) & (row + dy < H))
            ms.append(valid.astype(np.float32))
    return jnp.asarray(np.stack(ms, axis=0))


def _qkv_interleave_matrix(C):
    """(3C, 3C) permutation P: acc rows ordered (j, g) -> grouped-conv order 3g + j."""
    P = np.zeros((3 * C, 3 * C), np.float32)
    for o in range(3 * C):
        P[o, (o % 3) * C + (o // 3)] = 1.0
    return jnp.asarray(P)


def _taps(W):
    for dy in (-1, 0, 1):
        for dx in (-1, 0, 1):
            yield (dy + 1) * 3 + (dx + 1), dy * W + dx


def _se_block_kernel(temps_ref, fw_ref, h0_ref, masks_ref, perm_ref, wqkv_ref,
                     wp_ref, win_ref, wdw_ref, wout_ref, fout_ref, hout_ref,
                     *, num_res, C, hidden, H, W):
    f32 = jnp.float32
    HW = H * W
    masks = masks_ref[...]                      # (9, HW), resident
    perm = perm_ref[...]                        # (3C, 3C), resident
    fw0 = fw_ref[0].astype(f32)                 # (C, HW)
    h00 = h0_ref[0].astype(f32)

    def shifted(x, s):
        # shifted(x, s)[p] = x[p + s] on the flattened spatial axis
        return x if s == 0 else pltpu.roll(x, (-s) % HW, axis=1)

    def layer_body(l, carry):
        fw, h0 = carry

        # ---- Recurr_Attention: qkv = grouped3x3(fw, Wq) + grouped3x3(h0, Wh) --------
        # Grouped conv (groups=C, 3 outputs/group): output channel 3g+j reads input g,
        # so accumulate per within-group index j directly on the un-replicated tiles.
        wl = wqkv_ref[l]                        # (C, 54): [wq j=0..2 | wh j=0..2] x 9 taps
        acc = [None, None, None]
        for tap, s in _taps(W):
            fr = shifted(fw, s)
            hr = shifted(h0, s)
            if tap != 4:                         # center-tap mask is all ones -> skip
                m = masks[tap:tap + 1, :]
                fr = fr * m
                hr = hr * m
            for j in range(3):
                cq = wl[:, j * 9 + tap: j * 9 + tap + 1]            # (C, 1)
                ch = wl[:, 27 + j * 9 + tap: 27 + j * 9 + tap + 1]  # (C, 1)
                term = cq * fr + ch * hr
                acc[j] = term if acc[j] is None else acc[j] + term
        # acc_cat rows are ordered (j, g); restore channel order 3g+j via one MXU matmul.
        acc_cat = jnp.concatenate(acc, axis=0)                       # (3C, HW)
        qkv = jnp.dot(perm, acc_cat, preferred_element_type=f32)     # (3C, HW)
        q = qkv[0 * C:1 * C]
        k = qkv[1 * C:2 * C]
        v = qkv[2 * C:3 * C]

        # torch.nn.functional.normalize(., dim=-1), eps=1e-12 (rsqrt -> EUP)
        qn = q * jax.lax.rsqrt(jnp.maximum(jnp.sum(q * q, -1, keepdims=True), 1e-24))
        kn = k * jax.lax.rsqrt(jnp.maximum(jnp.sum(k * k, -1, keepdims=True), 1e-24))

        # channel attention (num_heads = 1 in SEBlock): (C, HW) x (C, HW)^T -> (C, C)
        logits = jax.lax.dot_general(qn, kn, (((1,), (1,)), ((), ())),
                                     preferred_element_type=f32) * temps_ref[l]
        logits = logits - jnp.max(logits, axis=-1, keepdims=True)
        pexp = jnp.exp(logits)
        attn = pexp * (1.0 / jnp.sum(pexp, axis=-1, keepdims=True))
        out = jnp.dot(attn, v, preferred_element_type=f32)               # (C, HW)
        f_h1 = jnp.dot(wp_ref[l], out, preferred_element_type=f32)       # 1x1 conv

        f_o1 = fw + f_h1
        h_new = f_h1 + h0

        # ---- FeedForward: 1x1 -> depthwise 3x3 -> gelu gate -> 1x1, + residual ------
        t = jnp.dot(win_ref[l], f_o1, preferred_element_type=f32)        # (2h, HW)
        wdw = wdw_ref[l]                                                  # (2h, 9)
        accf = None
        for tap, s in _taps(W):
            xr = shifted(t, s)
            if tap != 4:
                xr = xr * masks[tap:tap + 1, :]
            term = wdw[:, tap:tap + 1] * xr
            accf = term if accf is None else accf + term
        g = _gelu_tanh(accf[:hidden]) * accf[hidden:]
        y = jnp.dot(wout_ref[l], g, preferred_element_type=f32)          # (C, HW)
        return (f_o1 + y, h_new)

    fw_f, h_f = jax.lax.fori_loop(0, num_res, layer_body, (fw0, h00))
    fout_ref[0] = fw_f.astype(fout_ref.dtype)
    hout_ref[0] = h_f.astype(hout_ref.dtype)


def se_block_forward(fw, h0, params):
    """SEBlock.forward for x = (Fw, F_h0), both (B, C, H, W). Returns (out1, out2)."""
    B, C, H, W = fw.shape
    HW = H * W
    L = len(params)
    hidden = params[0]['w_out'].shape[1]
    # Layout assumptions (hold for the test shapes): H*W multiple of 128 (lane axis),
    # C and 2*hidden multiples of 8 (sublane axis).

    masks = _conv3x3_masks(H, W)                 # (9, HW)
    perm = _qkv_interleave_matrix(C)             # (3C, 3C)

    # Stacked, kernel-friendly weight layouts (fully VMEM-resident for the whole call).
    temps = jnp.concatenate([lp['temperature'].reshape(-1)[:1] for lp in params])  # (L,)
    # w_qkv[l, g, j*9 + t] = wq_l[3g+j, t];  w_qkv[l, g, 27 + j*9 + t] = wh_l[3g+j, t]
    w_qkv = jnp.stack(
        [jnp.concatenate([lp['wq'].reshape(C, 27), lp['wh'].reshape(C, 27)], axis=1)
         for lp in params])                                           # (L, C, 54)
    wp_s = jnp.stack([lp['wp'] for lp in params])                     # (L, C, C)
    win_s = jnp.stack([lp['w_in'] for lp in params])                  # (L, 2h, C)
    wdw_s = jnp.stack([lp['w_dw'] for lp in params])                  # (L, 2h, 9)
    wout_s = jnp.stack([lp['w_out'] for lp in params])                # (L, C, h)

    a = fw.reshape(B, C, HW)
    b = h0.reshape(B, C, HW)

    kern = functools.partial(_se_block_kernel, num_res=L, C=C, hidden=hidden, H=H, W=W)
    act = lambda bb: (bb, 0, 0)    # per-batch activation block
    res2 = lambda bb: (0, 0)       # resident 2-D constants
    res3 = lambda bb: (0, 0, 0)    # resident stacked weights

    f_out, h_out = pl.pallas_call(
        kern,
        out_shape=(jax.ShapeDtypeStruct((B, C, HW), fw.dtype),
                   jax.ShapeDtypeStruct((B, C, HW), fw.dtype)),
        grid_spec=pltpu.PrefetchScalarGridSpec(
            num_scalar_prefetch=0,
            grid=(B,),
            in_specs=[
                pl.BlockSpec(memory_space=pltpu.MemorySpace.SMEM),   # temperatures (L,)
                pl.BlockSpec((1, C, HW), act),                       # Fw
                pl.BlockSpec((1, C, HW), act),                       # F_h0
                pl.BlockSpec((9, HW), res2),                         # conv boundary masks
                pl.BlockSpec((3 * C, 3 * C), res2),                  # qkv interleave perm
                pl.BlockSpec((L, C, 54), res3),                      # to_qkv / to_qkv_h
                pl.BlockSpec((L, C, C), res3),                       # attn project_out
                pl.BlockSpec((L, 2 * hidden, C), res3),              # ffn project_in
                pl.BlockSpec((L, 2 * hidden, 9), res3),              # ffn dwconv
                pl.BlockSpec((L, C, hidden), res3),                  # ffn project_out
            ],
            out_specs=[pl.BlockSpec((1, C, HW), act),
                       pl.BlockSpec((1, C, HW), act)],
        ),
        compiler_params=pltpu.CompilerParams(dimension_semantics=("parallel",)),
    )(temps, a, b, masks, perm, w_qkv, wp_s, win_s, wdw_s, wout_s)
    return f_out.reshape(B, C, H, W), h_out.reshape(B, C, H, W)


# ----------------------------- pure-JAX reference ------------------------------
_HI = jax.lax.Precision.HIGHEST


def _ref_grouped_conv3x3(x, w_flat, groups):
    cout = w_flat.shape[0]
    w4 = w_flat.reshape(cout, 1, 3, 3)
    return jax.lax.conv_general_dilated(
        x, w4, window_strides=(1, 1), padding=((1, 1), (1, 1)),
        dimension_numbers=('NCHW', 'OIHW', 'NCHW'),
        feature_group_count=groups, precision=_HI)


def _ref_block(fw, h0, lp):
    B, C, H, W = fw.shape
    qkv = (_ref_grouped_conv3x3(fw, lp['wq'], C) +
           _ref_grouped_conv3x3(h0, lp['wh'], C))
    q, k, v = jnp.split(qkv, 3, axis=1)
    q = q.reshape(B, 1, C, H * W)
    k = k.reshape(B, 1, C, H * W)
    v = v.reshape(B, 1, C, H * W)
    qn = q / jnp.maximum(jnp.sqrt(jnp.sum(q * q, -1, keepdims=True)), 1e-12)
    kn = k / jnp.maximum(jnp.sqrt(jnp.sum(k * k, -1, keepdims=True)), 1e-12)
    logits = jnp.einsum('bhcn,bhdn->bhcd', qn, kn, precision=_HI) * lp['temperature'][0]
    attn = jax.nn.softmax(logits, axis=-1)
    out = jnp.einsum('bhcd,bhdn->bhcn', attn, v, precision=_HI).reshape(B, C, H, W)
    f_h1 = jnp.einsum('oc,bchw->bohw', lp['wp'], out, precision=_HI)
    f_o1 = fw + f_h1
    hidden = lp['w_out'].shape[1]
    t = jnp.einsum('oc,bchw->bohw', lp['w_in'], f_o1, precision=_HI)
    t = _ref_grouped_conv3x3(t, lp['w_dw'], t.shape[1])
    g = _gelu_tanh(t[:, :hidden]) * t[:, hidden:]
    y = jnp.einsum('oc,bchw->bohw', lp['w_out'], g, precision=_HI)
    return f_o1 + y, f_h1 + h0


def _ref_se_block(fw, h0, params):
    for lp in params:
        fw, h0 = _ref_block(fw, h0, lp)
    return fw, h0


if __name__ == "__main__":
    key = jax.random.PRNGKey(0)
    B, C, H, W = 2, 16, 16, 16
    num_res = 8                     # SEBlock default
    hidden = int(C * 0.5)           # FeedForward(ffn_expansion_factor=0.5)

    keys = jax.random.split(key, 2 + num_res)
    fw = jax.random.normal(keys[0], (B, C, H, W), jnp.float32)
    h0 = jax.random.normal(keys[1], (B, C, H, W), jnp.float32)

    params = []
    for l in range(num_res):
        lk = jax.random.split(keys[2 + l], 6)
        params.append(dict(
            temperature=jnp.ones((1,), jnp.float32),   # nn.Parameter(torch.ones(1,1,1))
            wq=jax.random.normal(lk[0], (3 * C, 9), jnp.float32) * (0.5 / 3.0),
            wh=jax.random.normal(lk[1], (3 * C, 9), jnp.float32) * (0.5 / 3.0),
            wp=jax.random.normal(lk[2], (C, C), jnp.float32) * (0.5 / np.sqrt(C)),
            w_in=jax.random.normal(lk[3], (2 * hidden, C), jnp.float32) * (0.5 / np.sqrt(C)),
            w_dw=jax.random.normal(lk[4], (2 * hidden, 9), jnp.float32) * (0.5 / 3.0),
            w_out=jax.random.normal(lk[5], (C, hidden), jnp.float32) * (0.5 / np.sqrt(hidden)),
        ))

    out1, out2 = jax.jit(se_block_forward)(fw, h0, params)
    jax.block_until_ready((out1, out2))

    ref1, ref2 = _ref_se_block(fw, h0, params)
    assert out1.shape == (B, C, H, W) and out2.shape == (B, C, H, W)
    assert jnp.allclose(out1, ref1, atol=2e-3, rtol=2e-3), "out1 mismatch vs reference"
    assert jnp.allclose(out2, ref2, atol=2e-3, rtol=2e-3), "out2 mismatch vs reference"

    print("KERNEL_OK")
</pallas_src>

<mosaic_0001>
module attributes {stable_mosaic.version = 11 : i64} {
  func.func @_se_block_kernel(%arg0: i32, %arg1: memref<8xf32, #tpu.memory_space<smem>>, %arg2: memref<1x16x256xf32, #tpu.memory_space<vmem>>, %arg3: memref<1x16x256xf32, #tpu.memory_space<vmem>>, %arg4: memref<9x256xf32, #tpu.memory_space<vmem>>, %arg5: memref<48x48xf32, #tpu.memory_space<vmem>>, %arg6: memref<8x16x54xf32, #tpu.memory_space<vmem>>, %arg7: memref<8x16x16xf32, #tpu.memory_space<vmem>>, %arg8: memref<8x16x16xf32, #tpu.memory_space<vmem>>, %arg9: memref<8x16x9xf32, #tpu.memory_space<vmem>>, %arg10: memref<8x16x8xf32, #tpu.memory_space<vmem>>, %arg11: memref<1x16x256xf32, #tpu.memory_space<vmem>>, %arg12: memref<1x16x256xf32, #tpu.memory_space<vmem>>) attributes {dimension_semantics = [#tpu.dimension_semantics<parallel>], iteration_bounds = array<i64: 2>, scalar_prefetch = 0 : i64, scratch_operands = 0 : i64, tpu.core_type = #tpu.core_type<tc>, window_params = [{transform_indices = @transform_0, window_bounds = array<i64: 8>}, {transform_indices = @transform_1, window_bounds = array<i64: 1, 16, 256>}, {transform_indices = @transform_2, window_bounds = array<i64: 1, 16, 256>}, {pipeline_mode = #tpu.pipeline_mode<synchronous>, transform_indices = @transform_3, window_bounds = array<i64: 9, 256>}, {pipeline_mode = #tpu.pipeline_mode<synchronous>, transform_indices = @transform_4, window_bounds = array<i64: 48, 48>}, {pipeline_mode = #tpu.pipeline_mode<synchronous>, transform_indices = @transform_5, window_bounds = array<i64: 8, 16, 54>}, {pipeline_mode = #tpu.pipeline_mode<synchronous>, transform_indices = @transform_6, window_bounds = array<i64: 8, 16, 16>}, {pipeline_mode = #tpu.pipeline_mode<synchronous>, transform_indices = @transform_7, window_bounds = array<i64: 8, 16, 16>}, {pipeline_mode = #tpu.pipeline_mode<synchronous>, transform_indices = @transform_8, window_bounds = array<i64: 8, 16, 9>}, {pipeline_mode = #tpu.pipeline_mode<synchronous>, transform_indices = @transform_9, window_bounds = array<i64: 8, 16, 8>}, {transform_indices = @transform_10, window_bounds = array<i64: 1, 16, 256>}, {transform_indices = @transform_11, window_bounds = array<i64: 1, 16, 256>}]} {
    %c0 = arith.constant 0 : index
    %c0_0 = arith.constant 0 : index
    %0 = vector.load %arg4[%c0, %c0_0] : memref<9x256xf32, #tpu.memory_space<vmem>>, vector<9x256xf32>
    %c0_1 = arith.constant 0 : index
    %c0_2 = arith.constant 0 : index
    %1 = vector.load %arg5[%c0_1, %c0_2] : memref<48x48xf32, #tpu.memory_space<vmem>>, vector<48x48xf32>
    %c0_3 = arith.constant 0 : index
    %c0_4 = arith.constant 0 : index
    %c0_5 = arith.constant 0 : index
    %2 = vector.load %arg2[%c0_3, %c0_4, %c0_5] : memref<1x16x256xf32, #tpu.memory_space<vmem>>, vector<1x16x256xf32>
    %3 = vector.shape_cast %2 : vector<1x16x256xf32> to vector<16x256xf32>
    %c0_6 = arith.constant 0 : index
    %c0_7 = arith.constant 0 : index
    %c0_8 = arith.constant 0 : index
    %4 = vector.load %arg3[%c0_6, %c0_7, %c0_8] : memref<1x16x256xf32, #tpu.memory_space<vmem>>, vector<1x16x256xf32>
    %5 = vector.shape_cast %4 : vector<1x16x256xf32> to vector<16x256xf32>
    %c0_i32 = arith.constant 0 : i32
    %c8_i32 = arith.constant 8 : i32
    %6 = arith.addi %c0_i32, %c8_i32 : i32
    %c1_i32 = arith.constant 1 : i32
    %7:2 = scf.for %arg13 = %c0_i32 to %6 step %c1_i32 iter_args(%arg14 = %3, %arg15 = %5) -> (vector<16x256xf32>, vector<16x256xf32>)  : i32 {
      %14 = arith.index_cast %arg13 : i32 to index
      %c0_16 = arith.constant 0 : index
      %c0_17 = arith.constant 0 : index
      %15 = vector.load %arg6[%14, %c0_16, %c0_17] : memref<8x16x54xf32, #tpu.memory_space<vmem>>, vector<1x16x54xf32>
      %16 = vector.shape_cast %15 : vector<1x16x54xf32> to vector<16x54xf32>
      %c17_i32 = arith.constant 17 : i32
      %17 = tpu.dynamic_rotate %arg14 by %c17_i32 dim 1 : vector<16x256xf32>, i32 -> vector<16x256xf32>
      %c17_i32_18 = arith.constant 17 : i32
      %18 = tpu.dynamic_rotate %arg15 by %c17_i32_18 dim 1 : vector<16x256xf32>, i32 -> vector<16x256xf32>
      %19 = vector.extract_strided_slice %0 {offsets = [0, 0], sizes = [1, 256], strides = [1, 1]} : vector<9x256xf32> to vector<1x256xf32>
      %20 = vector.broadcast %19 : vector<1x256xf32> to vector<16x256xf32>
      %21 = arith.mulf %17, %20 : vector<16x256xf32>
      %22 = vector.broadcast %19 : vector<1x256xf32> to vector<16x256xf32>
      %23 = arith.mulf %18, %22 : vector<16x256xf32>
      %24 = vector.extract_strided_slice %16 {offsets = [0, 0], sizes = [16, 1], strides = [1, 1]} : vector<16x54xf32> to vector<16x1xf32>
      %25 = vector.extract_strided_slice %16 {offsets = [0, 27], sizes = [16, 1], strides = [1, 1]} : vector<16x54xf32> to vector<16x1xf32>
      %26 = vector.broadcast %24 : vector<16x1xf32> to vector<16x256xf32>
      %27 = arith.mulf %26, %21 : vector<16x256xf32>
      %28 = vector.broadcast %25 : vector<16x1xf32> to vector<16x256xf32>
      %29 = arith.mulf %28, %23 : vector<16x256xf32>
      %30 = arith.addf %27, %29 : vector<16x256xf32>
      %31 = vector.extract_strided_slice %16 {offsets = [0, 9], sizes = [16, 1], strides = [1, 1]} : vector<16x54xf32> to vector<16x1xf32>
      %32 = vector.extract_strided_slice %16 {offsets = [0, 36], sizes = [16, 1], strides = [1, 1]} : vector<16x54xf32> to vector<16x1xf32>
      %33 = vector.broadcast %31 : vector<16x1xf32> to vector<16x256xf32>
      %34 = arith.mulf %33, %21 : vector<16x256xf32>
      %35 = vector.broadcast %32 : vector<16x1xf32> to vector<16x256xf32>
      %36 = arith.mulf %35, %23 : vector<16x256xf32>
      %37 = arith.addf %34, %36 : vector<16x256xf32>
      %38 = vector.extract_strided_slice %16 {offsets = [0, 18], sizes = [16, 1], strides = [1, 1]} : vector<16x54xf32> to vector<16x1xf32>
      %39 = vector.extract_strided_slice %16 {offsets = [0, 45], sizes = [16, 1], strides = [1, 1]} : vector<16x54xf32> to vector<16x1xf32>
      %40 = vector.broadcast %38 : vector<16x1xf32> to vector<16x256xf32>
      %41 = arith.mulf %40, %21 : vector<16x256xf32>
      %42 = vector.broadcast %39 : vector<16x1xf32> to vector<16x256xf32>
      %43 = arith.mulf %42, %23 : vector<16x256xf32>
      %44 = arith.addf %41, %43 : vector<16x256xf32>
      %c16_i32 = arith.constant 16 : i32
      %45 = tpu.dynamic_rotate %arg14 by %c16_i32 dim 1 : vector<16x256xf32>, i32 -> vector<16x256xf32>
      %c16_i32_19 = arith.constant 16 : i32
      %46 = tpu.dynamic_rotate %arg15 by %c16_i32_19 dim 1 : vector<16x256xf32>, i32 -> vector<16x256xf32>
      %47 = vector.extract_strided_slice %0 {offsets = [1, 0], sizes = [1, 256], strides = [1, 1]} : vector<9x256xf32> to vector<1x256xf32>
      %48 = vector.broadcast %47 : vector<1x256xf32> to vector<16x256xf32>
      %49 = arith.mulf %45, %48 : vector<16x256xf32>
      %50 = vector.broadcast %47 : vector<1x256xf32> to vector<16x256xf32>
      %51 = arith.mulf %46, %50 : vector<16x256xf32>
      %52 = vector.extract_strided_slice %16 {offsets = [0, 1], sizes = [16, 1], strides = [1, 1]} : vector<16x54xf32> to vector<16x1xf32>
      %53 = vector.extract_strided_slice %16 {offsets = [0, 28], sizes = [16, 1], strides = [1, 1]} : vector<16x54xf32> to vector<16x1xf32>
      %54 = vector.broadcast %52 : vector<16x1xf32> to vector<16x256xf32>
      %55 = arith.mulf %54, %49 : vector<16x256xf32>
      %56 = vector.broadcast %53 : vector<16x1xf32> to vector<16x256xf32>
      %57 = arith.mulf %56, %51 : vector<16x256xf32>
      %58 = arith.addf %55, %57 : vector<16x256xf32>
      %59 = arith.addf %30, %58 : vector<16x256xf32>
      %60 = vector.extract_strided_slice %16 {offsets = [0, 10], sizes = [16, 1], strides = [1, 1]} : vector<16x54xf32> to vector<16x1xf32>
      %61 = vector.extract_strided_slice %16 {offsets = [0, 37], sizes = [16, 1], strides = [1, 1]} : vector<16x54xf32> to vector<16x1xf32>
      %62 = vector.broadcast %60 : vector<16x1xf32> to vector<16x256xf32>
      %63 = arith.mulf %62, %49 : vector<16x256xf32>
      %64 = vector.broadcast %61 : vector<16x1xf32> to vector<16x256xf32>
      %65 = arith.mulf %64, %51 : vector<16x256xf32>
      %66 = arith.addf %63, %65 : vector<16x256xf32>
      %67 = arith.addf %37, %66 : vector<16x256xf32>
      %68 = vector.extract_strided_slice %16 {offsets = [0, 19], sizes = [16, 1], strides = [1, 1]} : vector<16x54xf32> to vector<16x1xf32>
      %69 = vector.extract_strided_slice %16 {offsets = [0, 46], sizes = [16, 1], strides = [1, 1]} : vector<16x54xf32> to vector<16x1xf32>
      %70 = vector.broadcast %68 : vector<16x1xf32> to vector<16x256xf32>
      %71 = arith.mulf %70, %49 : vector<16x256xf32>
      %72 = vector.broadcast %69 : vector<16x1xf32> to vector<16x256xf32>
      %73 = arith.mulf %72, %51 : vector<16x256xf32>
      %74 = arith.addf %71, %73 : vector<16x256xf32>
      %75 = arith.addf %44, %74 : vector<16x256xf32>
      %c15_i32 = arith.constant 15 : i32
      %76 = tpu.dynamic_rotate %arg14 by %c15_i32 dim 1 : vector<16x256xf32>, i32 -> vector<16x256xf32>
      %c15_i32_20 = arith.constant 15 : i32
      %77 = tpu.dynamic_rotate %arg15 by %c15_i32_20 dim 1 : vector<16x256xf32>, i32 -> vector<16x256xf32>
      %78 = vector.extract_strided_slice %0 {offsets = [2, 0], sizes = [1, 256], strides = [1, 1]} : vector<9x256xf32> to vector<1x256xf32>
      %79 = vector.broadcast %78 : vector<1x256xf32> to vector<16x256xf32>
      %80 = arith.mulf %76, %79 : vector<16x256xf32>
      %81 = vector.broadcast %78 : vector<1x256xf32> to vector<16x256xf32>
      %82 = arith.mulf %77, %81 : vector<16x256xf32>
      %83 = vector.extract_strided_slice %16 {offsets = [0, 2], sizes = [16, 1], strides = [1, 1]} : vector<16x54xf32> to vector<16x1xf32>
      %84 = vector.extract_strided_slice %16 {offsets = [0, 29], sizes = [16, 1], strides = [1, 1]} : vector<16x54xf32> to vector<16x1xf32>
      %85 = vector.broadcast %83 : vector<16x1xf32> to vector<16x256xf32>
      %86 = arith.mulf %85, %80 : vector<16x256xf32>
      %87 = vector.broadcast %84 : vector<16x1xf32> to vector<16x256xf32>
      %88 = arith.mulf %87, %82 : vector<16x256xf32>
      %89 = arith.addf %86, %88 : vector<16x256xf32>
      %90 = arith.addf %59, %89 : vector<16x256xf32>
      %91 = vector.extract_strided_slice %16 {offsets = [0, 11], sizes = [16, 1], strides = [1, 1]} : vector<16x54xf32> to vector<16x1xf32>
      %92 = vector.extract_strided_slice %16 {offsets = [0, 38], sizes = [16, 1], strides = [1, 1]} : vector<16x54xf32> to vector<16x1xf32>
      %93 = vector.broadcast %91 : vector<16x1xf32> to vector<16x256xf32>
      %94 = arith.mulf %93, %80 : vector<16x256xf32>
      %95 = vector.broadcast %92 : vector<16x1xf32> to vector<16x256xf32>
      %96 = arith.mulf %95, %82 : vector<16x256xf32>
      %97 = arith.addf %94, %96 : vector<16x256xf32>
      %98 = arith.addf %67, %97 : vector<16x256xf32>
      %99 = vector.extract_strided_slice %16 {offsets = [0, 20], sizes = [16, 1], strides = [1, 1]} : vector<16x54xf32> to vector<16x1xf32>
      %100 = vector.extract_strided_slice %16 {offsets = [0, 47], sizes = [16, 1], strides = [1, 1]} : vector<16x54xf32> to vector<16x1xf32>
      %101 = vector.broadcast %99 : vector<16x1xf32> to vector<16x256xf32>
      %102 = arith.mulf %101, %80 : vector<16x256xf32>
      %103 = vector.broadcast %100 : vector<16x1xf32> to vector<16x256xf32>
      %104 = arith.mulf %103, %82 : vector<16x256xf32>
      %105 = arith.addf %102, %104 : vector<16x256xf32>
      %106 = arith.addf %75, %105 : vector<16x256xf32>
      %c1_i32_21 = arith.constant 1 : i32
      %107 = tpu.dynamic_rotate %arg14 by %c1_i32_21 dim 1 : vector<16x256xf32>, i32 -> vector<16x256xf32>
      %c1_i32_22 = arith.constant 1 : i32
      %108 = tpu.dynamic_rotate %arg15 by %c1_i32_22 dim 1 : vector<16x256xf32>, i32 -> vector<16x256xf32>
      %109 = vector.extract_strided_slice %0 {offsets = [3, 0], sizes = [1, 256], strides = [1, 1]} : vector<9x256xf32> to vector<1x256xf32>
      %110 = vector.broadcast %109 : vector<1x256xf32> to vector<16x256xf32>
      %111 = arith.mulf %107, %110 : vector<16x256xf32>
      %112 = vector.broadcast %109 : vector<1x256xf32> to vector<16x256xf32>
      %113 = arith.mulf %108, %112 : vector<16x256xf32>
      %114 = vector.extract_strided_slice %16 {offsets = [0, 3], sizes = [16, 1], strides = [1, 1]} : vector<16x54xf32> to vector<16x1xf32>
      %115 = vector.extract_strided_slice %16 {offsets = [0, 30], sizes = [16, 1], strides = [1, 1]} : vector<16x54xf32> to vector<16x1xf32>
      %116 = vector.broadcast %114 : vector<16x1xf32> to vector<16x256xf32>
      %117 = arith.mulf %116, %111 : vector<16x256xf32>
      %118 = vector.broadcast %115 : vector<16x1xf32> to vector<16x256xf32>
      %119 = arith.mulf %118, %113 : vector<16x256xf32>
      %120 = arith.addf %117, %119 : vector<16x256xf32>
      %121 = arith.addf %90, %120 : vector<16x256xf32>
      %122 = vector.extract_strided_slice %16 {offsets = [0, 12], sizes = [16, 1], strides = [1, 1]} : vector<16x54xf32> to vector<16x1xf32>
      %123 = vector.extract_strided_slice %16 {offsets = [0, 39], sizes = [16, 1], strides = [1, 1]} : vector<16x54xf32> to vector<16x1xf32>
      %124 = vector.broadcast %122 : vector<16x1xf32> to vector<16x256xf32>
      %125 = arith.mulf %124, %111 : vector<16x256xf32>
      %126 = vector.broadcast %123 : vector<16x1xf32> to vector<16x256xf32>
      %127 = arith.mulf %126, %113 : vector<16x256xf32>
      %128 = arith.addf %125, %127 : vector<16x256xf32>
      %129 = arith.addf %98, %128 : vector<16x256xf32>
      %130 = vector.extract_strided_slice %16 {offsets = [0, 21], sizes = [16, 1], strides = [1, 1]} : vector<16x54xf32> to vector<16x1xf32>
      %131 = vector.extract_strided_slice %16 {offsets = [0, 48], sizes = [16, 1], strides = [1, 1]} : vector<16x54xf32> to vector<16x1xf32>
      %132 = vector.broadcast %130 : vector<16x1xf32> to vector<16x256xf32>
      %133 = arith.mulf %132, %111 : vector<16x256xf32>
      %134 = vector.broadcast %131 : vector<16x1xf32> to vector<16x256xf32>
      %135 = arith.mulf %134, %113 : vector<16x256xf32>
      %136 = arith.addf %133, %135 : vector<16x256xf32>
      %137 = arith.addf %106, %136 : vector<16x256xf32>
      %138 = vector.extract_strided_slice %16 {offsets = [0, 4], sizes = [16, 1], strides = [1, 1]} : vector<16x54xf32> to vector<16x1xf32>
      %139 = vector.extract_strided_slice %16 {offsets = [0, 31], sizes = [16, 1], strides = [1, 1]} : vector<16x54xf32> to vector<16x1xf32>
      %140 = vector.broadcast %138 : vector<16x1xf32> to vector<16x256xf32>
      %141 = arith.mulf %140, %arg14 : vector<16x256xf32>
      %142 = vector.broadcast %139 : vector<16x1xf32> to vector<16x256xf32>
      %143 = arith.mulf %142, %arg15 : vector<16x256xf32>
      %144 = arith.addf %141, %143 : vector<16x256xf32>
      %145 = arith.addf %121, %144 : vector<16x256xf32>
      %146 = vector.extract_strided_slice %16 {offsets = [0, 13], sizes = [16, 1], strides = [1, 1]} : vector<16x54xf32> to vector<16x1xf32>
      %147 = vector.extract_strided_slice %16 {offsets = [0, 40], sizes = [16, 1], strides = [1, 1]} : vector<16x54xf32> to vector<16x1xf32>
      %148 = vector.broadcast %146 : vector<16x1xf32> to vector<16x256xf32>
      %149 = arith.mulf %148, %arg14 : vector<16x256xf32>
      %150 = vector.broadcast %147 : vector<16x1xf32> to vector<16x256xf32>
      %151 = arith.mulf %150, %arg15 : vector<16x256xf32>
      %152 = arith.addf %149, %151 : vector<16x256xf32>
      %153 = arith.addf %129, %152 : vector<16x256xf32>
      %154 = vector.extract_strided_slice %16 {offsets = [0, 22], sizes = [16, 1], strides = [1, 1]} : vector<16x54xf32> to vector<16x1xf32>
      %155 = vector.extract_strided_slice %16 {offsets = [0, 49], sizes = [16, 1], strides = [1, 1]} : vector<16x54xf32> to vector<16x1xf32>
      %156 = vector.broadcast %154 : vector<16x1xf32> to vector<16x256xf32>
      %157 = arith.mulf %156, %arg14 : vector<16x256xf32>
      %158 = vector.broadcast %155 : vector<16x1xf32> to vector<16x256xf32>
      %159 = arith.mulf %158, %arg15 : vector<16x256xf32>
      %160 = arith.addf %157, %159 : vector<16x256xf32>
      %161 = arith.addf %137, %160 : vector<16x256xf32>
      %c255_i32 = arith.constant 255 : i32
      %162 = tpu.dynamic_rotate %arg14 by %c255_i32 dim 1 : vector<16x256xf32>, i32 -> vector<16x256xf32>
      %c255_i32_23 = arith.constant 255 : i32
      %163 = tpu.dynamic_rotate %arg15 by %c255_i32_23 dim 1 : vector<16x256xf32>, i32 -> vector<16x256xf32>
      %164 = vector.extract_strided_slice %0 {offsets = [5, 0], sizes = [1, 256], strides = [1, 1]} : vector<9x256xf32> to vector<1x256xf32>
      %165 = vector.broadcast %164 : vector<1x256xf32> to vector<16x256xf32>
      %166 = arith.mulf %162, %165 : vector<16x256xf32>
      %167 = vector.broadcast %164 : vector<1x256xf32> to vector<16x256xf32>
      %168 = arith.mulf %163, %167 : vector<16x256xf32>
      %169 = vector.extract_strided_slice %16 {offsets = [0, 5], sizes = [16, 1], strides = [1, 1]} : vector<16x54xf32> to vector<16x1xf32>
      %170 = vector.extract_strided_slice %16 {offsets = [0, 32], sizes = [16, 1], strides = [1, 1]} : vector<16x54xf32> to vector<16x1xf32>
      %171 = vector.broadcast %169 : vector<16x1xf32> to vector<16x256xf32>
      %172 = arith.mulf %171, %166 : vector<16x256xf32>
      %173 = vector.broadcast %170 : vector<16x1xf32> to vector<16x256xf32>
      %174 = arith.mulf %173, %168 : vector<16x256xf32>
      %175 = arith.addf %172, %174 : vector<16x256xf32>
      %176 = arith.addf %145, %175 : vector<16x256xf32>
      %177 = vector.extract_strided_slice %16 {offsets = [0, 14], sizes = [16, 1], strides = [1, 1]} : vector<16x54xf32> to vector<16x1xf32>
      %178 = vector.extract_strided_slice %16 {offsets = [0, 41], sizes = [16, 1], strides = [1, 1]} : vector<16x54xf32> to vector<16x1xf32>
      %179 = vector.broadcast %177 : vector<16x1xf32> to vector<16x256xf32>
      %180 = arith.mulf %179, %166 : vector<16x256xf32>
      %181 = vector.broadcast %178 : vector<16x1xf32> to vector<16x256xf32>
      %182 = arith.mulf %181, %168 : vector<16x256xf32>
      %183 = arith.addf %180, %182 : vector<16x256xf32>
      %184 = arith.addf %153, %183 : vector<16x256xf32>
      %185 = vector.extract_strided_slice %16 {offsets = [0, 23], sizes = [16, 1], strides = [1, 1]} : vector<16x54xf32> to vector<16x1xf32>
      %186 = vector.extract_strided_slice %16 {offsets = [0, 50], sizes = [16, 1], strides = [1, 1]} : vector<16x54xf32> to vector<16x1xf32>
      %187 = vector.broadcast %185 : vector<16x1xf32> to vector<16x256xf32>
      %188 = arith.mulf %187, %166 : vector<16x256xf32>
      %189 = vector.broadcast %186 : vector<16x1xf32> to vector<16x256xf32>
      %190 = arith.mulf %189, %168 : vector<16x256xf32>
      %191 = arith.addf %188, %190 : vector<16x256xf32>
      %192 = arith.addf %161, %191 : vector<16x256xf32>
      %c241_i32 = arith.constant 241 : i32
      %193 = tpu.dynamic_rotate %arg14 by %c241_i32 dim 1 : vector<16x256xf32>, i32 -> vector<16x256xf32>
      %c241_i32_24 = arith.constant 241 : i32
      %194 = tpu.dynamic_rotate %arg15 by %c241_i32_24 dim 1 : vector<16x256xf32>, i32 -> vector<16x256xf32>
      %195 = vector.extract_strided_slice %0 {offsets = [6, 0], sizes = [1, 256], strides = [1, 1]} : vector<9x256xf32> to vector<1x256xf32>
      %196 = vector.broadcast %195 : vector<1x256xf32> to vector<16x256xf32>
      %197 = arith.mulf %193, %196 : vector<16x256xf32>
      %198 = vector.broadcast %195 : vector<1x256xf32> to vector<16x256xf32>
      %199 = arith.mulf %194, %198 : vector<16x256xf32>
      %200 = vector.extract_strided_slice %16 {offsets = [0, 6], sizes = [16, 1], strides = [1, 1]} : vector<16x54xf32> to vector<16x1xf32>
      %201 = vector.extract_strided_slice %16 {offsets = [0, 33], sizes = [16, 1], strides = [1, 1]} : vector<16x54xf32> to vector<16x1xf32>
      %202 = vector.broadcast %200 : vector<16x1xf32> to vector<16x256xf32>
      %203 = arith.mulf %202, %197 : vector<16x256xf32>
      %204 = vector.broadcast %201 : vector<16x1xf32> to vector<16x256xf32>
      %205 = arith.mulf %204, %199 : vector<16x256xf32>
      %206 = arith.addf %203, %205 : vector<16x256xf32>
      %207 = arith.addf %176, %206 : vector<16x256xf32>
      %208 = vector.extract_strided_slice %16 {offsets = [0, 15], sizes = [16, 1], strides = [1, 1]} : vector<16x54xf32> to vector<16x1xf32>
      %209 = vector.extract_strided_slice %16 {offsets = [0, 42], sizes = [16, 1], strides = [1, 1]} : vector<16x54xf32> to vector<16x1xf32>
      %210 = vector.broadcast %208 : vector<16x1xf32> to vector<16x256xf32>
      %211 = arith.mulf %210, %197 : vector<16x256xf32>
      %212 = vector.broadcast %209 : vector<16x1xf32> to vector<16x256xf32>
      %213 = arith.mulf %212, %199 : vector<16x256xf32>
      %214 = arith.addf %211, %213 : vector<16x256xf32>
      %215 = arith.addf %184, %214 : vector<16x256xf32>
      %216 = vector.extract_strided_slice %16 {offsets = [0, 24], sizes = [16, 1], strides = [1, 1]} : vector<16x54xf32> to vector<16x1xf32>
      %217 = vector.extract_strided_slice %16 {offsets = [0, 51], sizes = [16, 1], strides = [1, 1]} : vector<16x54xf32> to vector<16x1xf32>
      %218 = vector.broadcast %216 : vector<16x1xf32> to vector<16x256xf32>
      %219 = arith.mulf %218, %197 : vector<16x256xf32>
      %220 = vector.broadcast %217 : vector<16x1xf32> to vector<16x256xf32>
      %221 = arith.mulf %220, %199 : vector<16x256xf32>
      %222 = arith.addf %219, %221 : vector<16x256xf32>
      %223 = arith.addf %192, %222 : vector<16x256xf32>
      %c240_i32 = arith.constant 240 : i32
      %224 = tpu.dynamic_rotate %arg14 by %c240_i32 dim 1 : vector<16x256xf32>, i32 -> vector<16x256xf32>
      %c240_i32_25 = arith.constant 240 : i32
      %225 = tpu.dynamic_rotate %arg15 by %c240_i32_25 dim 1 : vector<16x256xf32>, i32 -> vector<16x256xf32>
      %226 = vector.extract_strided_slice %0 {offsets = [7, 0], sizes = [1, 256], strides = [1, 1]} : vector<9x256xf32> to vector<1x256xf32>
      %227 = vector.broadcast %226 : vector<1x256xf32> to vector<16x256xf32>
      %228 = arith.mulf %224, %227 : vector<16x256xf32>
      %229 = vector.broadcast %226 : vector<1x256xf32> to vector<16x256xf32>
      %230 = arith.mulf %225, %229 : vector<16x256xf32>
      %231 = vector.extract_strided_slice %16 {offsets = [0, 7], sizes = [16, 1], strides = [1, 1]} : vector<16x54xf32> to vector<16x1xf32>
      %232 = vector.extract_strided_slice %16 {offsets = [0, 34], sizes = [16, 1], strides = [1, 1]} : vector<16x54xf32> to vector<16x1xf32>
      %233 = vector.broadcast %231 : vector<16x1xf32> to vector<16x256xf32>
      %234 = arith.mulf %233, %228 : vector<16x256xf32>
      %235 = vector.broadcast %232 : vector<16x1xf32> to vector<16x256xf32>
      %236 = arith.mulf %235, %230 : vector<16x256xf32>
      %237 = arith.addf %234, %236 : vector<16x256xf32>
      %238 = arith.addf %207, %237 : vector<16x256xf32>
      %239 = vector.extract_strided_slice %16 {offsets = [0, 16], sizes = [16, 1], strides = [1, 1]} : vector<16x54xf32> to vector<16x1xf32>
      %240 = vector.extract_strided_slice %16 {offsets = [0, 43], sizes = [16, 1], strides = [1, 1]} : vector<16x54xf32> to vector<16x1xf32>
      %241 = vector.broadcast %239 : vector<16x1xf32> to vector<16x256xf32>
      %242 = arith.mulf %241, %228 : vector<16x256xf32>
      %243 = vector.broadcast %240 : vector<16x1xf32> to vector<16x256xf32>
      %244 = arith.mulf %243, %230 : vector<16x256xf32>
      %245 = arith.addf %242, %244 : vector<16x256xf32>
      %246 = arith.addf %215, %245 : vector<16x256xf32>
      %247 = vector.extract_strided_slice %16 {offsets = [0, 25], sizes = [16, 1], strides = [1, 1]} : vector<16x54xf32> to vector<16x1xf32>
      %248 = vector.extract_strided_slice %16 {offsets = [0, 52], sizes = [16, 1], strides = [1, 1]} : vector<16x54xf32> to vector<16x1xf32>
      %249 = vector.broadcast %247 : vector<16x1xf32> to vector<16x256xf32>
      %250 = arith.mulf %249, %228 : vector<16x256xf32>
      %251 = vector.broadcast %248 : vector<16x1xf32> to vector<16x256xf32>
      %252 = arith.mulf %251, %230 : vector<16x256xf32>
      %253 = arith.addf %250, %252 : vector<16x256xf32>
      %254 = arith.addf %223, %253 : vector<16x256xf32>
      %c239_i32 = arith.constant 239 : i32
      %255 = tpu.dynamic_rotate %arg14 by %c239_i32 dim 1 : vector<16x256xf32>, i32 -> vector<16x256xf32>
      %c239_i32_26 = arith.constant 239 : i32
      %256 = tpu.dynamic_rotate %arg15 by %c239_i32_26 dim 1 : vector<16x256xf32>, i32 -> vector<16x256xf32>
      %257 = vector.extract_strided_slice %0 {offsets = [8, 0], sizes = [1, 256], strides = [1, 1]} : vector<9x256xf32> to vector<1x256xf32>
      %258 = vector.broadcast %257 : vector<1x256xf32> to vector<16x256xf32>
      %259 = arith.mulf %255, %258 : vector<16x256xf32>
      %260 = vector.broadcast %257 : vector<1x256xf32> to vector<16x256xf32>
      %261 = arith.mulf %256, %260 : vector<16x256xf32>
      %262 = vector.extract_strided_slice %16 {offsets = [0, 8], sizes = [16, 1], strides = [1, 1]} : vector<16x54xf32> to vector<16x1xf32>
      %263 = vector.extract_strided_slice %16 {offsets = [0, 35], sizes = [16, 1], strides = [1, 1]} : vector<16x54xf32> to vector<16x1xf32>
      %264 = vector.broadcast %262 : vector<16x1xf32> to vector<16x256xf32>
      %265 = arith.mulf %264, %259 : vector<16x256xf32>
      %266 = vector.broadcast %263 : vector<16x1xf32> to vector<16x256xf32>
      %267 = arith.mulf %266, %261 : vector<16x256xf32>
      %268 = arith.addf %265, %267 : vector<16x256xf32>
      %269 = arith.addf %238, %268 : vector<16x256xf32>
      %270 = vector.extract_strided_slice %16 {offsets = [0, 17], sizes = [16, 1], strides = [1, 1]} : vector<16x54xf32> to vector<16x1xf32>
      %271 = vector.extract_strided_slice %16 {offsets = [0, 44], sizes = [16, 1], strides = [1, 1]} : vector<16x54xf32> to vector<16x1xf32>
      %272 = vector.broadcast %270 : vector<16x1xf32> to vector<16x256xf32>
      %273 = arith.mulf %272, %259 : vector<16x256xf32>
      %274 = vector.broadcast %271 : vector<16x1xf32> to vector<16x256xf32>
      %275 = arith.mulf %274, %261 : vector<16x256xf32>
      %276 = arith.addf %273, %275 : vector<16x256xf32>
      %277 = arith.addf %246, %276 : vector<16x256xf32>
      %278 = vector.extract_strided_slice %16 {offsets = [0, 26], sizes = [16, 1], strides = [1, 1]} : vector<16x54xf32> to vector<16x1xf32>
      %279 = vector.extract_strided_slice %16 {offsets = [0, 53], sizes = [16, 1], strides = [1, 1]} : vector<16x54xf32> to vector<16x1xf32>
      %280 = vector.broadcast %278 : vector<16x1xf32> to vector<16x256xf32>
      %281 = arith.mulf %280, %259 : vector<16x256xf32>
      %282 = vector.broadcast %279 : vector<16x1xf32> to vector<16x256xf32>
      %283 = arith.mulf %282, %261 : vector<16x256xf32>
      %284 = arith.addf %281, %283 : vector<16x256xf32>
      %285 = arith.addf %254, %284 : vector<16x256xf32>
      %286 = tpu.concatenate %269, %277, %285 in 0 : vector<16x256xf32>, vector<16x256xf32>, vector<16x256xf32> -> vector<48x256xf32>
      %cst = arith.constant dense<0.000000e+00> : vector<48x256xf32>
      %287 = tpu.matmul %1, %286, %cst {dimension_numbers = #tpu.dot_dimension_numbers<[1], [0], [0], [1], [0, 0, 1, 1], [], []>} : vector<48x48xf32>, vector<48x256xf32>, vector<48x256xf32> -> vector<48x256xf32>
      %288 = vector.extract_strided_slice %287 {offsets = [0, 0], sizes = [16, 256], strides = [1, 1]} : vector<48x256xf32> to vector<16x256xf32>
      %289 = vector.extract_strided_slice %287 {offsets = [16, 0], sizes = [16, 256], strides = [1, 1]} : vector<48x256xf32> to vector<16x256xf32>
      %290 = vector.extract_strided_slice %287 {offsets = [32, 0], sizes = [16, 256], strides = [1, 1]} : vector<48x256xf32> to vector<16x256xf32>
      %291 = arith.mulf %288, %288 : vector<16x256xf32>
      %cst_27 = arith.constant dense<0.000000e+00> : vector<16xf32>
      %292 = vector.multi_reduction <add>, %291, %cst_27 [1] : vector<16x256xf32> to vector<16xf32>
      %293 = vector.shape_cast %292 : vector<16xf32> to vector<16x1xf32>
      %cst_28 = arith.constant 1.000000e-24 : f32
      %294 = vector.broadcast %cst_28 : f32 to vector<16x1xf32>
      %295 = arith.maximumf %293, %294 : vector<16x1xf32>
      %296 = math.rsqrt %295 : vector<16x1xf32>
      %297 = vector.broadcast %296 : vector<16x1xf32> to vector<16x256xf32>
      %298 = arith.mulf %288, %297 : vector<16x256xf32>
      %299 = arith.mulf %289, %289 : vector<16x256xf32>
      %cst_29 = arith.constant dense<0.000000e+00> : vector<16xf32>
      %300 = vector.multi_reduction <add>, %299, %cst_29 [1] : vector<16x256xf32> to vector<16xf32>
      %301 = vector.shape_cast %300 : vector<16xf32> to vector<16x1xf32>
      %cst_30 = arith.constant 1.000000e-24 : f32
      %302 = vector.broadcast %cst_30 : f32 to vector<16x1xf32>
      %303 = arith.maximumf %301, %302 : vector<16x1xf32>
      %304 = math.rsqrt %303 : vector<16x1xf32>
      %305 = vector.broadcast %304 : vector<16x1xf32> to vector<16x256xf32>
      %306 = arith.mulf %289, %305 : vector<16x256xf32>
      %cst_31 = arith.constant dense<0.000000e+00> : vector<16x16xf32>
      %307 = tpu.matmul %298, %306, %cst_31 {dimension_numbers = #tpu.dot_dimension_numbers<[1], [1], [0], [0], [0, 0, 1, 0], [], []>} : vector<16x256xf32>, vector<16x256xf32>, vector<16x16xf32> -> vector<16x16xf32>
      %308 = arith.index_cast %arg13 : i32 to index
      %309 = memref.load %arg1[%308] : memref<8xf32, #tpu.memory_space<smem>>
      %310 = vector.broadcast %309 : f32 to vector<16x16xf32>
      %311 = arith.mulf %307, %310 : vector<16x16xf32>
      %cst_32 = arith.constant dense<0xFF800000> : vector<16xf32>
      %312 = vector.multi_reduction <maximumf>, %311, %cst_32 [1] : vector<16x16xf32> to vector<16xf32>
      %313 = vector.shape_cast %312 : vector<16xf32> to vector<16x1xf32>
      %314 = vector.broadcast %313 : vector<16x1xf32> to vector<16x16xf32>
      %315 = arith.subf %311, %314 : vector<16x16xf32>
      %316 = math.exp %315 : vector<16x16xf32>
      %cst_33 = arith.constant dense<0.000000e+00> : vector<16xf32>
      %317 = vector.multi_reduction <add>, %316, %cst_33 [1] : vector<16x16xf32> to vector<16xf32>
      %318 = vector.shape_cast %317 : vector<16xf32> to vector<16x1xf32>
      %cst_34 = arith.constant 1.000000e+00 : f32
      %319 = vector.broadcast %cst_34 : f32 to vector<16x1xf32>
      %320 = arith.divf %319, %318 : vector<16x1xf32>
      %321 = vector.broadcast %320 : vector<16x1xf32> to vector<16x16xf32>
      %322 = arith.mulf %316, %321 : vector<16x16xf32>
      %cst_35 = arith.constant dense<0.000000e+00> : vector<16x256xf32>
      %323 = tpu.matmul %322, %290, %cst_35 {dimension_numbers = #tpu.dot_dimension_numbers<[1], [0], [0], [1], [0, 0, 1, 1], [], []>} : vector<16x16xf32>, vector<16x256xf32>, vector<16x256xf32> -> vector<16x256xf32>
      %324 = arith.index_cast %arg13 : i32 to index
      %c0_36 = arith.constant 0 : index
      %c0_37 = arith.constant 0 : index
      %325 = vector.load %arg7[%324, %c0_36, %c0_37] : memref<8x16x16xf32, #tpu.memory_space<vmem>>, vector<1x16x16xf32>
      %326 = vector.shape_cast %325 : vector<1x16x16xf32> to vector<16x16xf32>
      %cst_38 = arith.constant dense<0.000000e+00> : vector<16x256xf32>
      %327 = tpu.matmul %326, %323, %cst_38 {dimension_numbers = #tpu.dot_dimension_numbers<[1], [0], [0], [1], [0, 0, 1, 1], [], []>} : vector<16x16xf32>, vector<16x256xf32>, vector<16x256xf32> -> vector<16x256xf32>
      %328 = arith.addf %arg14, %327 : vector<16x256xf32>
      %329 = arith.addf %327, %arg15 : vector<16x256xf32>
      %330 = arith.index_cast %arg13 : i32 to index
      %c0_39 = arith.constant 0 : index
      %c0_40 = arith.constant 0 : index
      %331 = vector.load %arg8[%330, %c0_39, %c0_40] : memref<8x16x16xf32, #tpu.memory_space<vmem>>, vector<1x16x16xf32>
      %332 = vector.shape_cast %331 : vector<1x16x16xf32> to vector<16x16xf32>
      %cst_41 = arith.constant dense<0.000000e+00> : vector<16x256xf32>
      %333 = tpu.matmul %332, %328, %cst_41 {dimension_numbers = #tpu.dot_dimension_numbers<[1], [0], [0], [1], [0, 0, 1, 1], [], []>} : vector<16x16xf32>, vector<16x256xf32>, vector<16x256xf32> -> vector<16x256xf32>
      %334 = arith.index_cast %arg13 : i32 to index
      %c0_42 = arith.constant 0 : index
      %c0_43 = arith.constant 0 : index
      %335 = vector.load %arg9[%334, %c0_42, %c0_43] : memref<8x16x9xf32, #tpu.memory_space<vmem>>, vector<1x16x9xf32>
      %336 = vector.shape_cast %335 : vector<1x16x9xf32> to vector<16x9xf32>
      %c17_i32_44 = arith.constant 17 : i32
      %337 = tpu.dynamic_rotate %333 by %c17_i32_44 dim 1 : vector<16x256xf32>, i32 -> vector<16x256xf32>
      %338 = vector.extract_strided_slice %0 {offsets = [0, 0], sizes = [1, 256], strides = [1, 1]} : vector<9x256xf32> to vector<1x256xf32>
      %339 = vector.broadcast %338 : vector<1x256xf32> to vector<16x256xf32>
      %340 = arith.mulf %337, %339 : vector<16x256xf32>
      %341 = vector.extract_strided_slice %336 {offsets = [0, 0], sizes = [16, 1], strides = [1, 1]} : vector<16x9xf32> to vector<16x1xf32>
      %342 = vector.broadcast %341 : vector<16x1xf32> to vector<16x256xf32>
      %343 = arith.mulf %342, %340 : vector<16x256xf32>
      %c16_i32_45 = arith.constant 16 : i32
      %344 = tpu.dynamic_rotate %333 by %c16_i32_45 dim 1 : vector<16x256xf32>, i32 -> vector<16x256xf32>
      %345 = vector.extract_strided_slice %0 {offsets = [1, 0], sizes = [1, 256], strides = [1, 1]} : vector<9x256xf32> to vector<1x256xf32>
      %346 = vector.broadcast %345 : vector<1x256xf32> to vector<16x256xf32>
      %347 = arith.mulf %344, %346 : vector<16x256xf32>
      %348 = vector.extract_strided_slice %336 {offsets = [0, 1], sizes = [16, 1], strides = [1, 1]} : vector<16x9xf32> to vector<16x1xf32>
      %349 = vector.broadcast %348 : vector<16x1xf32> to vector<16x256xf32>
      %350 = arith.mulf %349, %347 : vector<16x256xf32>
      %351 = arith.addf %343, %350 : vector<16x256xf32>
      %c15_i32_46 = arith.constant 15 : i32
      %352 = tpu.dynamic_rotate %333 by %c15_i32_46 dim 1 : vector<16x256xf32>, i32 -> vector<16x256xf32>
      %353 = vector.extract_strided_slice %0 {offsets = [2, 0], sizes = [1, 256], strides = [1, 1]} : vector<9x256xf32> to vector<1x256xf32>
      %354 = vector.broadcast %353 : vector<1x256xf32> to vector<16x256xf32>
      %355 = arith.mulf %352, %354 : vector<16x256xf32>
      %356 = vector.extract_strided_slice %336 {offsets = [0, 2], sizes = [16, 1], strides = [1, 1]} : vector<16x9xf32> to vector<16x1xf32>
      %357 = vector.broadcast %356 : vector<16x1xf32> to vector<16x256xf32>
      %358 = arith.mulf %357, %355 : vector<16x256xf32>
      %359 = arith.addf %351, %358 : vector<16x256xf32>
      %c1_i32_47 = arith.constant 1 : i32
      %360 = tpu.dynamic_rotate %333 by %c1_i32_47 dim 1 : vector<16x256xf32>, i32 -> vector<16x256xf32>
      %361 = vector.extract_strided_slice %0 {offsets = [3, 0], sizes = [1, 256], strides = [1, 1]} : vector<9x256xf32> to vector<1x256xf32>
      %362 = vector.broadcast %361 : vector<1x256xf32> to vector<16x256xf32>
      %363 = arith.mulf %360, %362 : vector<16x256xf32>
      %364 = vector.extract_strided_slice %336 {offsets = [0, 3], sizes = [16, 1], strides = [1, 1]} : vector<16x9xf32> to vector<16x1xf32>
      %365 = vector.broadcast %364 : vector<16x1xf32> to vector<16x256xf32>
      %366 = arith.mulf %365, %363 : vector<16x256xf32>
      %367 = arith.addf %359, %366 : vector<16x256xf32>
      %368 = vector.extract_strided_slice %336 {offsets = [0, 4], sizes = [16, 1], strides = [1, 1]} : vector<16x9xf32> to vector<16x1xf32>
      %369 = vector.broadcast %368 : vector<16x1xf32> to vector<16x256xf32>
      %370 = arith.mulf %369, %333 : vector<16x256xf32>
      %371 = arith.addf %367, %370 : vector<16x256xf32>
      %c255_i32_48 = arith.constant 255 : i32
      %372 = tpu.dynamic_rotate %333 by %c255_i32_48 dim 1 : vector<16x256xf32>, i32 -> vector<16x256xf32>
      %373 = vector.extract_strided_slice %0 {offsets = [5, 0], sizes = [1, 256], strides = [1, 1]} : vector<9x256xf32> to vector<1x256xf32>
      %374 = vector.broadcast %373 : vector<1x256xf32> to vector<16x256xf32>
      %375 = arith.mulf %372, %374 : vector<16x256xf32>
      %376 = vector.extract_strided_slice %336 {offsets = [0, 5], sizes = [16, 1], strides = [1, 1]} : vector<16x9xf32> to vector<16x1xf32>
      %377 = vector.broadcast %376 : vector<16x1xf32> to vector<16x256xf32>
      %378 = arith.mulf %377, %375 : vector<16x256xf32>
      %379 = arith.addf %371, %378 : vector<16x256xf32>
      %c241_i32_49 = arith.constant 241 : i32
      %380 = tpu.dynamic_rotate %333 by %c241_i32_49 dim 1 : vector<16x256xf32>, i32 -> vector<16x256xf32>
      %381 = vector.extract_strided_slice %0 {offsets = [6, 0], sizes = [1, 256], strides = [1, 1]} : vector<9x256xf32> to vector<1x256xf32>
      %382 = vector.broadcast %381 : vector<1x256xf32> to vector<16x256xf32>
      %383 = arith.mulf %380, %382 : vector<16x256xf32>
      %384 = vector.extract_strided_slice %336 {offsets = [0, 6], sizes = [16, 1], strides = [1, 1]} : vector<16x9xf32> to vector<16x1xf32>
      %385 = vector.broadcast %384 : vector<16x1xf32> to vector<16x256xf32>
      %386 = arith.mulf %385, %383 : vector<16x256xf32>
      %387 = arith.addf %379, %386 : vector<16x256xf32>
      %c240_i32_50 = arith.constant 240 : i32
      %388 = tpu.dynamic_rotate %333 by %c240_i32_50 dim 1 : vector<16x256xf32>, i32 -> vector<16x256xf32>
      %389 = vector.extract_strided_slice %0 {offsets = [7, 0], sizes = [1, 256], strides = [1, 1]} : vector<9x256xf32> to vector<1x256xf32>
      %390 = vector.broadcast %389 : vector<1x256xf32> to vector<16x256xf32>
      %391 = arith.mulf %388, %390 : vector<16x256xf32>
      %392 = vector.extract_strided_slice %336 {offsets = [0, 7], sizes = [16, 1], strides = [1, 1]} : vector<16x9xf32> to vector<16x1xf32>
      %393 = vector.broadcast %392 : vector<16x1xf32> to vector<16x256xf32>
      %394 = arith.mulf %393, %391 : vector<16x256xf32>
      %395 = arith.addf %387, %394 : vector<16x256xf32>
      %c239_i32_51 = arith.constant 239 : i32
      %396 = tpu.dynamic_rotate %333 by %c239_i32_51 dim 1 : vector<16x256xf32>, i32 -> vector<16x256xf32>
      %397 = vector.extract_strided_slice %0 {offsets = [8, 0], sizes = [1, 256], strides = [1, 1]} : vector<9x256xf32> to vector<1x256xf32>
      %398 = vector.broadcast %397 : vector<1x256xf32> to vector<16x256xf32>
      %399 = arith.mulf %396, %398 : vector<16x256xf32>
      %400 = vector.extract_strided_slice %336 {offsets = [0, 8], sizes = [16, 1], strides = [1, 1]} : vector<16x9xf32> to vector<16x1xf32>
      %401 = vector.broadcast %400 : vector<16x1xf32> to vector<16x256xf32>
      %402 = arith.mulf %401, %399 : vector<16x256xf32>
      %403 = arith.addf %395, %402 : vector<16x256xf32>
      %404 = vector.extract_strided_slice %403 {offsets = [0, 0], sizes = [8, 256], strides = [1, 1]} : vector<16x256xf32> to vector<8x256xf32>
      %cst_52 = arith.constant 5.000000e-01 : f32
      %405 = vector.broadcast %cst_52 : f32 to vector<8x256xf32>
      %406 = arith.mulf %405, %404 : vector<8x256xf32>
      %407 = arith.mulf %404, %404 : vector<8x256xf32>
      %408 = arith.mulf %407, %404 : vector<8x256xf32>
      %cst_53 = arith.constant 4.471500e-02 : f32
      %409 = vector.broadcast %cst_53 : f32 to vector<8x256xf32>
      %410 = arith.mulf %409, %408 : vector<8x256xf32>
      %411 = arith.addf %404, %410 : vector<8x256xf32>
      %cst_54 = arith.constant 0.797884583 : f32
      %412 = vector.broadcast %cst_54 : f32 to vector<8x256xf32>
      %413 = arith.mulf %412, %411 : vector<8x256xf32>
      %414 = math.tanh %413 : vector<8x256xf32>
      %cst_55 = arith.constant 1.000000e+00 : f32
      %415 = vector.broadcast %cst_55 : f32 to vector<8x256xf32>
      %416 = arith.addf %415, %414 : vector<8x256xf32>
      %417 = arith.mulf %406, %416 : vector<8x256xf32>
      %418 = vector.extract_strided_slice %403 {offsets = [8, 0], sizes = [8, 256], strides = [1, 1]} : vector<16x256xf32> to vector<8x256xf32>
      %419 = arith.mulf %417, %418 : vector<8x256xf32>
      %420 = arith.index_cast %arg13 : i32 to index
      %c0_56 = arith.constant 0 : index
      %c0_57 = arith.constant 0 : index
      %421 = vector.load %arg10[%420, %c0_56, %c0_57] : memref<8x16x8xf32, #tpu.memory_space<vmem>>, vector<1x16x8xf32>
      %422 = vector.shape_cast %421 : vector<1x16x8xf32> to vector<16x8xf32>
      %cst_58 = arith.constant dense<0.000000e+00> : vector<16x256xf32>
      %423 = tpu.matmul %422, %419, %cst_58 {dimension_numbers = #tpu.dot_dimension_numbers<[1], [0], [0], [1], [0, 0, 1, 1], [], []>} : vector<16x8xf32>, vector<8x256xf32>, vector<16x256xf32> -> vector<16x256xf32>
      %424 = arith.addf %328, %423 : vector<16x256xf32>
      scf.yield %424, %329 : vector<16x256xf32>, vector<16x256xf32>
    }
    %c8_i32_9 = arith.constant 8 : i32
    %c0_10 = arith.constant 0 : index
    %c0_11 = arith.constant 0 : index
    %c0_12 = arith.constant 0 : index
    %8 = vector.load %arg11[%c0_10, %c0_11, %c0_12] : memref<1x16x256xf32, #tpu.memory_space<vmem>>, vector<1x16x256xf32>
    %9 = vector.shape_cast %8 : vector<1x16x256xf32> to vector<16x256xf32>
    %10 = vector.shape_cast %7#0 : vector<16x256xf32> to vector<1x16x256xf32>
    tpu.vector_store %arg11[%c0_10, %c0_11, %c0_12], %10 {strides = array<i32>} : memref<1x16x256xf32, #tpu.memory_space<vmem>>, vector<1x16x256xf32>,
    %c0_13 = arith.constant 0 : index
    %c0_14 = arith.constant 0 : index
    %c0_15 = arith.constant 0 : index
    %11 = vector.load %arg12[%c0_13, %c0_14, %c0_15] : memref<1x16x256xf32, #tpu.memory_space<vmem>>, vector<1x16x256xf32>
    %12 = vector.shape_cast %11 : vector<1x16x256xf32> to vector<16x256xf32>
    %13 = vector.shape_cast %7#1 : vector<16x256xf32> to vector<1x16x256xf32>
    tpu.vector_store %arg12[%c0_13, %c0_14, %c0_15], %13 {strides = array<i32>} : memref<1x16x256xf32, #tpu.memory_space<vmem>>, vector<1x16x256xf32>,
    return
  }
  func.func @transform_0(%arg0: i32) -> i32 {
    %c0_i32 = arith.constant 0 : i32
    %c0_i32_0 = arith.constant 0 : i32
    return %c0_i32 : i32
  }
  func.func @transform_1(%arg0: i32) -> (i32, i32, i32) {
    %c0_i32 = arith.constant 0 : i32
    %c0_i32_0 = arith.constant 0 : i32
    %c0_i32_1 = arith.constant 0 : i32
    return %arg0, %c0_i32, %c0_i32_0 : i32, i32, i32
  }
  func.func @transform_2(%arg0: i32) -> (i32, i32, i32) {
    %c0_i32 = arith.constant 0 : i32
    %c0_i32_0 = arith.constant 0 : i32
    %c0_i32_1 = arith.constant 0 : i32
    return %arg0, %c0_i32, %c0_i32_0 : i32, i32, i32
  }
  func.func @transform_3(%arg0: i32) -> (i32, i32) {
    %c0_i32 = arith.constant 0 : i32
    %c0_i32_0 = arith.constant 0 : i32
    %c0_i32_1 = arith.constant 0 : i32
    return %c0_i32, %c0_i32_0 : i32, i32
  }
  func.func @transform_4(%arg0: i32) -> (i32, i32) {
    %c0_i32 = arith.constant 0 : i32
    %c0_i32_0 = arith.constant 0 : i32
    %c0_i32_1 = arith.constant 0 : i32
    return %c0_i32, %c0_i32_0 : i32, i32
  }
  func.func @transform_5(%arg0: i32) -> (i32, i32, i32) {
    %c0_i32 = arith.constant 0 : i32
    %c0_i32_0 = arith.constant 0 : i32
    %c0_i32_1 = arith.constant 0 : i32
    %c0_i32_2 = arith.constant 0 : i32
    return %c0_i32, %c0_i32_0, %c0_i32_1 : i32, i32, i32
  }
  func.func @transform_6(%arg0: i32) -> (i32, i32, i32) {
    %c0_i32 = arith.constant 0 : i32
    %c0_i32_0 = arith.constant 0 : i32
    %c0_i32_1 = arith.constant 0 : i32
    %c0_i32_2 = arith.constant 0 : i32
    return %c0_i32, %c0_i32_0, %c0_i32_1 : i32, i32, i32
  }
  func.func @transform_7(%arg0: i32) -> (i32, i32, i32) {
    %c0_i32 = arith.constant 0 : i32
    %c0_i32_0 = arith.constant 0 : i32
    %c0_i32_1 = arith.constant 0 : i32
    %c0_i32_2 = arith.constant 0 : i32
    return %c0_i32, %c0_i32_0, %c0_i32_1 : i32, i32, i32
  }
  func.func @transform_8(%arg0: i32) -> (i32, i32, i32) {
    %c0_i32 = arith.constant 0 : i32
    %c0_i32_0 = arith.constant 0 : i32
    %c0_i32_1 = arith.constant 0 : i32
    %c0_i32_2 = arith.constant 0 : i32
    return %c0_i32, %c0_i32_0, %c0_i32_1 : i32, i32, i32
  }
  func.func @transform_9(%arg0: i32) -> (i32, i32, i32) {
    %c0_i32 = arith.constant 0 : i32
    %c0_i32_0 = arith.constant 0 : i32
    %c0_i32_1 = arith.constant 0 : i32
    %c0_i32_2 = arith.constant 0 : i32
    return %c0_i32, %c0_i32_0, %c0_i32_1 : i32, i32, i32
  }
  func.func @transform_10(%arg0: i32) -> (i32, i32, i32) {
    %c0_i32 = arith.constant 0 : i32
    %c0_i32_0 = arith.constant 0 : i32
    %c0_i32_1 = arith.constant 0 : i32
    return %arg0, %c0_i32, %c0_i32_0 : i32, i32, i32
  }
  func.func @transform_11(%arg0: i32) -> (i32, i32, i32) {
    %c0_i32 = arith.constant 0 : i32
    %c0_i32_0 = arith.constant 0 : i32
    %c0_i32_1 = arith.constant 0 : i32
    return %arg0, %c0_i32, %c0_i32_0 : i32, i32, i32
  }
}

</mosaic_0001>

<llo_original>
// kernel: se_block_forward.1
$region0: #{se_block_forward.1}
  #allocation0 [shape = 'u32[]', space=smem, size = 0x4, offset = 0x4, fixed_abs, tag = 'smem constant byte address 0x4 - core index']
  #allocation1 [shape = 'u32[144,128]{1,0:T(1,128)}', space=vmem, size = 0x12000, scoped, tag = 'internal scratch']
  %s0 = inlined_call_operand.vmem [shape: f32[8], index: 0, kind: input, shape index: {}]
  %s1 = inlined_call_operand.vmem [shape: f32[2,16,256], index: 1, kind: input, shape index: {}]
  %s2 = inlined_call_operand.vmem [shape: f32[2,16,256], index: 2, kind: input, shape index: {}]
  %s3 = inlined_call_operand.vmem [shape: f32[9,256], index: 3, kind: input, shape index: {}]
  %s4 = inlined_call_operand.vmem [shape: f32[48,48], index: 4, kind: input, shape index: {}]
  %s5 = inlined_call_operand.vmem [shape: f32[8,16,54], index: 5, kind: input, shape index: {}]
  %s6 = inlined_call_operand.vmem [shape: f32[8,16,16], index: 6, kind: input, shape index: {}]
  %s7 = inlined_call_operand.vmem [shape: f32[8,16,16], index: 7, kind: input, shape index: {}]
  %s8 = inlined_call_operand.vmem [shape: f32[8,16,9], index: 8, kind: input, shape index: {}]
  %s9 = inlined_call_operand.vmem [shape: f32[8,16,8], index: 9, kind: input, shape index: {}]
  %s10 = inlined_call_operand.vmem [shape: f32[2,16,256], index: 10, kind: output, shape index: {0}]
  %s11 = inlined_call_operand.vmem [shape: f32[2,16,256], index: 11, kind: output, shape index: {1}]
  %12 = xla_tuple %s10, %s11
  %s13 = sld [smem:[#allocation0]]
  $region92: #{se_block_forward.1} parent=0
    _
  %s15 = ssub.s32 1, %s13
  %s16 = scalar_select 0, %s15, %s13
  $region1: #{se_block_forward.1} parent=0
    #allocation2 [shape = 'u8[512]{0}', space=smem, size = 0x200, scoped, tag = 'input window, operand 0, single buffered']
    #allocation3 [shape = 's32[2]{0}', space=sflag, size = 0x8, scoped, tag = 'scoped memory for se_block_forward.1']
    %17 = vsyncpa [#allocation3], 0
    loop: start=0, step=1, limit=4
    $region2: #{se_block_forward.1} parent=1 // loop_pre_header
      _
    $region3: #{se_block_forward.1} parent=1 // loop_header
      %s19 = sphi 0, %s23
      %p20 = scmp.ge.s32.totalorder %s19, 4
      %s27 = sphi 0, %s27
      %s29 = sphi 0, %s27
      %s30 = sphi 0, %s29
      %s44 = sphi 0, %s30
      %s50 = sphi 0, %s52
      %s53 = sphi 0, %s50
      %s54 = sphi 0, %s53
      %s70 = sphi 0, %s54
      %s76 = sphi 0, %s78
      %s79 = sphi 0, %s76
      %s80 = sphi 0, %s79
      %s96 = sphi 0, %s80
      %s100 = sphi 0, %s100
      %s102 = sphi 0, %s100
      %s103 = sphi 0, %s102
      %s117 = sphi 0, %s103
      %s121 = sphi 0, %s121
      %s123 = sphi 0, %s121
      %s124 = sphi 0, %s123
      %s138 = sphi 0, %s124
      %s142 = sphi 0, %s142
      %s144 = sphi 0, %s142
      %s145 = sphi 0, %s144
      %s159 = sphi 0, %s145
      %s163 = sphi 0, %s163
      %s165 = sphi 0, %s163
      %s166 = sphi 0, %s165
      %s180 = sphi 0, %s166
      %s184 = sphi 0, %s184
      %s186 = sphi 0, %s184
      %s187 = sphi 0, %s186
      %s201 = sphi 0, %s187
      %s205 = sphi 0, %s205
      %s207 = sphi 0, %s205
      %s208 = sphi 0, %s207
      %s222 = sphi 0, %s208
      %s226 = sphi 0, %s226
      %s228 = sphi 0, %s226
      %s229 = sphi 0, %s228
      %s243 = sphi 0, %s229
      %s249 = sphi 0, %s251
      %s252 = sphi 0, %s249
      %s253 = sphi 0, %s252
      %s269 = sphi 0, %s253
      %s275 = sphi 0, %s277
      %s278 = sphi 0, %s275
      %s279 = sphi 0, %s278
      %s295 = sphi 0, %s279
    $region4: #{se_block_forward.1} parent=1 // loop_header_branch
      %22 = sbr.rel (%p20) target = $region8
    $region5: #{se_block_forward.1} parent=1 // loop_body
      %s24 = ssub.s32 %s19, 1
      %s25 = ssub.s32 %s19, 2
      %s26 = sadd.s32 %s19, 1
      %s28 = sadd.s32 %s27, 1
      %p31 = scmp.eq.s32.totalorder %s19, 1
      %p32 = scmp.ne.s32.totalorder %s27, %s29
      %p33 = scmp.eq.s32.totalorder %s19, 0
      %p34 = por %p32, %p33
      %p35 = scmp.ne.s32.totalorder %s27, %s29
      %p36 = scmp.eq.s32.totalorder %s24, 1
      %p37 = por %p35, %p36
      %p38 = scmp.ne.s32.totalorder %s29, %s30
      %p39 = scmp.eq.s32.totalorder %s24, 0
      %p40 = por %p38, %p39
      %p41 = scmp.ne.s32.totalorder %s29, %s30
      %p42 = scmp.eq.s32.totalorder %s25, 1
      %p43 = por %p41, %p42
      %p45 = scmp.ne.s32.totalorder %s30, %s44
      %p46 = scmp.eq.s32.totalorder %s25, 0
      %p47 = por %p45, %p46
      %s48 = ssub.s32 %s19, %s26
      %p49 = scmp.eq.s32.totalorder %s48, 0
      %s51 = sadd.s32 %s50, 1
      %s52 = scalar_select %p49, %s50, %s51
      %p55 = pneg %p49
      %p56 = scmp.eq.s32.totalorder %s19, 1
      %p57 = por %p55, %p56
      %p58 = scmp.ne.s32.totalorder %s50, %s53
      %p59 = scmp.eq.s32.totalorder %s19, 0
      %p60 = por %p58, %p59
      %p61 = scmp.ne.s32.totalorder %s50, %s53
      %p62 = scmp.eq.s32.totalorder %s24, 1
      %p63 = por %p61, %p62
      %p64 = scmp.ne.s32.totalorder %s53, %s54
      %p65 = scmp.eq.s32.totalorder %s24, 0
      %p66 = por %p64, %p65
      %p67 = scmp.ne.s32.totalorder %s53, %s54
      %p68 = scmp.eq.s32.totalorder %s25, 1
      %p69 = por %p67, %p68
      %p71 = scmp.ne.s32.totalorder %s54, %s70
      %p72 = scmp.eq.s32.totalorder %s25, 0
      %p73 = por %p71, %p72
      %s74 = ssub.s32 %s19, %s26
      %p75 = scmp.eq.s32.totalorder %s74, 0
      %s77 = sadd.s32 %s76, 1
      %s78 = scalar_select %p75, %s76, %s77
      %p81 = pneg %p75
      %p82 = scmp.eq.s32.totalorder %s19, 1
      %p83 = por %p81, %p82
      %p84 = scmp.ne.s32.totalorder %s76, %s79
      %p85 = scmp.eq.s32.totalorder %s19, 0
      %p86 = por %p84, %p85
      %p87 = scmp.ne.s32.totalorder %s76, %s79
      %p88 = scmp.eq.s32.totalorder %s24, 1
      %p89 = por %p87, %p88
      %p90 = scmp.ne.s32.totalorder %s79, %s80
      %p91 = scmp.eq.s32.totalorder %s24, 0
      %p92 = por %p90, %p91
      %p93 = scmp.ne.s32.totalorder %s79, %s80
      %p94 = scmp.eq.s32.totalorder %s25, 1
      %p95 = por %p93, %p94
      %p97 = scmp.ne.s32.totalorder %s80, %s96
      %p98 = scmp.eq.s32.totalorder %s25, 0
      %p99 = por %p97, %p98
      %s101 = sadd.s32 %s100, 1
      %p104 = scmp.eq.s32.totalorder %s19, 1
      %p105 = scmp.ne.s32.totalorder %s100, %s102
      %p106 = scmp.eq.s32.totalorder %s19, 0
      %p107 = por %p105, %p106
      %p108 = scmp.ne.s32.totalorder %s100, %s102
      %p109 = scmp.eq.s32.totalorder %s24, 1
      %p110 = por %p108, %p109
      %p111 = scmp.ne.s32.totalorder %s102, %s103
      %p112 = scmp.eq.s32.totalorder %s24, 0
      %p113 = por %p111, %p112
      %p114 = scmp.ne.s32.totalorder %s102, %s103
      %p115 = scmp.eq.s32.totalorder %s25, 1
      %p116 = por %p114, %p115
      %p118 = scmp.ne.s32.totalorder %s103, %s117
      %p119 = scmp.eq.s32.totalorder %s25, 0
      %p120 = por %p118, %p119
      %s122 = sadd.s32 %s121, 1
      %p125 = scmp.eq.s32.totalorder %s19, 1
      %p126 = scmp.ne.s32.totalorder %s121, %s123
      %p127 = scmp.eq.s32.totalorder %s19, 0
      %p128 = por %p126, %p127
      %p129 = scmp.ne.s32.totalorder %s121, %s123
      %p130 = scmp.eq.s32.totalorder %s24, 1
      %p131 = por %p129, %p130
      %p132 = scmp.ne.s32.totalorder %s123, %s124
      %p133 = scmp.eq.s32.totalorder %s24, 0
      %p134 = por %p132, %p133
      %p135 = scmp.ne.s32.totalorder %s123, %s124
      %p136 = scmp.eq.s32.totalorder %s25, 1
      %p137 = por %p135, %p136
      %p139 = scmp.ne.s32.totalorder %s124, %s138
      %p140 = scmp.eq.s32.totalorder %s25, 0
      %p141 = por %p139, %p140
      %s143 = sadd.s32 %s142, 1
      %p146 = scmp.eq.s32.totalorder %s19, 1
      %p147 = scmp.ne.s32.totalorder %s142, %s144
      %p148 = scmp.eq.s32.totalorder %s19, 0
      %p149 = por %p147, %p148
      %p150 = scmp.ne.s32.totalorder %s142, %s144
      %p151 = scmp.eq.s32.totalorder %s24, 1
      %p152 = por %p150, %p151
      %p153 = scmp.ne.s32.totalorder %s144, %s145
      %p154 = scmp.eq.s32.totalorder %s24, 0
      %p155 = por %p153, %p154
      %p156 = scmp.ne.s32.totalorder %s144, %s145
      %p157 = scmp.eq.s32.totalorder %s25, 1
      %p158 = por %p156, %p157
      %p160 = scmp.ne.s32.totalorder %s145, %s159
      %p161 = scmp.eq.s32.totalorder %s25, 0
      %p162 = por %p160, %p161
      %s164 = sadd.s32 %s163, 1
      %p167 = scmp.eq.s32.totalorder %s19, 1
      %p168 = scmp.ne.s32.totalorder %s163, %s165
      %p169 = scmp.eq.s32.totalorder %s19, 0
      %p170 = por %p168, %p169
      %p171 = scmp.ne.s32.totalorder %s163, %s165
      %p172 = scmp.eq.s32.totalorder %s24, 1
      %p173 = por %p171, %p172
      %p174 = scmp.ne.s32.totalorder %s165, %s166
      %p175 = scmp.eq.s32.totalorder %s24, 0
      %p176 = por %p174, %p175
      %p177 = scmp.ne.s32.totalorder %s165, %s166
      %p178 = scmp.eq.s32.totalorder %s25, 1
      %p179 = por %p177, %p178
      %p181 = scmp.ne.s32.totalorder %s166, %s180
      %p182 = scmp.eq.s32.totalorder %s25, 0
      %p183 = por %p181, %p182
      %s185 = sadd.s32 %s184, 1
      %p188 = scmp.eq.s32.totalorder %s19, 1
      %p189 = scmp.ne.s32.totalorder %s184, %s186
      %p190 = scmp.eq.s32.totalorder %s19, 0
      %p191 = por %p189, %p190
      %p192 = scmp.ne.s32.totalorder %s184, %s186
      %p193 = scmp.eq.s32.totalorder %s24, 1
      %p194 = por %p192, %p193
      %p195 = scmp.ne.s32.totalorder %s186, %s187
      %p196 = scmp.eq.s32.totalorder %s24, 0
      %p197 = por %p195, %p196
      %p198 = scmp.ne.s32.totalorder %s186, %s187
      %p199 = scmp.eq.s32.totalorder %s25, 1
      %p200 = por %p198, %p199
      %p202 = scmp.ne.s32.totalorder %s187, %s201
      %p203 = scmp.eq.s32.totalorder %s25, 0
      %p204 = por %p202, %p203
      %s206 = sadd.s32 %s205, 1
      %p209 = scmp.eq.s32.totalorder %s19, 1
      %p210 = scmp.ne.s32.totalorder %s205, %s207
      %p211 = scmp.eq.s32.totalorder %s19, 0
      %p212 = por %p210, %p211
      %p213 = scmp.ne.s32.totalorder %s205, %s207
      %p214 = scmp.eq.s32.totalorder %s24, 1
      %p215 = por %p213, %p214
      %p216 = scmp.ne.s32.totalorder %s207, %s208
      %p217 = scmp.eq.s32.totalorder %s24, 0
      %p218 = por %p216, %p217
      %p219 = scmp.ne.s32.totalorder %s207, %s208
      %p220 = scmp.eq.s32.totalorder %s25, 1
      %p221 = por %p219, %p220
      %p223 = scmp.ne.s32.totalorder %s208, %s222
      %p224 = scmp.eq.s32.totalorder %s25, 0
      %p225 = por %p223, %p224
      %s227 = sadd.s32 %s226, 1
      %p230 = scmp.eq.s32.totalorder %s19, 1
      %p231 = scmp.ne.s32.totalorder %s226, %s228
      %p232 = scmp.eq.s32.totalorder %s19, 0
      %p233 = por %p231, %p232
      %p234 = scmp.ne.s32.totalorder %s226, %s228
      %p235 = scmp.eq.s32.totalorder %s24, 1
      %p236 = por %p234, %p235
      %p237 = scmp.ne.s32.totalorder %s228, %s229
      %p238 = scmp.eq.s32.totalorder %s24, 0
      %p239 = por %p237, %p238
      %p240 = scmp.ne.s32.totalorder %s228, %s229
      %p241 = scmp.eq.s32.totalorder %s25, 1
      %p242 = por %p240, %p241
      %p244 = scmp.ne.s32.totalorder %s229, %s243
      %p245 = scmp.eq.s32.totalorder %s25, 0
      %p246 = por %p244, %p245
      %s247 = ssub.s32 %s19, %s26
      %p248 = scmp.eq.s32.totalorder %s247, 0
      %s250 = sadd.s32 %s249, 1
      %s251 = scalar_select %p248, %s249, %s250
      %p254 = pneg %p248
      %p255 = scmp.eq.s32.totalorder %s19, 1
      %p256 = por %p254, %p255
      %p257 = scmp.ne.s32.totalorder %s249, %s252
      %p258 = scmp.eq.s32.totalorder %s19, 0
      %p259 = por %p257, %p258
      %p260 = scmp.ne.s32.totalorder %s249, %s252
      %p261 = scmp.eq.s32.totalorder %s24, 1
      %p262 = por %p260, %p261
      %p263 = scmp.ne.s32.totalorder %s252, %s253
      %p264 = scmp.eq.s32.totalorder %s24, 0
      %p265 = por %p263, %p264
      %p266 = scmp.ne.s32.totalorder %s252, %s253
      %p267 = scmp.eq.s32.totalorder %s25, 1
      %p268 = por %p266, %p267
      %p270 = scmp.ne.s32.totalorder %s253, %s269
      %p271 = scmp.eq.s32.totalorder %s25, 0
      %p272 = por %p270, %p271
      %s273 = ssub.s32 %s19, %s26
      %p274 = scmp.eq.s32.totalorder %s273, 0
      %s276 = sadd.s32 %s275, 1
      %s277 = scalar_select %p274, %s275, %s276
      %p280 = pneg %p274
      %p281 = scmp.eq.s32.totalorder %s19, 1
      %p282 = por %p280, %p281
      %p283 = scmp.ne.s32.totalorder %s275, %s278
      %p284 = scmp.eq.s32.totalorder %s19, 0
      %p285 = por %p283, %p284
      %p286 = scmp.ne.s32.totalorder %s275, %s278
      %p287 = scmp.eq.s32.totalorder %s24, 1
      %p288 = por %p286, %p287
      %p289 = scmp.ne.s32.totalorder %s278, %s279
      %p290 = scmp.eq.s32.totalorder %s24, 0
      %p291 = por %p289, %p290
      %p292 = scmp.ne.s32.totalorder %s278, %s279
      %p293 = scmp.eq.s32.totalorder %s25, 1
      %p294 = por %p292, %p293
      %p296 = scmp.ne.s32.totalorder %s279, %s295
      %p297 = scmp.eq.s32.totalorder %s25, 0
      %p298 = por %p296, %p297
      %p299 = scmp.le.s32.totalorder 1, %s19
      %p300 = scmp.lt.s32.totalorder %s19, 3
      %p301 = pnand %p299, %p300
      %p302 = pneg %p301
      // Predicated region
      $region9: #{se_block_forward.1} parent=5 // pred_check
        _
      $region10: #{se_block_forward.1} parent=5 // pred_check_branch
        %304 = sbr.rel (%p301) target = $region12
      $region11: #{se_block_forward.1} parent=5 // pred_region
        %s305 = ssub.s32 %s19, 1
        // Predicated region
        $region13: #{se_block_forward.1} parent=11 // pred_check
          %p306 = pneg %p40
        $region14: #{se_block_forward.1} parent=11 // pred_check_branch
          %308 = sbr.rel (%p306) target = $region16
        $region15: #{se_block_forward.1} parent=11 // pred_region
          %s310 = ssub.s32 16, 16
          %311 = vsyncadd [#allocation3], %s310
          %s313 = sshll.u32 %s0, 4
          %s314 = int_to_ptr.vmem [resolvable:$true] %s313
          %316 = dma.vmem_to_smem %s314, 16, [#allocation2], [#allocation3]
        $region16: #{se_block_forward.1} parent=11 // pred_fallthru
          _
        // Predicated region
        $region17: #{se_block_forward.1} parent=11 // pred_check
          %p317 = pneg %p113
        $region18: #{se_block_forward.1} parent=11 // pred_check_branch
          %319 = sbr.rel (%p317) target = $region20
        $region19: #{se_block_forward.1} parent=11 // pred_region
          _
        $region20: #{se_block_forward.1} parent=11 // pred_fallthru
          _
        // Predicated region
        $region21: #{se_block_forward.1} parent=11 // pred_check
          %p320 = pneg %p134
        $region22: #{se_block_forward.1} parent=11 // pred_check_branch
          %322 = sbr.rel (%p320) target = $region24
        $region23: #{se_block_forward.1} parent=11 // pred_region
          _
        $region24: #{se_block_forward.1} parent=11 // pred_fallthru
          _
        // Predicated region
        $region25: #{se_block_forward.1} parent=11 // pred_check
          %p323 = pneg %p155
        $region26: #{se_block_forward.1} parent=11 // pred_check_branch
          %325 = sbr.rel (%p323) target = $region28
        $region27: #{se_block_forward.1} parent=11 // pred_region
          _
        $region28: #{se_block_forward.1} parent=11 // pred_fallthru
          _
        // Predicated region
        $region29: #{se_block_forward.1} parent=11 // pred_check
          %p326 = pneg %p176
        $region30: #{se_block_forward.1} parent=11 // pred_check_branch
          %328 = sbr.rel (%p326) target = $region32
        $region31: #{se_block_forward.1} parent=11 // pred_region
          _
        $region32: #{se_block_forward.1} parent=11 // pred_fallthru
          _
        // Predicated region
        $region33: #{se_block_forward.1} parent=11 // pred_check
          %p329 = pneg %p197
        $region34: #{se_block_forward.1} parent=11 // pred_check_branch
          %331 = sbr.rel (%p329) target = $region36
        $region35: #{se_block_forward.1} parent=11 // pred_region
          _
        $region36: #{se_block_forward.1} parent=11 // pred_fallthru
          _
        // Predicated region
        $region37: #{se_block_forward.1} parent=11 // pred_check
          %p332 = pneg %p218
        $region38: #{se_block_forward.1} parent=11 // pred_check_branch
          %334 = sbr.rel (%p332) target = $region40
        $region39: #{se_block_forward.1} parent=11 // pred_region
          _
        $region40: #{se_block_forward.1} parent=11 // pred_fallthru
          _
        // Predicated region
        $region41: #{se_block_forward.1} parent=11 // pred_check
          %p335 = pneg %p239
        $region42: #{se_block_forward.1} parent=11 // pred_check_branch
          %337 = sbr.rel (%p335) target = $region44
        $region43: #{se_block_forward.1} parent=11 // pred_region
          _
        $region44: #{se_block_forward.1} parent=11 // pred_fallthru
          _
      $region12: #{se_block_forward.1} parent=5 // pred_fallthru
        _
      %p338 = scmp.lt.s32.totalorder %s19, 2
      // Predicated region
      $region45: #{se_block_forward.1} parent=5 // pred_check
        %p339 = pneg %p338
      $region46: #{se_block_forward.1} parent=5 // pred_check_branch
        %341 = sbr.rel (%p339) target = $region48
      $region47: #{se_block_forward.1} parent=5 // pred_region
        // Predicated region
        $region49: #{se_block_forward.1} parent=47 // pred_check
          %p342 = pneg %p60
        $region50: #{se_block_forward.1} parent=47 // pred_check_branch
          %344 = sbr.rel (%p342) target = $region52
        $region51: #{se_block_forward.1} parent=47 // pred_region
          %p345 = scmp.lt.s32.totalorder %s19, 1
          %s346 = scalar_select %p345, %s19, 1
          %s347 = smul.addr %s346, 4
          %s348 = smul.addr %s347, 8
          %s349 = scalar_lea.vmem %s1, %s348
        $region52: #{se_block_forward.1} parent=47 // pred_fallthru
          _
        // Predicated region
        $region53: #{se_block_forward.1} parent=47 // pred_check
          %p350 = pneg %p86
        $region54: #{se_block_forward.1} parent=47 // pred_check_branch
          %352 = sbr.rel (%p350) target = $region56
        $region55: #{se_block_forward.1} parent=47 // pred_region
          %p353 = scmp.lt.s32.totalorder %s19, 1
          %s354 = scalar_select %p353, %s19, 1
          %s355 = smul.addr %s354, 4
          %s356 = smul.addr %s355, 8
          %s357 = scalar_lea.vmem %s2, %s356
        $region56: #{se_block_forward.1} parent=47 // pred_fallthru
          _
      $region48: #{se_block_forward.1} parent=5 // pred_fallthru
        _
      %p358 = scmp.le.s32.totalorder 1, %s19
      %p359 = scmp.lt.s32.totalorder %s19, 3
      %p360 = pnand %p358, %p359
      %p361 = pneg %p360
      // Predicated region
      $region57: #{se_block_forward.1} parent=5 // pred_check
        _
      $region58: #{se_block_forward.1} parent=5 // pred_check_branch
        %363 = sbr.rel (%p360) target = $region60
      $region59: #{se_block_forward.1} parent=5 // pred_region
        %s364 = ssub.s32 %s19, 1
        // Predicated region
        $region61: #{se_block_forward.1} parent=59 // pred_check
          %p365 = pneg %p40
        $region62: #{se_block_forward.1} parent=59 // pred_check_branch
          %367 = sbr.rel (%p365) target = $region64
        $region63: #{se_block_forward.1} parent=59 // pred_region
          %368 = dma.done [#allocation3], 16
        $region64: #{se_block_forward.1} parent=59 // pred_fallthru
          _
        %369 = sfence
        %p370 = pneg %p40
        %p371 = pneg %p37
        %p372 = scmp.lt.s32.totalorder %s24, 1
        %s373 = scalar_select %p372, %s24, 1
        %s374 = smul.addr %s373, 4
        %s375 = smul.addr %s374, 8
        %s376 = scalar_lea.vmem %s1, %s375
        %p377 = pneg %p66
        %p378 = pneg %p63
        %p379 = scmp.lt.s32.totalorder %s24, 1
        %s380 = scalar_select %p379, %s24, 1
        %s381 = smul.addr %s380, 4
        %s382 = smul.addr %s381, 8
        %s383 = scalar_lea.vmem %s2, %s382
        %p384 = pneg %p92
        %p385 = pneg %p89
        %p386 = pneg %p113
        %p387 = pneg %p110
        %p388 = pneg %p134
        %p389 = pneg %p131
        %p390 = pneg %p155
        %p391 = pneg %p152
        %p392 = pneg %p176
        %p393 = pneg %p173
        %p394 = pneg %p197
        %p395 = pneg %p194
        %p396 = pneg %p218
        %p397 = pneg %p215
        %p398 = pneg %p239
        %p399 = pneg %p236
        %p400 = pneg %p265
        %p401 = pneg %p262
        %p402 = scmp.lt.s32.totalorder %s24, 1
        %s403 = scalar_select %p402, %s24, 1
        %s404 = smul.addr %s403, 4
        %s405 = smul.addr %s404, 8
        %s406 = scalar_lea.vmem %s10, %s405
        %p407 = pneg %p291
        %p408 = pneg %p288
        %p409 = scmp.lt.s32.totalorder %s24, 1
        %s410 = scalar_select %p409, %s24, 1
        %s411 = smul.addr %s410, 4
        %s412 = smul.addr %s411, 8
        %s413 = scalar_lea.vmem %s11, %s412
        %p414 = scmp.lt.s32.totalorder %s24, 1
        %s415 = scalar_select %p414, %s24, 1
        %s416 = smul.addr %s415, 4
        %s417 = smul.addr %s416, 8
        %s418 = scalar_lea.vmem %s1, %s417
        %p419 = scmp.lt.s32.totalorder %s24, 1
        %s420 = scalar_select %p419, %s24, 1
        %s421 = smul.addr %s420, 4
        %s422 = smul.addr %s421, 8
        %s423 = scalar_lea.vmem %s2, %s422
        %p424 = scmp.lt.s32.totalorder %s24, 1
        %s425 = scalar_select %p424, %s24, 1
        %s426 = smul.addr %s425, 4
        %s427 = smul.addr %s426, 8
        %s428 = scalar_lea.vmem %s10, %s427
        %p429 = scmp.lt.s32.totalorder %s24, 1
        %s430 = scalar_select %p429, %s24, 1
        %s431 = smul.addr %s430, 4
        %s432 = smul.addr %s431, 8
        %s433 = scalar_lea.vmem %s11, %s432
        %v434 = vld [vmem:[%s3] sm:$0xff]
        %v435 = vld [vmem:[%s3 + $0x8] sm:$0xff]
        %v436 = vld [vmem:[%s3 + $0x10] sm:$0x1]
        %v437 = vld [vmem:[%s3 + $0x18] sm:$0x1]
        %v438 = vld [vmem:[%s4] sm:$0xff]
        %v439 = vld [vmem:[%s4 + $0x8] sm:$0xff]
        %v440 = vld [vmem:[%s4 + $0x10] sm:$0xff]
        %v441 = vld [vmem:[%s4 + $0x18] sm:$0xff]
        %v442 = vld [vmem:[%s4 + $0x20] sm:$0xff]
        %v443 = vld [vmem:[%s4 + $0x28] sm:$0xff]
        %v444 = vld [vmem:[%s418] sm:$0xff]
        %v445 = vld [vmem:[%s418 + $0x8] sm:$0xff]
        %v446 = vld [vmem:[%s418 + $0x10] sm:$0xff]
        %v447 = vld [vmem:[%s418 + $0x18] sm:$0xff]
        %v448 = vld [vmem:[%s423] sm:$0xff]
        %v449 = vld [vmem:[%s423 + $0x8] sm:$0xff]
        %v450 = vld [vmem:[%s423 + $0x10] sm:$0xff]
        %v451 = vld [vmem:[%s423 + $0x18] sm:$0xff]
        loop: start=0, step=1, limit=8
        $region65: #{se_block_forward.1} parent=59 // loop_pre_header
          _
        $region66: #{se_block_forward.1} parent=59 // loop_header
          %s453 = sphi 0, %s457
          %p454 = scmp.ge.s32.totalorder %s453, 8
          %v458 = vphi %v444, %v2557
          %v459 = vphi %v445, %v2558
          %v460 = vphi %v446, %v2559
          %v461 = vphi %v447, %v2560
          %v462 = vphi %v448, %v2087
          %v463 = vphi %v449, %v2088
          %v464 = vphi %v450, %v2089
          %v465 = vphi %v451, %v2090
        $region67: #{se_block_forward.1} parent=59 // loop_header_branch
          %456 = sbr.rel (%p454) target = $region71
        $region68: #{se_block_forward.1} parent=59 // loop_body
          %s466 = smul.u32 %s453, 16
          %s467 = scalar_lea.vmem %s5, %s466
          %v468 = vld [vmem:[%s467] sm:$0xff]
          %v469 = vld [vmem:[%s467 + $0x8] sm:$0xff]
          %470 = vrot.lane.b32.xlu0 %v458, 17
          %v471 = vpop.permute.xlu0 %470
          %472 = vrot.lane.b32.xlu0 %v460, 17
          %v473 = vpop.permute.xlu0 %472
          %474 = vrot.lane.b32.xlu0 %v459, 17
          %v475 = vpop.permute.xlu0 %474
          %476 = vrot.lane.b32.xlu0 %v461, 17
          %v477 = vpop.permute.xlu0 %476
          %v478 = vlaneseq
          %v479 = vand.u32 %v478, 127
          %vm480 = vcmp.lt.s32.totalorder %v479, 17
          %v481 = vsel %vm480, %v471, %v475
          %v482 = vsel %vm480, %v473, %v477
          %v483 = vsel %vm480, %v475, %v471
          %v484 = vsel %vm480, %v477, %v473
          %485 = vrot.lane.b32.xlu0 %v462, 17
          %v486 = vpop.permute.xlu0 %485
          %487 = vrot.lane.b32.xlu0 %v464, 17
          %v488 = vpop.permute.xlu0 %487
          %489 = vrot.lane.b32.xlu0 %v463, 17
          %v490 = vpop.permute.xlu0 %489
          %491 = vrot.lane.b32.xlu0 %v465, 17
          %v492 = vpop.permute.xlu0 %491
          %v493 = vsel %vm480, %v486, %v490
          %v494 = vsel %vm480, %v488, %v492
          %v495 = vsel %vm480, %v490, %v486
          %v496 = vsel %vm480, %v492, %v488
          %v497 = vlaneseq
          %v498 = vshrl.u32 %v497, 7
          %v499 = vsub.s32 0, %v498
          %v500 = vrot.slane %v434, %v499
          %v501 = vlaneseq
          %v502 = vshrl.u32 %v501, 7
          %v503 = vsub.s32 0, %v502
          %v504 = vrot.slane %v435, %v503
          %v505 = vmul.f32 %v483, %v500
          %v506 = vmul.f32 %v481, %v504
          %v507 = vmul.f32 %v484, %v500
          %v508 = vmul.f32 %v482, %v504
          %v509 = vmul.f32 %v495, %v500
          %v510 = vmul.f32 %v493, %v504
          %v511 = vmul.f32 %v496, %v500
          %v512 = vmul.f32 %v494, %v504
          %514 = vset.pattern.permute.xlu0 0
          %515 = vperm.xlu0 %514, %v468
          %v516 = vpop.permute.xlu0 %515
          %519 = vset.pattern.permute.xlu0 0
          %520 = vperm.xlu0 %519, %v469
          %v521 = vpop.permute.xlu0 %520
          %v523 = vmul.f32 %v516, %v505
          %v524 = vmul.f32 %v516, %v506
          %v525 = vmul.f32 %v521, %v507
          %v526 = vmul.f32 %v521, %v508
          %527 = vset.pattern.permute.xlu0 27
          %528 = vperm.xlu0 %527, %v468
          %v529 = vpop.permute.xlu0 %528
          %531 = vset.pattern.permute.xlu0 27
          %532 = vperm.xlu0 %531, %v469
          %v533 = vpop.permute.xlu0 %532
          %v535 = vmul.f32 %v529, %v509
          %v536 = vmul.f32 %v529, %v510
          %v537 = vmul.f32 %v533, %v511
          %v538 = vmul.f32 %v533, %v512
          %v539 = vadd.f32 %v523, %v535
          %v540 = vadd.f32 %v524, %v536
          %v541 = vadd.f32 %v525, %v537
          %v542 = vadd.f32 %v526, %v538
          %543 = vset.pattern.permute.xlu0 9
          %544 = vperm.xlu0 %543, %v468
          %v545 = vpop.permute.xlu0 %544
          %547 = vset.pattern.permute.xlu0 9
          %548 = vperm.xlu0 %547, %v469
          %v549 = vpop.permute.xlu0 %548
          %v551 = vmul.f32 %v545, %v505
          %v552 = vmul.f32 %v545, %v506
          %v553 = vmul.f32 %v549, %v507
          %v554 = vmul.f32 %v549, %v508
          %555 = vset.pattern.permute.xlu0 36
          %556 = vperm.xlu0 %555, %v468
          %v557 = vpop.permute.xlu0 %556
          %559 = vset.pattern.permute.xlu0 36
          %560 = vperm.xlu0 %559, %v469
          %v561 = vpop.permute.xlu0 %560
          %v563 = vmul.f32 %v557, %v509
          %v564 = vmul.f32 %v557, %v510
          %v565 = vmul.f32 %v561, %v511
          %v566 = vmul.f32 %v561, %v512
          %v567 = vadd.f32 %v551, %v563
          %v568 = vadd.f32 %v552, %v564
          %v569 = vadd.f32 %v553, %v565
          %v570 = vadd.f32 %v554, %v566
          %571 = vset.pattern.permute.xlu0 18
          %572 = vperm.xlu0 %571, %v468
          %v573 = vpop.permute.xlu0 %572
          %575 = vset.pattern.permute.xlu0 18
          %576 = vperm.xlu0 %575, %v469
          %v577 = vpop.permute.xlu0 %576
          %v579 = vmul.f32 %v573, %v505
          %v580 = vmul.f32 %v573, %v506
          %v581 = vmul.f32 %v577, %v507
          %v582 = vmul.f32 %v577, %v508
          %583 = vset.pattern.permute.xlu0 45
          %584 = vperm.xlu0 %583, %v468
          %v585 = vpop.permute.xlu0 %584
          %587 = vset.pattern.permute.xlu0 45
          %588 = vperm.xlu0 %587, %v469
          %v589 = vpop.permute.xlu0 %588
          %v591 = vmul.f32 %v585, %v509
          %v592 = vmul.f32 %v585, %v510
          %v593 = vmul.f32 %v589, %v511
          %v594 = vmul.f32 %v589, %v512
          %v595 = vadd.f32 %v579, %v591
          %v596 = vadd.f32 %v580, %v592
          %v597 = vadd.f32 %v581, %v593
          %v598 = vadd.f32 %v582, %v594
          %599 = vrot.lane.b32.xlu0 %v458, 16
          %v600 = vpop.permute.xlu0 %599
          %601 = vrot.lane.b32.xlu0 %v460, 16
          %v602 = vpop.permute.xlu0 %601
          %603 = vrot.lane.b32.xlu0 %v459, 16
          %v604 = vpop.permute.xlu0 %603
          %605 = vrot.lane.b32.xlu0 %v461, 16
          %v606 = vpop.permute.xlu0 %605
          %vm607 = vcmp.lt.s32.totalorder %v479, 16
          %v608 = vsel %vm607, %v600, %v604
          %v609 = vsel %vm607, %v602, %v606
          %v610 = vsel %vm607, %v604, %v600
          %v611 = vsel %vm607, %v606, %v602
          %612 = vrot.lane.b32.xlu0 %v462, 16
          %v613 = vpop.permute.xlu0 %612
          %614 = vrot.lane.b32.xlu0 %v464, 16
          %v615 = vpop.permute.xlu0 %614
          %616 = vrot.lane.b32.xlu0 %v463, 16
          %v617 = vpop.permute.xlu0 %616
          %618 = vrot.lane.b32.xlu0 %v465, 16
          %v619 = vpop.permute.xlu0 %618
          %v620 = vsel %vm607, %v613, %v617
          %v621 = vsel %vm607, %v615, %v619
          %v622 = vsel %vm607, %v617, %v613
          %v623 = vsel %vm607, %v619, %v615
          %v624 = vlaneseq
          %v625 = vshrl.u32 %v624, 7
          %v626 = vsub.s32 1, %v625
          %v627 = vrot.slane %v434, %v626
          %v628 = vlaneseq
          %v629 = vshrl.u32 %v628, 7
          %v630 = vsub.s32 1, %v629
          %v631 = vrot.slane %v435, %v630
          %v632 = vmul.f32 %v610, %v627
          %v633 = vmul.f32 %v608, %v631
          %v634 = vmul.f32 %v611, %v627
          %v635 = vmul.f32 %v609, %v631
          %v636 = vmul.f32 %v622, %v627
          %v637 = vmul.f32 %v620, %v631
          %v638 = vmul.f32 %v623, %v627
          %v639 = vmul.f32 %v621, %v631
          %640 = vset.pattern.permute.xlu0 1
          %641 = vperm.xlu0 %640, %v468
          %v642 = vpop.permute.xlu0 %641
          %644 = vset.pattern.permute.xlu0 1
          %645 = vperm.xlu0 %644, %v469
          %v646 = vpop.permute.xlu0 %645
          %v648 = vmul.f32 %v642, %v632
          %v649 = vmul.f32 %v642, %v633
          %v650 = vmul.f32 %v646, %v634
          %v651 = vmul.f32 %v646, %v635
          %652 = vset.pattern.permute.xlu0 28
          %653 = vperm.xlu0 %652, %v468
          %v654 = vpop.permute.xlu0 %653
          %656 = vset.pattern.permute.xlu0 28
          %657 = vperm.xlu0 %656, %v469
          %v658 = vpop.permute.xlu0 %657
          %v660 = vmul.f32 %v654, %v636
          %v661 = vmul.f32 %v654, %v637
          %v662 = vmul.f32 %v658, %v638
          %v663 = vmul.f32 %v658, %v639
          %v664 = vadd.f32 %v648, %v660
          %v665 = vadd.f32 %v649, %v661
          %v666 = vadd.f32 %v650, %v662
          %v667 = vadd.f32 %v651, %v663
          %v668 = vadd.f32 %v539, %v664
          %v669 = vadd.f32 %v540, %v665
          %v670 = vadd.f32 %v541, %v666
          %v671 = vadd.f32 %v542, %v667
          %672 = vset.pattern.permute.xlu0 10
          %673 = vperm.xlu0 %672, %v468
          %v674 = vpop.permute.xlu0 %673
          %676 = vset.pattern.permute.xlu0 10
          %677 = vperm.xlu0 %676, %v469
          %v678 = vpop.permute.xlu0 %677
          %v680 = vmul.f32 %v674, %v632
          %v681 = vmul.f32 %v674, %v633
          %v682 = vmul.f32 %v678, %v634
          %v683 = vmul.f32 %v678, %v635
          %684 = vset.pattern.permute.xlu0 37
          %685 = vperm.xlu0 %684, %v468
          %v686 = vpop.permute.xlu0 %685
          %688 = vset.pattern.permute.xlu0 37
          %689 = vperm.xlu0 %688, %v469
          %v690 = vpop.permute.xlu0 %689
          %v692 = vmul.f32 %v686, %v636
          %v693 = vmul.f32 %v686, %v637
          %v694 = vmul.f32 %v690, %v638
          %v695 = vmul.f32 %v690, %v639
          %v696 = vadd.f32 %v680, %v692
          %v697 = vadd.f32 %v681, %v693
          %v698 = vadd.f32 %v682, %v694
          %v699 = vadd.f32 %v683, %v695
          %v700 = vadd.f32 %v567, %v696
          %v701 = vadd.f32 %v568, %v697
          %v702 = vadd.f32 %v569, %v698
          %v703 = vadd.f32 %v570, %v699
          %704 = vset.pattern.permute.xlu0 19
          %705 = vperm.xlu0 %704, %v468
          %v706 = vpop.permute.xlu0 %705
          %708 = vset.pattern.permute.xlu0 19
          %709 = vperm.xlu0 %708, %v469
          %v710 = vpop.permute.xlu0 %709
          %v712 = vmul.f32 %v706, %v632
          %v713 = vmul.f32 %v706, %v633
          %v714 = vmul.f32 %v710, %v634
          %v715 = vmul.f32 %v710, %v635
          %716 = vset.pattern.permute.xlu0 46
          %717 = vperm.xlu0 %716, %v468
          %v718 = vpop.permute.xlu0 %717
          %720 = vset.pattern.permute.xlu0 46
          %721 = vperm.xlu0 %720, %v469
          %v722 = vpop.permute.xlu0 %721
          %v724 = vmul.f32 %v718, %v636
          %v725 = vmul.f32 %v718, %v637
          %v726 = vmul.f32 %v722, %v638
          %v727 = vmul.f32 %v722, %v639
          %v728 = vadd.f32 %v712, %v724
          %v729 = vadd.f32 %v713, %v725
          %v730 = vadd.f32 %v714, %v726
          %v731 = vadd.f32 %v715, %v727
          %v732 = vadd.f32 %v595, %v728
          %v733 = vadd.f32 %v596, %v729
          %v734 = vadd.f32 %v597, %v730
          %v735 = vadd.f32 %v598, %v731
          %736 = vrot.lane.b32.xlu0 %v458, 15
          %v737 = vpop.permute.xlu0 %736
          %738 = vrot.lane.b32.xlu0 %v460, 15
          %v739 = vpop.permute.xlu0 %738
          %740 = vrot.lane.b32.xlu0 %v459, 15
          %v741 = vpop.permute.xlu0 %740
          %742 = vrot.lane.b32.xlu0 %v461, 15
          %v743 = vpop.permute.xlu0 %742
          %vm744 = vcmp.lt.s32.totalorder %v479, 15
          %v745 = vsel %vm744, %v737, %v741
          %v746 = vsel %vm744, %v739, %v743
          %v747 = vsel %vm744, %v741, %v737
          %v748 = vsel %vm744, %v743, %v739
          %749 = vrot.lane.b32.xlu0 %v462, 15
          %v750 = vpop.permute.xlu0 %749
          %751 = vrot.lane.b32.xlu0 %v464, 15
          %v752 = vpop.permute.xlu0 %751
          %753 = vrot.lane.b32.xlu0 %v463, 15
          %v754 = vpop.permute.xlu0 %753
          %755 = vrot.lane.b32.xlu0 %v465, 15
          %v756 = vpop.permute.xlu0 %755
          %v757 = vsel %vm744, %v750, %v754
          %v758 = vsel %vm744, %v752, %v756
          %v759 = vsel %vm744, %v754, %v750
          %v760 = vsel %vm744, %v756, %v752
          %v761 = vlaneseq
          %v762 = vshrl.u32 %v761, 7
          %v763 = vsub.s32 2, %v762
          %v764 = vrot.slane %v434, %v763
          %v765 = vlaneseq
          %v766 = vshrl.u32 %v765, 7
          %v767 = vsub.s32 2, %v766
          %v768 = vrot.slane %v435, %v767
          %v769 = vmul.f32 %v747, %v764
          %v770 = vmul.f32 %v745, %v768
          %v771 = vmul.f32 %v748, %v764
          %v772 = vmul.f32 %v746, %v768
          %v773 = vmul.f32 %v759, %v764
          %v774 = vmul.f32 %v757, %v768
          %v775 = vmul.f32 %v760, %v764
          %v776 = vmul.f32 %v758, %v768
          %777 = vset.pattern.permute.xlu0 2
          %778 = vperm.xlu0 %777, %v468
          %v779 = vpop.permute.xlu0 %778
          %781 = vset.pattern.permute.xlu0 2
          %782 = vperm.xlu0 %781, %v469
          %v783 = vpop.permute.xlu0 %782
          %v785 = vmul.f32 %v779, %v769
          %v786 = vmul.f32 %v779, %v770
          %v787 = vmul.f32 %v783, %v771
          %v788 = vmul.f32 %v783, %v772
          %789 = vset.pattern.permute.xlu0 29
          %790 = vperm.xlu0 %789, %v468
          %v791 = vpop.permute.xlu0 %790
          %793 = vset.pattern.permute.xlu0 29
          %794 = vperm.xlu0 %793, %v469
          %v795 = vpop.permute.xlu0 %794
          %v797 = vmul.f32 %v791, %v773
          %v798 = vmul.f32 %v791, %v774
          %v799 = vmul.f32 %v795, %v775
          %v800 = vmul.f32 %v795, %v776
          %v801 = vadd.f32 %v785, %v797
          %v802 = vadd.f32 %v786, %v798
          %v803 = vadd.f32 %v787, %v799
          %v804 = vadd.f32 %v788, %v800
          %v805 = vadd.f32 %v668, %v801
          %v806 = vadd.f32 %v669, %v802
          %v807 = vadd.f32 %v670, %v803
          %v808 = vadd.f32 %v671, %v804
          %809 = vset.pattern.permute.xlu0 11
          %810 = vperm.xlu0 %809, %v468
          %v811 = vpop.permute.xlu0 %810
          %813 = vset.pattern.permute.xlu0 11
          %814 = vperm.xlu0 %813, %v469
          %v815 = vpop.permute.xlu0 %814
          %v817 = vmul.f32 %v811, %v769
          %v818 = vmul.f32 %v811, %v770
          %v819 = vmul.f32 %v815, %v771
          %v820 = vmul.f32 %v815, %v772
          %821 = vset.pattern.permute.xlu0 38
          %822 = vperm.xlu0 %821, %v468
          %v823 = vpop.permute.xlu0 %822
          %825 = vset.pattern.permute.xlu0 38
          %826 = vperm.xlu0 %825, %v469
          %v827 = vpop.permute.xlu0 %826
          %v829 = vmul.f32 %v823, %v773
          %v830 = vmul.f32 %v823, %v774
          %v831 = vmul.f32 %v827, %v775
          %v832 = vmul.f32 %v827, %v776
          %v833 = vadd.f32 %v817, %v829
          %v834 = vadd.f32 %v818, %v830
          %v835 = vadd.f32 %v819, %v831
          %v836 = vadd.f32 %v820, %v832
          %v837 = vadd.f32 %v700, %v833
          %v838 = vadd.f32 %v701, %v834
          %v839 = vadd.f32 %v702, %v835
          %v840 = vadd.f32 %v703, %v836
          %841 = vset.pattern.permute.xlu0 20
          %842 = vperm.xlu0 %841, %v468
          %v843 = vpop.permute.xlu0 %842
          %845 = vset.pattern.permute.xlu0 20
          %846 = vperm.xlu0 %845, %v469
          %v847 = vpop.permute.xlu0 %846
          %v849 = vmul.f32 %v843, %v769
          %v850 = vmul.f32 %v843, %v770
          %v851 = vmul.f32 %v847, %v771
          %v852 = vmul.f32 %v847, %v772
          %853 = vset.pattern.permute.xlu0 47
          %854 = vperm.xlu0 %853, %v468
          %v855 = vpop.permute.xlu0 %854
          %857 = vset.pattern.permute.xlu0 47
          %858 = vperm.xlu0 %857, %v469
          %v859 = vpop.permute.xlu0 %858
          %v861 = vmul.f32 %v855, %v773
          %v862 = vmul.f32 %v855, %v774
          %v863 = vmul.f32 %v859, %v775
          %v864 = vmul.f32 %v859, %v776
          %v865 = vadd.f32 %v849, %v861
          %v866 = vadd.f32 %v850, %v862
          %v867 = vadd.f32 %v851, %v863
          %v868 = vadd.f32 %v852, %v864
          %v869 = vadd.f32 %v732, %v865
          %v870 = vadd.f32 %v733, %v866
          %v871 = vadd.f32 %v734, %v867
          %v872 = vadd.f32 %v735, %v868
          %873 = vrot.lane.b32.xlu0 %v458, 1
          %v874 = vpop.permute.xlu0 %873
          %875 = vrot.lane.b32.xlu0 %v460, 1
          %v876 = vpop.permute.xlu0 %875
          %877 = vrot.lane.b32.xlu0 %v459, 1
          %v878 = vpop.permute.xlu0 %877
          %879 = vrot.lane.b32.xlu0 %v461, 1
          %v880 = vpop.permute.xlu0 %879
          %vm881 = vcmp.lt.s32.totalorder %v479, 1
          %v882 = vsel %vm881, %v874, %v878
          %v883 = vsel %vm881, %v876, %v880
          %v884 = vsel %vm881, %v878, %v874
          %v885 = vsel %vm881, %v880, %v876
          %886 = vrot.lane.b32.xlu0 %v462, 1
          %v887 = vpop.permute.xlu0 %886
          %888 = vrot.lane.b32.xlu0 %v464, 1
          %v889 = vpop.permute.xlu0 %888
          %890 = vrot.lane.b32.xlu0 %v463, 1
          %v891 = vpop.permute.xlu0 %890
          %892 = vrot.lane.b32.xlu0 %v465, 1
          %v893 = vpop.permute.xlu0 %892
          %v894 = vsel %vm881, %v887, %v891
          %v895 = vsel %vm881, %v889, %v893
          %v896 = vsel %vm881, %v891, %v887
          %v897 = vsel %vm881, %v893, %v889
          %v898 = vlaneseq
          %v899 = vshrl.u32 %v898, 7
          %v900 = vsub.s32 3, %v899
          %v901 = vrot.slane %v434, %v900
          %v902 = vlaneseq
          %v903 = vshrl.u32 %v902, 7
          %v904 = vsub.s32 3, %v903
          %v905 = vrot.slane %v435, %v904
          %v906 = vmul.f32 %v884, %v901
          %v907 = vmul.f32 %v882, %v905
          %v908 = vmul.f32 %v885, %v901
          %v909 = vmul.f32 %v883, %v905
          %v910 = vmul.f32 %v896, %v901
          %v911 = vmul.f32 %v894, %v905
          %v912 = vmul.f32 %v897, %v901
          %v913 = vmul.f32 %v895, %v905
          %914 = vset.pattern.permute.xlu0 3
          %915 = vperm.xlu0 %914, %v468
          %v916 = vpop.permute.xlu0 %915
          %918 = vset.pattern.permute.xlu0 3
          %919 = vperm.xlu0 %918, %v469
          %v920 = vpop.permute.xlu0 %919
          %v922 = vmul.f32 %v916, %v906
          %v923 = vmul.f32 %v916, %v907
          %v924 = vmul.f32 %v920, %v908
          %v925 = vmul.f32 %v920, %v909
          %926 = vset.pattern.permute.xlu0 30
          %927 = vperm.xlu0 %926, %v468
          %v928 = vpop.permute.xlu0 %927
          %930 = vset.pattern.permute.xlu0 30
          %931 = vperm.xlu0 %930, %v469
          %v932 = vpop.permute.xlu0 %931
          %v934 = vmul.f32 %v928, %v910
          %v935 = vmul.f32 %v928, %v911
          %v936 = vmul.f32 %v932, %v912
          %v937 = vmul.f32 %v932, %v913
          %v938 = vadd.f32 %v922, %v934
          %v939 = vadd.f32 %v923, %v935
          %v940 = vadd.f32 %v924, %v936
          %v941 = vadd.f32 %v925, %v937
          %v942 = vadd.f32 %v805, %v938
          %v943 = vadd.f32 %v806, %v939
          %v944 = vadd.f32 %v807, %v940
          %v945 = vadd.f32 %v808, %v941
          %946 = vset.pattern.permute.xlu0 12
          %947 = vperm.xlu0 %946, %v468
          %v948 = vpop.permute.xlu0 %947
          %950 = vset.pattern.permute.xlu0 12
          %951 = vperm.xlu0 %950, %v469
          %v952 = vpop.permute.xlu0 %951
          %v954 = vmul.f32 %v948, %v906
          %v955 = vmul.f32 %v948, %v907
          %v956 = vmul.f32 %v952, %v908
          %v957 = vmul.f32 %v952, %v909
          %958 = vset.pattern.permute.xlu0 39
          %959 = vperm.xlu0 %958, %v468
          %v960 = vpop.permute.xlu0 %959
          %962 = vset.pattern.permute.xlu0 39
          %963 = vperm.xlu0 %962, %v469
          %v964 = vpop.permute.xlu0 %963
          %v966 = vmul.f32 %v960, %v910
          %v967 = vmul.f32 %v960, %v911
          %v968 = vmul.f32 %v964, %v912
          %v969 = vmul.f32 %v964, %v913
          %v970 = vadd.f32 %v954, %v966
          %v971 = vadd.f32 %v955, %v967
          %v972 = vadd.f32 %v956, %v968
          %v973 = vadd.f32 %v957, %v969
          %v974 = vadd.f32 %v837, %v970
          %v975 = vadd.f32 %v838, %v971
          %v976 = vadd.f32 %v839, %v972
          %v977 = vadd.f32 %v840, %v973
          %978 = vset.pattern.permute.xlu0 21
          %979 = vperm.xlu0 %978, %v468
          %v980 = vpop.permute.xlu0 %979
          %982 = vset.pattern.permute.xlu0 21
          %983 = vperm.xlu0 %982, %v469
          %v984 = vpop.permute.xlu0 %983
          %v986 = vmul.f32 %v980, %v906
          %v987 = vmul.f32 %v980, %v907
          %v988 = vmul.f32 %v984, %v908
          %v989 = vmul.f32 %v984, %v909
          %990 = vset.pattern.permute.xlu0 48
          %991 = vperm.xlu0 %990, %v468
          %v992 = vpop.permute.xlu0 %991
          %994 = vset.pattern.permute.xlu0 48
          %995 = vperm.xlu0 %994, %v469
          %v996 = vpop.permute.xlu0 %995
          %v998 = vmul.f32 %v992, %v910
          %v999 = vmul.f32 %v992, %v911
          %v1000 = vmul.f32 %v996, %v912
          %v1001 = vmul.f32 %v996, %v913
          %v1002 = vadd.f32 %v986, %v998
          %v1003 = vadd.f32 %v987, %v999
          %v1004 = vadd.f32 %v988, %v1000
          %v1005 = vadd.f32 %v989, %v1001
          %v1006 = vadd.f32 %v869, %v1002
          %v1007 = vadd.f32 %v870, %v1003
          %v1008 = vadd.f32 %v871, %v1004
          %v1009 = vadd.f32 %v872, %v1005
          %1010 = vset.pattern.permute.xlu0 4
          %1011 = vperm.xlu0 %1010, %v468
          %v1012 = vpop.permute.xlu0 %1011
          %1014 = vset.pattern.permute.xlu0 4
          %1015 = vperm.xlu0 %1014, %v469
          %v1016 = vpop.permute.xlu0 %1015
          %v1018 = vmul.f32 %v1012, %v458
          %v1019 = vmul.f32 %v1012, %v459
          %v1020 = vmul.f32 %v1016, %v460
          %v1021 = vmul.f32 %v1016, %v461
          %1022 = vset.pattern.permute.xlu0 31
          %1023 = vperm.xlu0 %1022, %v468
          %v1024 = vpop.permute.xlu0 %1023
          %1026 = vset.pattern.permute.xlu0 31
          %1027 = vperm.xlu0 %1026, %v469
          %v1028 = vpop.permute.xlu0 %1027
          %v1030 = vmul.f32 %v1024, %v462
          %v1031 = vmul.f32 %v1024, %v463
          %v1032 = vmul.f32 %v1028, %v464
          %v1033 = vmul.f32 %v1028, %v465
          %v1034 = vadd.f32 %v1018, %v1030
          %v1035 = vadd.f32 %v1019, %v1031
          %v1036 = vadd.f32 %v1020, %v1032
          %v1037 = vadd.f32 %v1021, %v1033
          %v1038 = vadd.f32 %v942, %v1034
          %v1039 = vadd.f32 %v943, %v1035
          %v1040 = vadd.f32 %v944, %v1036
          %v1041 = vadd.f32 %v945, %v1037
          %1042 = vset.pattern.permute.xlu0 13
          %1043 = vperm.xlu0 %1042, %v468
          %v1044 = vpop.permute.xlu0 %1043
          %1046 = vset.pattern.permute.xlu0 13
          %1047 = vperm.xlu0 %1046, %v469
          %v1048 = vpop.permute.xlu0 %1047
          %v1050 = vmul.f32 %v1044, %v458
          %v1051 = vmul.f32 %v1044, %v459
          %v1052 = vmul.f32 %v1048, %v460
          %v1053 = vmul.f32 %v1048, %v461
          %1054 = vset.pattern.permute.xlu0 40
          %1055 = vperm.xlu0 %1054, %v468
          %v1056 = vpop.permute.xlu0 %1055
          %1058 = vset.pattern.permute.xlu0 40
          %1059 = vperm.xlu0 %1058, %v469
          %v1060 = vpop.permute.xlu0 %1059
          %v1062 = vmul.f32 %v1056, %v462
          %v1063 = vmul.f32 %v1056, %v463
          %v1064 = vmul.f32 %v1060, %v464
          %v1065 = vmul.f32 %v1060, %v465
          %v1066 = vadd.f32 %v1050, %v1062
          %v1067 = vadd.f32 %v1051, %v1063
          %v1068 = vadd.f32 %v1052, %v1064
          %v1069 = vadd.f32 %v1053, %v1065
          %v1070 = vadd.f32 %v974, %v1066
          %v1071 = vadd.f32 %v975, %v1067
          %v1072 = vadd.f32 %v976, %v1068
          %v1073 = vadd.f32 %v977, %v1069
          %1074 = vset.pattern.permute.xlu0 22
          %1075 = vperm.xlu0 %1074, %v468
          %v1076 = vpop.permute.xlu0 %1075
          %1078 = vset.pattern.permute.xlu0 22
          %1079 = vperm.xlu0 %1078, %v469
          %v1080 = vpop.permute.xlu0 %1079
          %v1082 = vmul.f32 %v1076, %v458
          %v1083 = vmul.f32 %v1076, %v459
          %v1084 = vmul.f32 %v1080, %v460
          %v1085 = vmul.f32 %v1080, %v461
          %1086 = vset.pattern.permute.xlu0 49
          %1087 = vperm.xlu0 %1086, %v468
          %v1088 = vpop.permute.xlu0 %1087
          %1090 = vset.pattern.permute.xlu0 49
          %1091 = vperm.xlu0 %1090, %v469
          %v1092 = vpop.permute.xlu0 %1091
          %v1094 = vmul.f32 %v1088, %v462
          %v1095 = vmul.f32 %v1088, %v463
          %v1096 = vmul.f32 %v1092, %v464
          %v1097 = vmul.f32 %v1092, %v465
          %v1098 = vadd.f32 %v1082, %v1094
          %v1099 = vadd.f32 %v1083, %v1095
          %v1100 = vadd.f32 %v1084, %v1096
          %v1101 = vadd.f32 %v1085, %v1097
          %v1102 = vadd.f32 %v1006, %v1098
          %v1103 = vadd.f32 %v1007, %v1099
          %v1104 = vadd.f32 %v1008, %v1100
          %v1105 = vadd.f32 %v1009, %v1101
          %1106 = vrot.lane.b32.xlu0 %v458, 127
          %v1107 = vpop.permute.xlu0 %1106
          %1108 = vrot.lane.b32.xlu0 %v460, 127
          %v1109 = vpop.permute.xlu0 %1108
          %1110 = vrot.lane.b32.xlu0 %v459, 127
          %v1111 = vpop.permute.xlu0 %1110
          %1112 = vrot.lane.b32.xlu0 %v461, 127
          %v1113 = vpop.permute.xlu0 %1112
          %vm1114 = vcmp.lt.s32.totalorder %v479, 127
          %v1115 = vsel %vm1114, %v1107, %v1111
          %v1116 = vsel %vm1114, %v1109, %v1113
          %v1117 = vsel %vm1114, %v1111, %v1107
          %v1118 = vsel %vm1114, %v1113, %v1109
          %1119 = vrot.lane.b32.xlu0 %v462, 127
          %v1120 = vpop.permute.xlu0 %1119
          %1121 = vrot.lane.b32.xlu0 %v464, 127
          %v1122 = vpop.permute.xlu0 %1121
          %1123 = vrot.lane.b32.xlu0 %v463, 127
          %v1124 = vpop.permute.xlu0 %1123
          %1125 = vrot.lane.b32.xlu0 %v465, 127
          %v1126 = vpop.permute.xlu0 %1125
          %v1127 = vsel %vm1114, %v1120, %v1124
          %v1128 = vsel %vm1114, %v1122, %v1126
          %v1129 = vsel %vm1114, %v1124, %v1120
          %v1130 = vsel %vm1114, %v1126, %v1122
          %v1131 = vlaneseq
          %v1132 = vshrl.u32 %v1131, 7
          %v1133 = vsub.s32 5, %v1132
          %v1134 = vrot.slane %v434, %v1133
          %v1135 = vlaneseq
          %v1136 = vshrl.u32 %v1135, 7
          %v1137 = vsub.s32 5, %v1136
          %v1138 = vrot.slane %v435, %v1137
          %v1139 = vmul.f32 %v1115, %v1134
          %v1140 = vmul.f32 %v1117, %v1138
          %v1141 = vmul.f32 %v1116, %v1134
          %v1142 = vmul.f32 %v1118, %v1138
          %v1143 = vmul.f32 %v1127, %v1134
          %v1144 = vmul.f32 %v1129, %v1138
          %v1145 = vmul.f32 %v1128, %v1134
          %v1146 = vmul.f32 %v1130, %v1138
          %1147 = vset.pattern.permute.xlu0 5
          %1148 = vperm.xlu0 %1147, %v468
          %v1149 = vpop.permute.xlu0 %1148
          %1151 = vset.pattern.permute.xlu0 5
          %1152 = vperm.xlu0 %1151, %v469
          %v1153 = vpop.permute.xlu0 %1152
          %v1155 = vmul.f32 %v1149, %v1139
          %v1156 = vmul.f32 %v1149, %v1140
          %v1157 = vmul.f32 %v1153, %v1141
          %v1158 = vmul.f32 %v1153, %v1142
          %1159 = vset.pattern.permute.xlu0 32
          %1160 = vperm.xlu0 %1159, %v468
          %v1161 = vpop.permute.xlu0 %1160
          %1163 = vset.pattern.permute.xlu0 32
          %1164 = vperm.xlu0 %1163, %v469
          %v1165 = vpop.permute.xlu0 %1164
          %v1167 = vmul.f32 %v1161, %v1143
          %v1168 = vmul.f32 %v1161, %v1144
          %v1169 = vmul.f32 %v1165, %v1145
          %v1170 = vmul.f32 %v1165, %v1146
          %v1171 = vadd.f32 %v1155, %v1167
          %v1172 = vadd.f32 %v1156, %v1168
          %v1173 = vadd.f32 %v1157, %v1169
          %v1174 = vadd.f32 %v1158, %v1170
          %v1175 = vadd.f32 %v1038, %v1171
          %v1176 = vadd.f32 %v1039, %v1172
          %v1177 = vadd.f32 %v1040, %v1173
          %v1178 = vadd.f32 %v1041, %v1174
          %1179 = vset.pattern.permute.xlu0 14
          %1180 = vperm.xlu0 %1179, %v468
          %v1181 = vpop.permute.xlu0 %1180
          %1183 = vset.pattern.permute.xlu0 14
          %1184 = vperm.xlu0 %1183, %v469
          %v1185 = vpop.permute.xlu0 %1184
          %v1187 = vmul.f32 %v1181, %v1139
          %v1188 = vmul.f32 %v1181, %v1140
          %v1189 = vmul.f32 %v1185, %v1141
          %v1190 = vmul.f32 %v1185, %v1142
          %1191 = vset.pattern.permute.xlu0 41
          %1192 = vperm.xlu0 %1191, %v468
          %v1193 = vpop.permute.xlu0 %1192
          %1195 = vset.pattern.permute.xlu0 41
          %1196 = vperm.xlu0 %1195, %v469
          %v1197 = vpop.permute.xlu0 %1196
          %v1199 = vmul.f32 %v1193, %v1143
          %v1200 = vmul.f32 %v1193, %v1144
          %v1201 = vmul.f32 %v1197, %v1145
          %v1202 = vmul.f32 %v1197, %v1146
          %v1203 = vadd.f32 %v1187, %v1199
          %v1204 = vadd.f32 %v1188, %v1200
          %v1205 = vadd.f32 %v1189, %v1201
          %v1206 = vadd.f32 %v1190, %v1202
          %v1207 = vadd.f32 %v1070, %v1203
          %v1208 = vadd.f32 %v1071, %v1204
          %v1209 = vadd.f32 %v1072, %v1205
          %v1210 = vadd.f32 %v1073, %v1206
          %1211 = vset.pattern.permute.xlu0 23
          %1212 = vperm.xlu0 %1211, %v468
          %v1213 = vpop.permute.xlu0 %1212
          %1215 = vset.pattern.permute.xlu0 23
          %1216 = vperm.xlu0 %1215, %v469
          %v1217 = vpop.permute.xlu0 %1216
          %v1219 = vmul.f32 %v1213, %v1139
          %v1220 = vmul.f32 %v1213, %v1140
          %v1221 = vmul.f32 %v1217, %v1141
          %v1222 = vmul.f32 %v1217, %v1142
          %1223 = vset.pattern.permute.xlu0 50
          %1224 = vperm.xlu0 %1223, %v468
          %v1225 = vpop.permute.xlu0 %1224
          %1227 = vset.pattern.permute.xlu0 50
          %1228 = vperm.xlu0 %1227, %v469
          %v1229 = vpop.permute.xlu0 %1228
          %v1231 = vmul.f32 %v1225, %v1143
          %v1232 = vmul.f32 %v1225, %v1144
          %v1233 = vmul.f32 %v1229, %v1145
          %v1234 = vmul.f32 %v1229, %v1146
          %v1235 = vadd.f32 %v1219, %v1231
          %v1236 = vadd.f32 %v1220, %v1232
          %v1237 = vadd.f32 %v1221, %v1233
          %v1238 = vadd.f32 %v1222, %v1234
          %v1239 = vadd.f32 %v1102, %v1235
          %v1240 = vadd.f32 %v1103, %v1236
          %v1241 = vadd.f32 %v1104, %v1237
          %v1242 = vadd.f32 %v1105, %v1238
          %1243 = vrot.lane.b32.xlu0 %v458, 113
          %v1244 = vpop.permute.xlu0 %1243
          %1245 = vrot.lane.b32.xlu0 %v460, 113
          %v1246 = vpop.permute.xlu0 %1245
          %1247 = vrot.lane.b32.xlu0 %v459, 113
          %v1248 = vpop.permute.xlu0 %1247
          %1249 = vrot.lane.b32.xlu0 %v461, 113
          %v1250 = vpop.permute.xlu0 %1249
          %vm1251 = vcmp.lt.s32.totalorder %v479, 113
          %v1252 = vsel %vm1251, %v1244, %v1248
          %v1253 = vsel %vm1251, %v1246, %v1250
          %v1254 = vsel %vm1251, %v1248, %v1244
          %v1255 = vsel %vm1251, %v1250, %v1246
          %1256 = vrot.lane.b32.xlu0 %v462, 113
          %v1257 = vpop.permute.xlu0 %1256
          %1258 = vrot.lane.b32.xlu0 %v464, 113
          %v1259 = vpop.permute.xlu0 %1258
          %1260 = vrot.lane.b32.xlu0 %v463, 113
          %v1261 = vpop.permute.xlu0 %1260
          %1262 = vrot.lane.b32.xlu0 %v465, 113
          %v1263 = vpop.permute.xlu0 %1262
          %v1264 = vsel %vm1251, %v1257, %v1261
          %v1265 = vsel %vm1251, %v1259, %v1263
          %v1266 = vsel %vm1251, %v1261, %v1257
          %v1267 = vsel %vm1251, %v1263, %v1259
          %v1268 = vlaneseq
          %v1269 = vshrl.u32 %v1268, 7
          %v1270 = vsub.s32 6, %v1269
          %v1271 = vrot.slane %v434, %v1270
          %v1272 = vlaneseq
          %v1273 = vshrl.u32 %v1272, 7
          %v1274 = vsub.s32 6, %v1273
          %v1275 = vrot.slane %v435, %v1274
          %v1276 = vmul.f32 %v1252, %v1271
          %v1277 = vmul.f32 %v1254, %v1275
          %v1278 = vmul.f32 %v1253, %v1271
          %v1279 = vmul.f32 %v1255, %v1275
          %v1280 = vmul.f32 %v1264, %v1271
          %v1281 = vmul.f32 %v1266, %v1275
          %v1282 = vmul.f32 %v1265, %v1271
          %v1283 = vmul.f32 %v1267, %v1275
          %1284 = vset.pattern.permute.xlu0 6
          %1285 = vperm.xlu0 %1284, %v468
          %v1286 = vpop.permute.xlu0 %1285
          %1288 = vset.pattern.permute.xlu0 6
          %1289 = vperm.xlu0 %1288, %v469
          %v1290 = vpop.permute.xlu0 %1289
          %v1292 = vmul.f32 %v1286, %v1276
          %v1293 = vmul.f32 %v1286, %v1277
          %v1294 = vmul.f32 %v1290, %v1278
          %v1295 = vmul.f32 %v1290, %v1279
          %1296 = vset.pattern.permute.xlu0 33
          %1297 = vperm.xlu0 %1296, %v468
          %v1298 = vpop.permute.xlu0 %1297
          %1300 = vset.pattern.permute.xlu0 33
          %1301 = vperm.xlu0 %1300, %v469
          %v1302 = vpop.permute.xlu0 %1301
          %v1304 = vmul.f32 %v1298, %v1280
          %v1305 = vmul.f32 %v1298, %v1281
          %v1306 = vmul.f32 %v1302, %v1282
          %v1307 = vmul.f32 %v1302, %v1283
          %v1308 = vadd.f32 %v1292, %v1304
          %v1309 = vadd.f32 %v1293, %v1305
          %v1310 = vadd.f32 %v1294, %v1306
          %v1311 = vadd.f32 %v1295, %v1307
          %v1312 = vadd.f32 %v1175, %v1308
          %v1313 = vadd.f32 %v1176, %v1309
          %v1314 = vadd.f32 %v1177, %v1310
          %v1315 = vadd.f32 %v1178, %v1311
          %1316 = vset.pattern.permute.xlu0 15
          %1317 = vperm.xlu0 %1316, %v468
          %v1318 = vpop.permute.xlu0 %1317
          %1320 = vset.pattern.permute.xlu0 15
          %1321 = vperm.xlu0 %1320, %v469
          %v1322 = vpop.permute.xlu0 %1321
          %v1324 = vmul.f32 %v1318, %v1276
          %v1325 = vmul.f32 %v1318, %v1277
          %v1326 = vmul.f32 %v1322, %v1278
          %v1327 = vmul.f32 %v1322, %v1279
          %1328 = vset.pattern.permute.xlu0 42
          %1329 = vperm.xlu0 %1328, %v468
          %v1330 = vpop.permute.xlu0 %1329
          %1332 = vset.pattern.permute.xlu0 42
          %1333 = vperm.xlu0 %1332, %v469
          %v1334 = vpop.permute.xlu0 %1333
          %v1336 = vmul.f32 %v1330, %v1280
          %v1337 = vmul.f32 %v1330, %v1281
          %v1338 = vmul.f32 %v1334, %v1282
          %v1339 = vmul.f32 %v1334, %v1283
          %v1340 = vadd.f32 %v1324, %v1336
          %v1341 = vadd.f32 %v1325, %v1337
          %v1342 = vadd.f32 %v1326, %v1338
          %v1343 = vadd.f32 %v1327, %v1339
          %v1344 = vadd.f32 %v1207, %v1340
          %v1345 = vadd.f32 %v1208, %v1341
          %v1346 = vadd.f32 %v1209, %v1342
          %v1347 = vadd.f32 %v1210, %v1343
          %1348 = vset.pattern.permute.xlu0 24
          %1349 = vperm.xlu0 %1348, %v468
          %v1350 = vpop.permute.xlu0 %1349
          %1352 = vset.pattern.permute.xlu0 24
          %1353 = vperm.xlu0 %1352, %v469
          %v1354 = vpop.permute.xlu0 %1353
          %v1356 = vmul.f32 %v1350, %v1276
          %v1357 = vmul.f32 %v1350, %v1277
          %v1358 = vmul.f32 %v1354, %v1278
          %v1359 = vmul.f32 %v1354, %v1279
          %1360 = vset.pattern.permute.xlu0 51
          %1361 = vperm.xlu0 %1360, %v468
          %v1362 = vpop.permute.xlu0 %1361
          %1364 = vset.pattern.permute.xlu0 51
          %1365 = vperm.xlu0 %1364, %v469
          %v1366 = vpop.permute.xlu0 %1365
          %v1368 = vmul.f32 %v1362, %v1280
          %v1369 = vmul.f32 %v1362, %v1281
          %v1370 = vmul.f32 %v1366, %v1282
          %v1371 = vmul.f32 %v1366, %v1283
          %v1372 = vadd.f32 %v1356, %v1368
          %v1373 = vadd.f32 %v1357, %v1369
          %v1374 = vadd.f32 %v1358, %v1370
          %v1375 = vadd.f32 %v1359, %v1371
          %v1376 = vadd.f32 %v1239, %v1372
          %v1377 = vadd.f32 %v1240, %v1373
          %v1378 = vadd.f32 %v1241, %v1374
          %v1379 = vadd.f32 %v1242, %v1375
          %1380 = vrot.lane.b32.xlu0 %v458, 112
          %v1381 = vpop.permute.xlu0 %1380
          %1382 = vrot.lane.b32.xlu0 %v460, 112
          %v1383 = vpop.permute.xlu0 %1382
          %1384 = vrot.lane.b32.xlu0 %v459, 112
          %v1385 = vpop.permute.xlu0 %1384
          %1386 = vrot.lane.b32.xlu0 %v461, 112
          %v1387 = vpop.permute.xlu0 %1386
          %vm1388 = vcmp.lt.s32.totalorder %v479, 112
          %v1389 = vsel %vm1388, %v1381, %v1385
          %v1390 = vsel %vm1388, %v1383, %v1387
          %v1391 = vsel %vm1388, %v1385, %v1381
          %v1392 = vsel %vm1388, %v1387, %v1383
          %1393 = vrot.lane.b32.xlu0 %v462, 112
          %v1394 = vpop.permute.xlu0 %1393
          %1395 = vrot.lane.b32.xlu0 %v464, 112
          %v1396 = vpop.permute.xlu0 %1395
          %1397 = vrot.lane.b32.xlu0 %v463, 112
          %v1398 = vpop.permute.xlu0 %1397
          %1399 = vrot.lane.b32.xlu0 %v465, 112
          %v1400 = vpop.permute.xlu0 %1399
          %v1401 = vsel %vm1388, %v1394, %v1398
          %v1402 = vsel %vm1388, %v1396, %v1400
          %v1403 = vsel %vm1388, %v1398, %v1394
          %v1404 = vsel %vm1388, %v1400, %v1396
          %v1405 = vlaneseq
          %v1406 = vshrl.u32 %v1405, 7
          %v1407 = vsub.s32 7, %v1406
          %v1408 = vrot.slane %v434, %v1407
          %v1409 = vlaneseq
          %v1410 = vshrl.u32 %v1409, 7
          %v1411 = vsub.s32 7, %v1410
          %v1412 = vrot.slane %v435, %v1411
          %v1413 = vmul.f32 %v1389, %v1408
          %v1414 = vmul.f32 %v1391, %v1412
          %v1415 = vmul.f32 %v1390, %v1408
          %v1416 = vmul.f32 %v1392, %v1412
          %v1417 = vmul.f32 %v1401, %v1408
          %v1418 = vmul.f32 %v1403, %v1412
          %v1419 = vmul.f32 %v1402, %v1408
          %v1420 = vmul.f32 %v1404, %v1412
          %1421 = vset.pattern.permute.xlu0 7
          %1422 = vperm.xlu0 %1421, %v468
          %v1423 = vpop.permute.xlu0 %1422
          %1425 = vset.pattern.permute.xlu0 7
          %1426 = vperm.xlu0 %1425, %v469
          %v1427 = vpop.permute.xlu0 %1426
          %v1429 = vmul.f32 %v1423, %v1413
          %v1430 = vmul.f32 %v1423, %v1414
          %v1431 = vmul.f32 %v1427, %v1415
          %v1432 = vmul.f32 %v1427, %v1416
          %1433 = vset.pattern.permute.xlu0 34
          %1434 = vperm.xlu0 %1433, %v468
          %v1435 = vpop.permute.xlu0 %1434
          %1437 = vset.pattern.permute.xlu0 34
          %1438 = vperm.xlu0 %1437, %v469
          %v1439 = vpop.permute.xlu0 %1438
          %v1441 = vmul.f32 %v1435, %v1417
          %v1442 = vmul.f32 %v1435, %v1418
          %v1443 = vmul.f32 %v1439, %v1419
          %v1444 = vmul.f32 %v1439, %v1420
          %v1445 = vadd.f32 %v1429, %v1441
          %v1446 = vadd.f32 %v1430, %v1442
          %v1447 = vadd.f32 %v1431, %v1443
          %v1448 = vadd.f32 %v1432, %v1444
          %v1449 = vadd.f32 %v1312, %v1445
          %v1450 = vadd.f32 %v1313, %v1446
          %v1451 = vadd.f32 %v1314, %v1447
          %v1452 = vadd.f32 %v1315, %v1448
          %1453 = vset.pattern.permute.xlu0 16
          %1454 = vperm.xlu0 %1453, %v468
          %v1455 = vpop.permute.xlu0 %1454
          %1457 = vset.pattern.permute.xlu0 16
          %1458 = vperm.xlu0 %1457, %v469
          %v1459 = vpop.permute.xlu0 %1458
          %v1461 = vmul.f32 %v1455, %v1413
          %v1462 = vmul.f32 %v1455, %v1414
          %v1463 = vmul.f32 %v1459, %v1415
          %v1464 = vmul.f32 %v1459, %v1416
          %1465 = vset.pattern.permute.xlu0 43
          %1466 = vperm.xlu0 %1465, %v468
          %v1467 = vpop.permute.xlu0 %1466
          %1469 = vset.pattern.permute.xlu0 43
          %1470 = vperm.xlu0 %1469, %v469
          %v1471 = vpop.permute.xlu0 %1470
          %v1473 = vmul.f32 %v1467, %v1417
          %v1474 = vmul.f32 %v1467, %v1418
          %v1475 = vmul.f32 %v1471, %v1419
          %v1476 = vmul.f32 %v1471, %v1420
          %v1477 = vadd.f32 %v1461, %v1473
          %v1478 = vadd.f32 %v1462, %v1474
          %v1479 = vadd.f32 %v1463, %v1475
          %v1480 = vadd.f32 %v1464, %v1476
          %v1481 = vadd.f32 %v1344, %v1477
          %v1482 = vadd.f32 %v1345, %v1478
          %v1483 = vadd.f32 %v1346, %v1479
          %v1484 = vadd.f32 %v1347, %v1480
          %1485 = vset.pattern.permute.xlu0 25
          %1486 = vperm.xlu0 %1485, %v468
          %v1487 = vpop.permute.xlu0 %1486
          %1489 = vset.pattern.permute.xlu0 25
          %1490 = vperm.xlu0 %1489, %v469
          %v1491 = vpop.permute.xlu0 %1490
          %v1493 = vmul.f32 %v1487, %v1413
          %v1494 = vmul.f32 %v1487, %v1414
          %v1495 = vmul.f32 %v1491, %v1415
          %v1496 = vmul.f32 %v1491, %v1416
          %1497 = vset.pattern.permute.xlu0 52
          %1498 = vperm.xlu0 %1497, %v468
          %v1499 = vpop.permute.xlu0 %1498
          %1501 = vset.pattern.permute.xlu0 52
          %1502 = vperm.xlu0 %1501, %v469
          %v1503 = vpop.permute.xlu0 %1502
          %v1505 = vmul.f32 %v1499, %v1417
          %v1506 = vmul.f32 %v1499, %v1418
          %v1507 = vmul.f32 %v1503, %v1419
          %v1508 = vmul.f32 %v1503, %v1420
          %v1509 = vadd.f32 %v1493, %v1505
          %v1510 = vadd.f32 %v1494, %v1506
          %v1511 = vadd.f32 %v1495, %v1507
          %v1512 = vadd.f32 %v1496, %v1508
          %v1513 = vadd.f32 %v1376, %v1509
          %v1514 = vadd.f32 %v1377, %v1510
          %v1515 = vadd.f32 %v1378, %v1511
          %v1516 = vadd.f32 %v1379, %v1512
          %1517 = vrot.lane.b32.xlu0 %v458, 111
          %v1518 = vpop.permute.xlu0 %1517
          %1519 = vrot.lane.b32.xlu0 %v460, 111
          %v1520 = vpop.permute.xlu0 %1519
          %1521 = vrot.lane.b32.xlu0 %v459, 111
          %v1522 = vpop.permute.xlu0 %1521
          %1523 = vrot.lane.b32.xlu0 %v461, 111
          %v1524 = vpop.permute.xlu0 %1523
          %vm1525 = vcmp.lt.s32.totalorder %v479, 111
          %v1526 = vsel %vm1525, %v1518, %v1522
          %v1527 = vsel %vm1525, %v1520, %v1524
          %v1528 = vsel %vm1525, %v1522, %v1518
          %v1529 = vsel %vm1525, %v1524, %v1520
          %1530 = vrot.lane.b32.xlu0 %v462, 111
          %v1531 = vpop.permute.xlu0 %1530
          %1532 = vrot.lane.b32.xlu0 %v464, 111
          %v1533 = vpop.permute.xlu0 %1532
          %1534 = vrot.lane.b32.xlu0 %v463, 111
          %v1535 = vpop.permute.xlu0 %1534
          %1536 = vrot.lane.b32.xlu0 %v465, 111
          %v1537 = vpop.permute.xlu0 %1536
          %v1538 = vsel %vm1525, %v1531, %v1535
          %v1539 = vsel %vm1525, %v1533, %v1537
          %v1540 = vsel %vm1525, %v1535, %v1531
          %v1541 = vsel %vm1525, %v1537, %v1533
          %v1542 = vlaneseq
          %v1543 = vshrl.u32 %v1542, 7
          %v1544 = vsub.s32 0, %v1543
          %v1545 = vrot.slane %v436, %v1544
          %v1546 = vlaneseq
          %v1547 = vshrl.u32 %v1546, 7
          %v1548 = vsub.s32 0, %v1547
          %v1549 = vrot.slane %v437, %v1548
          %v1550 = vmul.f32 %v1526, %v1545
          %v1551 = vmul.f32 %v1528, %v1549
          %v1552 = vmul.f32 %v1527, %v1545
          %v1553 = vmul.f32 %v1529, %v1549
          %v1554 = vmul.f32 %v1538, %v1545
          %v1555 = vmul.f32 %v1540, %v1549
          %v1556 = vmul.f32 %v1539, %v1545
          %v1557 = vmul.f32 %v1541, %v1549
          %1558 = vset.pattern.permute.xlu0 8
          %1559 = vperm.xlu0 %1558, %v468
          %v1560 = vpop.permute.xlu0 %1559
          %1562 = vset.pattern.permute.xlu0 8
          %1563 = vperm.xlu0 %1562, %v469
          %v1564 = vpop.permute.xlu0 %1563
          %v1566 = vmul.f32 %v1560, %v1550
          %v1567 = vmul.f32 %v1560, %v1551
          %v1568 = vmul.f32 %v1564, %v1552
          %v1569 = vmul.f32 %v1564, %v1553
          %1570 = vset.pattern.permute.xlu0 35
          %1571 = vperm.xlu0 %1570, %v468
          %v1572 = vpop.permute.xlu0 %1571
          %1574 = vset.pattern.permute.xlu0 35
          %1575 = vperm.xlu0 %1574, %v469
          %v1576 = vpop.permute.xlu0 %1575
          %v1578 = vmul.f32 %v1572, %v1554
          %v1579 = vmul.f32 %v1572, %v1555
          %v1580 = vmul.f32 %v1576, %v1556
          %v1581 = vmul.f32 %v1576, %v1557
          %v1582 = vadd.f32 %v1566, %v1578
          %v1583 = vadd.f32 %v1567, %v1579
          %v1584 = vadd.f32 %v1568, %v1580
          %v1585 = vadd.f32 %v1569, %v1581
          %v1586 = vadd.f32 %v1449, %v1582
          %v1587 = vadd.f32 %v1450, %v1583
          %v1588 = vadd.f32 %v1451, %v1584
          %v1589 = vadd.f32 %v1452, %v1585
          %1590 = vset.pattern.permute.xlu0 17
          %1591 = vperm.xlu0 %1590, %v468
          %v1592 = vpop.permute.xlu0 %1591
          %1594 = vset.pattern.permute.xlu0 17
          %1595 = vperm.xlu0 %1594, %v469
          %v1596 = vpop.permute.xlu0 %1595
          %v1598 = vmul.f32 %v1592, %v1550
          %v1599 = vmul.f32 %v1592, %v1551
          %v1600 = vmul.f32 %v1596, %v1552
          %v1601 = vmul.f32 %v1596, %v1553
          %1602 = vset.pattern.permute.xlu0 44
          %1603 = vperm.xlu0 %1602, %v468
          %v1604 = vpop.permute.xlu0 %1603
          %1606 = vset.pattern.permute.xlu0 44
          %1607 = vperm.xlu0 %1606, %v469
          %v1608 = vpop.permute.xlu0 %1607
          %v1610 = vmul.f32 %v1604, %v1554
          %v1611 = vmul.f32 %v1604, %v1555
          %v1612 = vmul.f32 %v1608, %v1556
          %v1613 = vmul.f32 %v1608, %v1557
          %v1614 = vadd.f32 %v1598, %v1610
          %v1615 = vadd.f32 %v1599, %v1611
          %v1616 = vadd.f32 %v1600, %v1612
          %v1617 = vadd.f32 %v1601, %v1613
          %v1618 = vadd.f32 %v1481, %v1614
          %v1619 = vadd.f32 %v1482, %v1615
          %v1620 = vadd.f32 %v1483, %v1616
          %v1621 = vadd.f32 %v1484, %v1617
          %1622 = vset.pattern.permute.xlu0 26
          %1623 = vperm.xlu0 %1622, %v468
          %v1624 = vpop.permute.xlu0 %1623
          %1626 = vset.pattern.permute.xlu0 26
          %1627 = vperm.xlu0 %1626, %v469
          %v1628 = vpop.permute.xlu0 %1627
          %v1630 = vmul.f32 %v1624, %v1550
          %v1631 = vmul.f32 %v1624, %v1551
          %v1632 = vmul.f32 %v1628, %v1552
          %v1633 = vmul.f32 %v1628, %v1553
          %1634 = vset.pattern.permute.xlu0 53
          %1635 = vperm.xlu0 %1634, %v468
          %v1636 = vpop.permute.xlu0 %1635
          %1638 = vset.pattern.permute.xlu0 53
          %1639 = vperm.xlu0 %1638, %v469
          %v1640 = vpop.permute.xlu0 %1639
          %v1642 = vmul.f32 %v1636, %v1554
          %v1643 = vmul.f32 %v1636, %v1555
          %v1644 = vmul.f32 %v1640, %v1556
          %v1645 = vmul.f32 %v1640, %v1557
          %v1646 = vadd.f32 %v1630, %v1642
          %v1647 = vadd.f32 %v1631, %v1643
          %v1648 = vadd.f32 %v1632, %v1644
          %v1649 = vadd.f32 %v1633, %v1645
          %v1650 = vadd.f32 %v1513, %v1646
          %v1651 = vadd.f32 %v1514, %v1647
          %v1652 = vadd.f32 %v1515, %v1648
          %v1653 = vadd.f32 %v1516, %v1649
          %vm1654 = vcmask 392192
          %v1656 = vsel %vm1654, %v438, 0
          %v1659 = vsel %vm1654, %v439, 0
          %v1662 = vsel %vm1654, %v440, 0
          %v1665 = vsel %vm1654, %v441, 0
          %v1668 = vsel %vm1654, %v442, 0
          %v1671 = vsel %vm1654, %v443, 0
          %1673 = vmatprep.subr.mxu0 0.0
          %1674 = vmatpush1.msra.mxu0 0.0
          %1675 = vmatprep.subr.mxu0 0.0
          %1676 = vmatpush1.msra.mxu0 0.0
          %1677 = vmatprep.subr.mxu0 0.0
          %1678 = vmatpush1.msra.mxu0 0.0
          %1679 = vmatprep.subr.mxu0 0.0
          %1680 = vmatpush1.msra.mxu0 0.0
          %1681 = vmatprep.subr.mxu0 0.0
          %1682 = vmatpush1.msra.mxu0 0.0
          %1683 = vmatprep.subr.mxu0 0.0
          %1684 = vmatpush1.msra.mxu0 0.0
          %1685 = vmatprep.subr.mxu0 0.0
          %1686 = vmatpush1.msra.mxu0 0.0
          %1687 = vmatprep.subr.mxu0 0.0
          %1688 = vmatpush1.msra.mxu0 0.0
          %1689 = vmatprep.subr.mxu0 0.0
          %1690 = vmatpush1.msra.mxu0 0.0
          %1691 = vmatprep.subr.mxu0 0.0
          %1692 = vmatpush1.msra.mxu0 0.0
          %1693 = vmatprep.subr.mxu0 %v1653
          %1694 = vmatpush1.msra.mxu0 %v1652
          %1695 = vmatprep.subr.mxu0 %v1651
          %1696 = vmatpush1.msra.mxu0 %v1650
          %1697 = vmatprep.subr.mxu0 %v1621
          %1698 = vmatpush1.msra.mxu0 %v1620
          %1699 = vmatprep.subr.mxu0 %v1619
          %1700 = vmatpush1.msra.mxu0 %v1618
          %1701 = vmatprep.subr.mxu0 %v1589
          %1702 = vmatpush1.msra.mxu0 %v1588
          %1703 = vmatprep.subr.mxu0 %v1587
          %1704 = vmatpush1.msra.mxu0 %v1586
          %1705 = vmatprep.subr.mxu0 0.0
          %1706 = vmatpush2.msra.mxu0 0.0
          %1707 = vmatprep.subr.mxu0 0.0
          %1708 = vmatpush2.msra.mxu0 0.0
          %1709 = vmatprep.subr.mxu0 0.0
          %1710 = vmatpush2.msra.mxu0 0.0
          %1711 = vmatprep.subr.mxu0 0.0
          %1712 = vmatpush2.msra.mxu0 0.0
          %1713 = vmatprep.subr.mxu0 0.0
          %1714 = vmatpush2.msra.mxu0 0.0
          %1715 = vmatprep.subr.mxu0 0.0
          %1716 = vmatpush2.msra.mxu0 0.0
          %1717 = vmatprep.subr.mxu0 0.0
          %1718 = vmatpush2.msra.mxu0 0.0
          %1719 = vmatprep.subr.mxu0 0.0
          %1720 = vmatpush2.msra.mxu0 0.0
          %1721 = vmatprep.subr.mxu0 0.0
          %1722 = vmatpush2.msra.mxu0 0.0
          %1723 = vmatprep.subr.mxu0 0.0
          %1724 = vmatpush2.msra.mxu0 0.0
          %1725 = vmatprep.subr.mxu0 0.0
          %1726 = vmatpush2.msra.mxu0 0.0
          %1727 = vmatprep.subr.mxu0 0.0
          %1728 = vmatpush2.msra.mxu0 0.0
          %1729 = vmatprep.subr.mxu0 0.0
          %1730 = vmatpush2.msra.mxu0 0.0
          %1731 = vmatprep.subr.mxu0 0.0
          %1732 = vmatpush2.msra.mxu0 0.0
          %1733 = vmatprep.subr.mxu0 0.0
          %1734 = vmatpush2.msra.mxu0 0.0
          %1735 = vmatprep.subr.mxu0 0.0
          %1736 = vmatpush2.msra.mxu0 0.0
          %1737 = vmatprep.mubr.f32.mxu0 0.0
          %1738 = vmatmul.mubr.f32.gmra.mxu0 %v1656
          %v1739 = vpop.f32.mrf.mxu0
          %v1740 = vadd.f32 0.0, %v1739
          %v1741 = vpop.f32.mrf.mxu0
          %v1742 = vadd.f32 0.0, %v1741
          %1743 = vmatprep.mubr.f32.mxu0 0.0
          %1744 = vmatmul.mubr.f32.gmra.mxu0 %v1659
          %v1745 = vpop.f32.mrf.mxu0
          %v1746 = vadd.f32 0.0, %v1745
          %v1747 = vpop.f32.mrf.mxu0
          %v1748 = vadd.f32 0.0, %v1747
          %1749 = vmatprep.mubr.f32.mxu0 0.0
          %1750 = vmatmul.mubr.f32.gmra.mxu0 %v1662
          %v1751 = vpop.f32.mrf.mxu0
          %v1752 = vadd.f32 0.0, %v1751
          %v1753 = vpop.f32.mrf.mxu0
          %v1754 = vadd.f32 0.0, %v1753
          %1755 = vmatprep.mubr.f32.mxu0 0.0
          %1756 = vmatmul.mubr.f32.gmra.mxu0 %v1665
          %v1757 = vpop.f32.mrf.mxu0
          %v1758 = vadd.f32 0.0, %v1757
          %v1759 = vpop.f32.mrf.mxu0
          %v1760 = vadd.f32 0.0, %v1759
          %1761 = vmatprep.mubr.f32.mxu0 0.0
          %1762 = vmatmul.mubr.f32.gmra.mxu0 %v1668
          %v1763 = vpop.f32.mrf.mxu0
          %v1764 = vadd.f32 0.0, %v1763
          %v1765 = vpop.f32.mrf.mxu0
          %v1766 = vadd.f32 0.0, %v1765
          %1767 = vmatprep.mubr.f32.mxu0 0.0
          %1768 = vmatmul.mubr.f32.gmra.mxu0 %v1671
          %v1769 = vpop.f32.mrf.mxu0
          %v1770 = vadd.f32 0.0, %v1769
          %v1771 = vpop.f32.mrf.mxu0
          %v1772 = vadd.f32 0.0, %v1771
          %1773 = vdwg.mxu0
          %v1774 = vmul.f32 %v1740, %v1740
          %v1775 = vmul.f32 %v1742, %v1742
          %v1776 = vmul.f32 %v1746, %v1746
          %v1777 = vmul.f32 %v1748, %v1748
          %v1778 = vadd.f32 %v1774, %v1775
          %1779 = vadd.xlane.f32.xlu0 %v1778
          %v1780 = vpop.xlane.xlu0 %1779
          %v1781 = vadd.f32 %v1776, %v1777
          %1782 = vadd.xlane.f32.xlu0 %v1781
          %v1783 = vpop.xlane.xlu0 %1782
          %v1784 = vmax.f32 %v1780, 1e-24
          %v1785 = vmax.f32 %v1783, 1e-24
          %v1786 = vrsqrt.pop %v1784
          %v1787 = vrsqrt.pop %v1785
          %v1788 = vmul.f32 %v1740, %v1786
          %v1789 = vmul.f32 %v1742, %v1786
          %v1790 = vmul.f32 %v1746, %v1787
          %v1791 = vmul.f32 %v1748, %v1787
          %v1792 = vmul.f32 %v1752, %v1752
          %v1793 = vmul.f32 %v1754, %v1754
          %v1794 = vmul.f32 %v1758, %v1758
          %v1795 = vmul.f32 %v1760, %v1760
          %v1796 = vadd.f32 %v1792, %v1793
          %1797 = vadd.xlane.f32.xlu0 %v1796
          %v1798 = vpop.xlane.xlu0 %1797
          %v1799 = vadd.f32 %v1794, %v1795
          %1800 = vadd.xlane.f32.xlu0 %v1799
          %v1801 = vpop.xlane.xlu0 %1800
          %v1802 = vmax.f32 %v1798, 1e-24
          %v1803 = vmax.f32 %v1801, 1e-24
          %v1804 = vrsqrt.pop %v1802
          %v1805 = vrsqrt.pop %v1803
          %v1806 = vmul.f32 %v1752, %v1804
          %v1807 = vmul.f32 %v1754, %v1804
          %v1808 = vmul.f32 %v1758, %v1805
          %v1809 = vmul.f32 %v1760, %v1805
          %1810 = vmatprep.subr.mxu0 0.0
          %1811 = vmatpush1.xpose.msra.mxu0 0.0
          %1812 = vmatprep.subr.mxu0 0.0
          %1813 = vmatpush1.xpose.msra.mxu0 0.0
          %1814 = vmatprep.subr.mxu0 0.0
          %1815 = vmatpush1.xpose.msra.mxu0 0.0
          %1816 = vmatprep.subr.mxu0 0.0
          %1817 = vmatpush1.xpose.msra.mxu0 0.0
          %1818 = vmatprep.subr.mxu0 0.0
          %1819 = vmatpush1.xpose.msra.mxu0 0.0
          %1820 = vmatprep.subr.mxu0 0.0
          %1821 = vmatpush1.xpose.msra.mxu0 0.0
          %1822 = vmatprep.subr.mxu0 0.0
          %1823 = vmatpush1.xpose.msra.mxu0 0.0
          %1824 = vmatprep.subr.mxu0 0.0
          %1825 = vmatpush1.xpose.msra.mxu0 0.0
          %1826 = vmatprep.subr.mxu0 0.0
          %1827 = vmatpush1.xpose.msra.mxu0 0.0
          %1828 = vmatprep.subr.mxu0 0.0
          %1829 = vmatpush1.xpose.msra.mxu0 0.0
          %1830 = vmatprep.subr.mxu0 0.0
          %1831 = vmatpush1.xpose.msra.mxu0 0.0
          %1832 = vmatprep.subr.mxu0 0.0
          %1833 = vmatpush1.xpose.msra.mxu0 0.0
          %1834 = vmatprep.subr.mxu0 0.0
          %1835 = vmatpush1.xpose.msra.mxu0 0.0
          %1836 = vmatprep.subr.mxu0 0.0
          %1837 = vmatpush1.xpose.msra.mxu0 0.0
          %1838 = vmatprep.subr.mxu0 %v1809
          %1839 = vmatpush1.xpose.msra.mxu0 %v1808
          %1840 = vmatprep.subr.mxu0 %v1807
          %1841 = vmatpush1.xpose.msra.mxu0 %v1806
          %1842 = vmatprep.subr.mxu0 0.0
          %1843 = vmatpush2.xpose.msra.mxu0 0.0
          %1844 = vmatprep.subr.mxu0 0.0
          %1845 = vmatpush2.xpose.msra.mxu0 0.0
          %1846 = vmatprep.subr.mxu0 0.0
          %1847 = vmatpush2.xpose.msra.mxu0 0.0
          %1848 = vmatprep.subr.mxu0 0.0
          %1849 = vmatpush2.xpose.msra.mxu0 0.0
          %1850 = vmatprep.subr.mxu0 0.0
          %1851 = vmatpush2.xpose.msra.mxu0 0.0
          %1852 = vmatprep.subr.mxu0 0.0
          %1853 = vmatpush2.xpose.msra.mxu0 0.0
          %1854 = vmatprep.subr.mxu0 0.0
          %1855 = vmatpush2.xpose.msra.mxu0 0.0
          %1856 = vmatprep.subr.mxu0 0.0
          %1857 = vmatpush2.xpose.msra.mxu0 0.0
          %1858 = vmatprep.subr.mxu0 0.0
          %1859 = vmatpush2.xpose.msra.mxu0 0.0
          %1860 = vmatprep.subr.mxu0 0.0
          %1861 = vmatpush2.xpose.msra.mxu0 0.0
          %1862 = vmatprep.subr.mxu0 0.0
          %1863 = vmatpush2.xpose.msra.mxu0 0.0
          %1864 = vmatprep.subr.mxu0 0.0
          %1865 = vmatpush2.xpose.msra.mxu0 0.0
          %1866 = vmatprep.subr.mxu0 0.0
          %1867 = vmatpush2.xpose.msra.mxu0 0.0
          %1868 = vmatprep.subr.mxu0 0.0
          %1869 = vmatpush2.xpose.msra.mxu0 0.0
          %1870 = vmatprep.subr.mxu0 0.0
          %1871 = vmatpush2.xpose.msra.mxu0 0.0
          %1872 = vmatprep.subr.mxu0 0.0
          %1873 = vmatpush2.xpose.msra.mxu0 0.0
          %1874 = vmatprep.mubr.f32.mxu0 %v1789
          %1875 = vmatmul.mubr.f32.gmra.mxu0 %v1788
          %v1876 = vpop.f32.mrf.mxu0
          %v1877 = vadd.f32 0.0, %v1876
          %v1878 = vpop.f32.mrf.mxu0
          %1879 = vmatprep.mubr.f32.mxu0 %v1791
          %1880 = vmatmul.mubr.f32.gmra.mxu0 %v1790
          %v1881 = vpop.f32.mrf.mxu0
          %v1882 = vadd.f32 0.0, %v1881
          %v1883 = vpop.f32.mrf.mxu0
          %1884 = vdwg.mxu0
          %s1885 = sld [smem:[#allocation2 + %s453]]
          %v1886 = vstv %s1885
          %v1887 = vmul.f32 %v1877, %v1886
          %v1888 = vmul.f32 %v1882, %v1886
          %vm1889 = vcmask 130048
          %v1890 = vsel %vm1889, %v1887, -inf
          %1891 = vmax.xlane.f32.xlu0 %v1890
          %v1892 = vpop.xlane.xlu0 %1891
          %v1893 = vsel %vm1889, %v1888, -inf
          %1894 = vmax.xlane.f32.xlu0 %v1893
          %v1895 = vpop.xlane.xlu0 %1894
          %v1896 = vsub.f32 %v1887, %v1892
          %v1897 = vsub.f32 %v1888, %v1895
          %v1898 = vmul.f32 %v1896, 1.442695
          %v1899 = vpow.pop %v1898
          %v1900 = vmul.f32 %v1897, 1.442695
          %v1901 = vpow.pop %v1900
          %v1902 = vsel %vm1889, %v1899, 0.0
          %1903 = vadd.xlane.f32.xlu0 %v1902
          %v1904 = vpop.xlane.xlu0 %1903
          %v1905 = vsel %vm1889, %v1901, 0.0
          %1906 = vadd.xlane.f32.xlu0 %v1905
          %v1907 = vpop.xlane.xlu0 %1906
          %v1908 = vrcp.pop %v1904
          %v1909 = vmul.f32 1.0, %v1908
          %v1910 = vrcp.pop %v1907
          %v1911 = vmul.f32 1.0, %v1910
          %v1912 = vmul.f32 %v1899, %v1909
          %v1913 = vmul.f32 %v1901, %v1911
          %v1915 = vsel %vm1889, %v1912, 0
          %v1918 = vsel %vm1889, %v1913, 0
          %1920 = vmatprep.subr.mxu0 0.0
          %1921 = vmatpush1.msra.mxu0 0.0
          %1922 = vmatprep.subr.mxu0 0.0
          %1923 = vmatpush1.msra.mxu0 0.0
          %1924 = vmatprep.subr.mxu0 0.0
          %1925 = vmatpush1.msra.mxu0 0.0
          %1926 = vmatprep.subr.mxu0 0.0
          %1927 = vmatpush1.msra.mxu0 0.0
          %1928 = vmatprep.subr.mxu0 0.0
          %1929 = vmatpush1.msra.mxu0 0.0
          %1930 = vmatprep.subr.mxu0 0.0
          %1931 = vmatpush1.msra.mxu0 0.0
          %1932 = vmatprep.subr.mxu0 0.0
          %1933 = vmatpush1.msra.mxu0 0.0
          %1934 = vmatprep.subr.mxu0 0.0
          %1935 = vmatpush1.msra.mxu0 0.0
          %1936 = vmatprep.subr.mxu0 0.0
          %1937 = vmatpush1.msra.mxu0 0.0
          %1938 = vmatprep.subr.mxu0 0.0
          %1939 = vmatpush1.msra.mxu0 0.0
          %1940 = vmatprep.subr.mxu0 0.0
          %1941 = vmatpush1.msra.mxu0 0.0
          %1942 = vmatprep.subr.mxu0 0.0
          %1943 = vmatpush1.msra.mxu0 0.0
          %1944 = vmatprep.subr.mxu0 0.0
          %1945 = vmatpush1.msra.mxu0 0.0
          %1946 = vmatprep.subr.mxu0 0.0
          %1947 = vmatpush1.msra.mxu0 0.0
          %1948 = vmatprep.subr.mxu0 %v1772
          %1949 = vmatpush1.msra.mxu0 %v1770
          %1950 = vmatprep.subr.mxu0 %v1766
          %1951 = vmatpush1.msra.mxu0 %v1764
          %1952 = vmatprep.subr.mxu0 0.0
          %1953 = vmatpush2.msra.mxu0 0.0
          %1954 = vmatprep.subr.mxu0 0.0
          %1955 = vmatpush2.msra.mxu0 0.0
          %1956 = vmatprep.subr.mxu0 0.0
          %1957 = vmatpush2.msra.mxu0 0.0
          %1958 = vmatprep.subr.mxu0 0.0
          %1959 = vmatpush2.msra.mxu0 0.0
          %1960 = vmatprep.subr.mxu0 0.0
          %1961 = vmatpush2.msra.mxu0 0.0
          %1962 = vmatprep.subr.mxu0 0.0
          %1963 = vmatpush2.msra.mxu0 0.0
          %1964 = vmatprep.subr.mxu0 0.0
          %1965 = vmatpush2.msra.mxu0 0.0
          %1966 = vmatprep.subr.mxu0 0.0
          %1967 = vmatpush2.msra.mxu0 0.0
          %1968 = vmatprep.subr.mxu0 0.0
          %1969 = vmatpush2.msra.mxu0 0.0
          %1970 = vmatprep.subr.mxu0 0.0
          %1971 = vmatpush2.msra.mxu0 0.0
          %1972 = vmatprep.subr.mxu0 0.0
          %1973 = vmatpush2.msra.mxu0 0.0
          %1974 = vmatprep.subr.mxu0 0.0
          %1975 = vmatpush2.msra.mxu0 0.0
          %1976 = vmatprep.subr.mxu0 0.0
          %1977 = vmatpush2.msra.mxu0 0.0
          %1978 = vmatprep.subr.mxu0 0.0
          %1979 = vmatpush2.msra.mxu0 0.0
          %1980 = vmatprep.subr.mxu0 0.0
          %1981 = vmatpush2.msra.mxu0 0.0
          %1982 = vmatprep.subr.mxu0 0.0
          %1983 = vmatpush2.msra.mxu0 0.0
          %1984 = vmatprep.mubr.f32.mxu0 0.0
          %1985 = vmatmul.mubr.f32.gmra.mxu0 %v1915
          %v1986 = vpop.f32.mrf.mxu0
          %v1987 = vadd.f32 0.0, %v1986
          %v1988 = vpop.f32.mrf.mxu0
          %v1989 = vadd.f32 0.0, %v1988
          %1990 = vmatprep.mubr.f32.mxu0 0.0
          %1991 = vmatmul.mubr.f32.gmra.mxu0 %v1918
          %v1992 = vpop.f32.mrf.mxu0
          %v1993 = vadd.f32 0.0, %v1992
          %v1994 = vpop.f32.mrf.mxu0
          %v1995 = vadd.f32 0.0, %v1994
          %1996 = vdwg.mxu0
          %s1997 = scalar_lea.vmem %s6, %s466
          %v1998 = vld [vmem:[%s1997] sm:$0xff]
          %v1999 = vld [vmem:[%s1997 + $0x8] sm:$0xff]
          %v2001 = vsel %vm1889, %v1998, 0
          %v2004 = vsel %vm1889, %v1999, 0
          %2006 = vmatprep.subr.mxu0 0.0
          %2007 = vmatpush1.msra.mxu0 0.0
          %2008 = vmatprep.subr.mxu0 0.0
          %2009 = vmatpush1.msra.mxu0 0.0
          %2010 = vmatprep.subr.mxu0 0.0
          %2011 = vmatpush1.msra.mxu0 0.0
          %2012 = vmatprep.subr.mxu0 0.0
          %2013 = vmatpush1.msra.mxu0 0.0
          %2014 = vmatprep.subr.mxu0 0.0
          %2015 = vmatpush1.msra.mxu0 0.0
          %2016 = vmatprep.subr.mxu0 0.0
          %2017 = vmatpush1.msra.mxu0 0.0
          %2018 = vmatprep.subr.mxu0 0.0
          %2019 = vmatpush1.msra.mxu0 0.0
          %2020 = vmatprep.subr.mxu0 0.0
          %2021 = vmatpush1.msra.mxu0 0.0
          %2022 = vmatprep.subr.mxu0 0.0
          %2023 = vmatpush1.msra.mxu0 0.0
          %2024 = vmatprep.subr.mxu0 0.0
          %2025 = vmatpush1.msra.mxu0 0.0
          %2026 = vmatprep.subr.mxu0 0.0
          %2027 = vmatpush1.msra.mxu0 0.0
          %2028 = vmatprep.subr.mxu0 0.0
          %2029 = vmatpush1.msra.mxu0 0.0
          %2030 = vmatprep.subr.mxu0 0.0
          %2031 = vmatpush1.msra.mxu0 0.0
          %2032 = vmatprep.subr.mxu0 0.0
          %2033 = vmatpush1.msra.mxu0 0.0
          %2034 = vmatprep.subr.mxu0 %v1995
          %2035 = vmatpush1.msra.mxu0 %v1993
          %2036 = vmatprep.subr.mxu0 %v1989
          %2037 = vmatpush1.msra.mxu0 %v1987
          %2038 = vmatprep.subr.mxu0 0.0
          %2039 = vmatpush2.msra.mxu0 0.0
          %2040 = vmatprep.subr.mxu0 0.0
          %2041 = vmatpush2.msra.mxu0 0.0
          %2042 = vmatprep.subr.mxu0 0.0
          %2043 = vmatpush2.msra.mxu0 0.0
          %2044 = vmatprep.subr.mxu0 0.0
          %2045 = vmatpush2.msra.mxu0 0.0
          %2046 = vmatprep.subr.mxu0 0.0
          %2047 = vmatpush2.msra.mxu0 0.0
          %2048 = vmatprep.subr.mxu0 0.0
          %2049 = vmatpush2.msra.mxu0 0.0
          %2050 = vmatprep.subr.mxu0 0.0
          %2051 = vmatpush2.msra.mxu0 0.0
          %2052 = vmatprep.subr.mxu0 0.0
          %2053 = vmatpush2.msra.mxu0 0.0
          %2054 = vmatprep.subr.mxu0 0.0
          %2055 = vmatpush2.msra.mxu0 0.0
          %2056 = vmatprep.subr.mxu0 0.0
          %2057 = vmatpush2.msra.mxu0 0.0
          %2058 = vmatprep.subr.mxu0 0.0
          %2059 = vmatpush2.msra.mxu0 0.0
          %2060 = vmatprep.subr.mxu0 0.0
          %2061 = vmatpush2.msra.mxu0 0.0
          %2062 = vmatprep.subr.mxu0 0.0
          %2063 = vmatpush2.msra.mxu0 0.0
          %2064 = vmatprep.subr.mxu0 0.0
          %2065 = vmatpush2.msra.mxu0 0.0
          %2066 = vmatprep.subr.mxu0 0.0
          %2067 = vmatpush2.msra.mxu0 0.0
          %2068 = vmatprep.subr.mxu0 0.0
          %2069 = vmatpush2.msra.mxu0 0.0
          %2070 = vmatprep.mubr.f32.mxu0 0.0
          %2071 = vmatmul.mubr.f32.gmra.mxu0 %v2001
          %v2072 = vpop.f32.mrf.mxu0
          %v2073 = vadd.f32 0.0, %v2072
          %v2074 = vpop.f32.mrf.mxu0
          %v2075 = vadd.f32 0.0, %v2074
          %2076 = vmatprep.mubr.f32.mxu0 0.0
          %2077 = vmatmul.mubr.f32.gmra.mxu0 %v2004
          %v2078 = vpop.f32.mrf.mxu0
          %v2079 = vadd.f32 0.0, %v2078
          %v2080 = vpop.f32.mrf.mxu0
          %v2081 = vadd.f32 0.0, %v2080
          %2082 = vdwg.mxu0
          %v2083 = vadd.f32 %v458, %v2073
          %v2084 = vadd.f32 %v459, %v2075
          %v2085 = vadd.f32 %v460, %v2079
          %v2086 = vadd.f32 %v461, %v2081
          %v2087 = vadd.f32 %v2073, %v462
          %v2088 = vadd.f32 %v2075, %v463
          %v2089 = vadd.f32 %v2079, %v464
          %v2090 = vadd.f32 %v2081, %v465
          %s2091 = scalar_lea.vmem %s7, %s466
          %v2092 = vld [vmem:[%s2091] sm:$0xff]
          %v2093 = vld [vmem:[%s2091 + $0x8] sm:$0xff]
          %v2095 = vsel %vm1889, %v2092, 0
          %v2098 = vsel %vm1889, %v2093, 0
          %2100 = vmatprep.subr.mxu0 0.0
          %2101 = vmatpush1.msra.mxu0 0.0
          %2102 = vmatprep.subr.mxu0 0.0
          %2103 = vmatpush1.msra.mxu0 0.0
          %2104 = vmatprep.subr.mxu0 0.0
          %2105 = vmatpush1.msra.mxu0 0.0
          %2106 = vmatprep.subr.mxu0 0.0
          %2107 = vmatpush1.msra.mxu0 0.0
          %2108 = vmatprep.subr.mxu0 0.0
          %2109 = vmatpush1.msra.mxu0 0.0
          %2110 = vmatprep.subr.mxu0 0.0
          %2111 = vmatpush1.msra.mxu0 0.0
          %2112 = vmatprep.subr.mxu0 0.0
          %2113 = vmatpush1.msra.mxu0 0.0
          %2114 = vmatprep.subr.mxu0 0.0
          %2115 = vmatpush1.msra.mxu0 0.0
          %2116 = vmatprep.subr.mxu0 0.0
          %2117 = vmatpush1.msra.mxu0 0.0
          %2118 = vmatprep.subr.mxu0 0.0
          %2119 = vmatpush1.msra.mxu0 0.0
          %2120 = vmatprep.subr.mxu0 0.0
          %2121 = vmatpush1.msra.mxu0 0.0
          %2122 = vmatprep.subr.mxu0 0.0
          %2123 = vmatpush1.msra.mxu0 0.0
          %2124 = vmatprep.subr.mxu0 0.0
          %2125 = vmatpush1.msra.mxu0 0.0
          %2126 = vmatprep.subr.mxu0 0.0
          %2127 = vmatpush1.msra.mxu0 0.0
          %2128 = vmatprep.subr.mxu0 %v2086
          %2129 = vmatpush1.msra.mxu0 %v2085
          %2130 = vmatprep.subr.mxu0 %v2084
          %2131 = vmatpush1.msra.mxu0 %v2083
          %2132 = vmatprep.subr.mxu0 0.0
          %2133 = vmatpush2.msra.mxu0 0.0
          %2134 = vmatprep.subr.mxu0 0.0
          %2135 = vmatpush2.msra.mxu0 0.0
          %2136 = vmatprep.subr.mxu0 0.0
          %2137 = vmatpush2.msra.mxu0 0.0
          %2138 = vmatprep.subr.mxu0 0.0
          %2139 = vmatpush2.msra.mxu0 0.0
          %2140 = vmatprep.subr.mxu0 0.0
          %2141 = vmatpush2.msra.mxu0 0.0
          %2142 = vmatprep.subr.mxu0 0.0
          %2143 = vmatpush2.msra.mxu0 0.0
          %2144 = vmatprep.subr.mxu0 0.0
          %2145 = vmatpush2.msra.mxu0 0.0
          %2146 = vmatprep.subr.mxu0 0.0
          %2147 = vmatpush2.msra.mxu0 0.0
          %2148 = vmatprep.subr.mxu0 0.0
          %2149 = vmatpush2.msra.mxu0 0.0
          %2150 = vmatprep.subr.mxu0 0.0
          %2151 = vmatpush2.msra.mxu0 0.0
          %2152 = vmatprep.subr.mxu0 0.0
          %2153 = vmatpush2.msra.mxu0 0.0
          %2154 = vmatprep.subr.mxu0 0.0
          %2155 = vmatpush2.msra.mxu0 0.0
          %2156 = vmatprep.subr.mxu0 0.0
          %2157 = vmatpush2.msra.mxu0 0.0
          %2158 = vmatprep.subr.mxu0 0.0
          %2159 = vmatpush2.msra.mxu0 0.0
          %2160 = vmatprep.subr.mxu0 0.0
          %2161 = vmatpush2.msra.mxu0 0.0
          %2162 = vmatprep.subr.mxu0 0.0
          %2163 = vmatpush2.msra.mxu0 0.0
          %2164 = vmatprep.mubr.f32.mxu0 0.0
          %2165 = vmatmul.mubr.f32.gmra.mxu0 %v2095
          %v2166 = vpop.f32.mrf.mxu0
          %v2167 = vadd.f32 0.0, %v2166
          %v2168 = vpop.f32.mrf.mxu0
          %v2169 = vadd.f32 0.0, %v2168
          %2170 = vmatprep.mubr.f32.mxu0 0.0
          %2171 = vmatmul.mubr.f32.gmra.mxu0 %v2098
          %v2172 = vpop.f32.mrf.mxu0
          %v2173 = vadd.f32 0.0, %v2172
          %v2174 = vpop.f32.mrf.mxu0
          %v2175 = vadd.f32 0.0, %v2174
          %2176 = vdwg.mxu0
          %s2177 = scalar_lea.vmem %s8, %s466
          %v2178 = vld [vmem:[%s2177] sm:$0xff]
          %v2179 = vld [vmem:[%s2177 + $0x8] sm:$0xff]
          %2180 = vrot.lane.b32.xlu0 %v2167, 17
          %v2181 = vpop.permute.xlu0 %2180
          %2182 = vrot.lane.b32.xlu0 %v2173, 17
          %v2183 = vpop.permute.xlu0 %2182
          %2184 = vrot.lane.b32.xlu0 %v2169, 17
          %v2185 = vpop.permute.xlu0 %2184
          %2186 = vrot.lane.b32.xlu0 %v2175, 17
          %v2187 = vpop.permute.xlu0 %2186
          %v2188 = vsel %vm480, %v2181, %v2185
          %v2189 = vsel %vm480, %v2183, %v2187
          %v2190 = vsel %vm480, %v2185, %v2181
          %v2191 = vsel %vm480, %v2187, %v2183
          %v2192 = vmul.f32 %v2190, %v500
          %v2193 = vmul.f32 %v2188, %v504
          %v2194 = vmul.f32 %v2191, %v500
          %v2195 = vmul.f32 %v2189, %v504
          %2197 = vset.pattern.permute.xlu0 0
          %2198 = vperm.xlu0 %2197, %v2178
          %v2199 = vpop.permute.xlu0 %2198
          %2202 = vset.pattern.permute.xlu0 0
          %2203 = vperm.xlu0 %2202, %v2179
          %v2204 = vpop.permute.xlu0 %2203
          %v2206 = vmul.f32 %v2199, %v2192
          %v2207 = vmul.f32 %v2199, %v2193
          %v2208 = vmul.f32 %v2204, %v2194
          %v2209 = vmul.f32 %v2204, %v2195
          %2210 = vrot.lane.b32.xlu0 %v2167, 16
          %v2211 = vpop.permute.xlu0 %2210
          %2212 = vrot.lane.b32.xlu0 %v2173, 16
          %v2213 = vpop.permute.xlu0 %2212
          %2214 = vrot.lane.b32.xlu0 %v2169, 16
          %v2215 = vpop.permute.xlu0 %2214
          %2216 = vrot.lane.b32.xlu0 %v2175, 16
          %v2217 = vpop.permute.xlu0 %2216
          %v2218 = vsel %vm607, %v2211, %v2215
          %v2219 = vsel %vm607, %v2213, %v2217
          %v2220 = vsel %vm607, %v2215, %v2211
          %v2221 = vsel %vm607, %v2217, %v2213
          %v2222 = vmul.f32 %v2220, %v627
          %v2223 = vmul.f32 %v2218, %v631
          %v2224 = vmul.f32 %v2221, %v627
          %v2225 = vmul.f32 %v2219, %v631
          %2226 = vset.pattern.permute.xlu0 1
          %2227 = vperm.xlu0 %2226, %v2178
          %v2228 = vpop.permute.xlu0 %2227
          %2230 = vset.pattern.permute.xlu0 1
          %2231 = vperm.xlu0 %2230, %v2179
          %v2232 = vpop.permute.xlu0 %2231
          %v2234 = vmul.f32 %v2228, %v2222
          %v2235 = vmul.f32 %v2228, %v2223
          %v2236 = vmul.f32 %v2232, %v2224
          %v2237 = vmul.f32 %v2232, %v2225
          %v2238 = vadd.f32 %v2206, %v2234
          %v2239 = vadd.f32 %v2207, %v2235
          %v2240 = vadd.f32 %v2208, %v2236
          %v2241 = vadd.f32 %v2209, %v2237
          %2242 = vrot.lane.b32.xlu0 %v2167, 15
          %v2243 = vpop.permute.xlu0 %2242
          %2244 = vrot.lane.b32.xlu0 %v2173, 15
          %v2245 = vpop.permute.xlu0 %2244
          %2246 = vrot.lane.b32.xlu0 %v2169, 15
          %v2247 = vpop.permute.xlu0 %2246
          %2248 = vrot.lane.b32.xlu0 %v2175, 15
          %v2249 = vpop.permute.xlu0 %2248
          %v2250 = vsel %vm744, %v2243, %v2247
          %v2251 = vsel %vm744, %v2245, %v2249
          %v2252 = vsel %vm744, %v2247, %v2243
          %v2253 = vsel %vm744, %v2249, %v2245
          %v2254 = vmul.f32 %v2252, %v764
          %v2255 = vmul.f32 %v2250, %v768
          %v2256 = vmul.f32 %v2253, %v764
          %v2257 = vmul.f32 %v2251, %v768
          %2258 = vset.pattern.permute.xlu0 2
          %2259 = vperm.xlu0 %2258, %v2178
          %v2260 = vpop.permute.xlu0 %2259
          %2262 = vset.pattern.permute.xlu0 2
          %2263 = vperm.xlu0 %2262, %v2179
          %v2264 = vpop.permute.xlu0 %2263
          %v2266 = vmul.f32 %v2260, %v2254
          %v2267 = vmul.f32 %v2260, %v2255
          %v2268 = vmul.f32 %v2264, %v2256
          %v2269 = vmul.f32 %v2264, %v2257
          %v2270 = vadd.f32 %v2238, %v2266
          %v2271 = vadd.f32 %v2239, %v2267
          %v2272 = vadd.f32 %v2240, %v2268
          %v2273 = vadd.f32 %v2241, %v2269
          %2274 = vrot.lane.b32.xlu0 %v2167, 1
          %v2275 = vpop.permute.xlu0 %2274
          %2276 = vrot.lane.b32.xlu0 %v2173, 1
          %v2277 = vpop.permute.xlu0 %2276
          %2278 = vrot.lane.b32.xlu0 %v2169, 1
          %v2279 = vpop.permute.xlu0 %2278
          %2280 = vrot.lane.b32.xlu0 %v2175, 1
          %v2281 = vpop.permute.xlu0 %2280
          %v2282 = vsel %vm881, %v2275, %v2279
          %v2283 = vsel %vm881, %v2277, %v2281
          %v2284 = vsel %vm881, %v2279, %v2275
          %v2285 = vsel %vm881, %v2281, %v2277
          %v2286 = vmul.f32 %v2284, %v901
          %v2287 = vmul.f32 %v2282, %v905
          %v2288 = vmul.f32 %v2285, %v901
          %v2289 = vmul.f32 %v2283, %v905
          %2290 = vset.pattern.permute.xlu0 3
          %2291 = vperm.xlu0 %2290, %v2178
          %v2292 = vpop.permute.xlu0 %2291
          %2294 = vset.pattern.permute.xlu0 3
          %2295 = vperm.xlu0 %2294, %v2179
          %v2296 = vpop.permute.xlu0 %2295
          %v2298 = vmul.f32 %v2292, %v2286
          %v2299 = vmul.f32 %v2292, %v2287
          %v2300 = vmul.f32 %v2296, %v2288
          %v2301 = vmul.f32 %v2296, %v2289
          %v2302 = vadd.f32 %v2270, %v2298
          %v2303 = vadd.f32 %v2271, %v2299
          %v2304 = vadd.f32 %v2272, %v2300
          %v2305 = vadd.f32 %v2273, %v2301
          %2306 = vset.pattern.permute.xlu0 4
          %2307 = vperm.xlu0 %2306, %v2178
          %v2308 = vpop.permute.xlu0 %2307
          %2310 = vset.pattern.permute.xlu0 4
          %2311 = vperm.xlu0 %2310, %v2179
          %v2312 = vpop.permute.xlu0 %2311
          %v2314 = vmul.f32 %v2308, %v2167
          %v2315 = vmul.f32 %v2308, %v2169
          %v2316 = vmul.f32 %v2312, %v2173
          %v2317 = vmul.f32 %v2312, %v2175
          %v2318 = vadd.f32 %v2302, %v2314
          %v2319 = vadd.f32 %v2303, %v2315
          %v2320 = vadd.f32 %v2304, %v2316
          %v2321 = vadd.f32 %v2305, %v2317
          %2322 = vrot.lane.b32.xlu0 %v2167, 127
          %v2323 = vpop.permute.xlu0 %2322
          %2324 = vrot.lane.b32.xlu0 %v2173, 127
          %v2325 = vpop.permute.xlu0 %2324
          %2326 = vrot.lane.b32.xlu0 %v2169, 127
          %v2327 = vpop.permute.xlu0 %2326
          %2328 = vrot.lane.b32.xlu0 %v2175, 127
          %v2329 = vpop.permute.xlu0 %2328
          %v2330 = vsel %vm1114, %v2323, %v2327
          %v2331 = vsel %vm1114, %v2325, %v2329
          %v2332 = vsel %vm1114, %v2327, %v2323
          %v2333 = vsel %vm1114, %v2329, %v2325
          %v2334 = vmul.f32 %v2330, %v1134
          %v2335 = vmul.f32 %v2332, %v1138
          %v2336 = vmul.f32 %v2331, %v1134
          %v2337 = vmul.f32 %v2333, %v1138
          %2338 = vset.pattern.permute.xlu0 5
          %2339 = vperm.xlu0 %2338, %v2178
          %v2340 = vpop.permute.xlu0 %2339
          %2342 = vset.pattern.permute.xlu0 5
          %2343 = vperm.xlu0 %2342, %v2179
          %v2344 = vpop.permute.xlu0 %2343
          %v2346 = vmul.f32 %v2340, %v2334
          %v2347 = vmul.f32 %v2340, %v2335
          %v2348 = vmul.f32 %v2344, %v2336
          %v2349 = vmul.f32 %v2344, %v2337
          %v2350 = vadd.f32 %v2318, %v2346
          %v2351 = vadd.f32 %v2319, %v2347
          %v2352 = vadd.f32 %v2320, %v2348
          %v2353 = vadd.f32 %v2321, %v2349
          %2354 = vrot.lane.b32.xlu0 %v2167, 113
          %v2355 = vpop.permute.xlu0 %2354
          %2356 = vrot.lane.b32.xlu0 %v2173, 113
          %v2357 = vpop.permute.xlu0 %2356
          %2358 = vrot.lane.b32.xlu0 %v2169, 113
          %v2359 = vpop.permute.xlu0 %2358
          %2360 = vrot.lane.b32.xlu0 %v2175, 113
          %v2361 = vpop.permute.xlu0 %2360
          %v2362 = vsel %vm1251, %v2355, %v2359
          %v2363 = vsel %vm1251, %v2357, %v2361
          %v2364 = vsel %vm1251, %v2359, %v2355
          %v2365 = vsel %vm1251, %v2361, %v2357
          %v2366 = vmul.f32 %v2362, %v1271
          %v2367 = vmul.f32 %v2364, %v1275
          %v2368 = vmul.f32 %v2363, %v1271
          %v2369 = vmul.f32 %v2365, %v1275
          %2370 = vset.pattern.permute.xlu0 6
          %2371 = vperm.xlu0 %2370, %v2178
          %v2372 = vpop.permute.xlu0 %2371
          %2374 = vset.pattern.permute.xlu0 6
          %2375 = vperm.xlu0 %2374, %v2179
          %v2376 = vpop.permute.xlu0 %2375
          %v2378 = vmul.f32 %v2372, %v2366
          %v2379 = vmul.f32 %v2372, %v2367
          %v2380 = vmul.f32 %v2376, %v2368
          %v2381 = vmul.f32 %v2376, %v2369
          %v2382 = vadd.f32 %v2350, %v2378
          %v2383 = vadd.f32 %v2351, %v2379
          %v2384 = vadd.f32 %v2352, %v2380
          %v2385 = vadd.f32 %v2353, %v2381
          %2386 = vrot.lane.b32.xlu0 %v2167, 112
          %v2387 = vpop.permute.xlu0 %2386
          %2388 = vrot.lane.b32.xlu0 %v2173, 112
          %v2389 = vpop.permute.xlu0 %2388
          %2390 = vrot.lane.b32.xlu0 %v2169, 112
          %v2391 = vpop.permute.xlu0 %2390
          %2392 = vrot.lane.b32.xlu0 %v2175, 112
          %v2393 = vpop.permute.xlu0 %2392
          %v2394 = vsel %vm1388, %v2387, %v2391
          %v2395 = vsel %vm1388, %v2389, %v2393
          %v2396 = vsel %vm1388, %v2391, %v2387
          %v2397 = vsel %vm1388, %v2393, %v2389
          %v2398 = vmul.f32 %v2394, %v1408
          %v2399 = vmul.f32 %v2396, %v1412
          %v2400 = vmul.f32 %v2395, %v1408
          %v2401 = vmul.f32 %v2397, %v1412
          %2402 = vset.pattern.permute.xlu0 7
          %2403 = vperm.xlu0 %2402, %v2178
          %v2404 = vpop.permute.xlu0 %2403
          %2406 = vset.pattern.permute.xlu0 7
          %2407 = vperm.xlu0 %2406, %v2179
          %v2408 = vpop.permute.xlu0 %2407
          %v2410 = vmul.f32 %v2404, %v2398
          %v2411 = vmul.f32 %v2404, %v2399
          %v2412 = vmul.f32 %v2408, %v2400
          %v2413 = vmul.f32 %v2408, %v2401
          %v2414 = vadd.f32 %v2382, %v2410
          %v2415 = vadd.f32 %v2383, %v2411
          %v2416 = vadd.f32 %v2384, %v2412
          %v2417 = vadd.f32 %v2385, %v2413
          %2418 = vrot.lane.b32.xlu0 %v2167, 111
          %v2419 = vpop.permute.xlu0 %2418
          %2420 = vrot.lane.b32.xlu0 %v2173, 111
          %v2421 = vpop.permute.xlu0 %2420
          %2422 = vrot.lane.b32.xlu0 %v2169, 111
          %v2423 = vpop.permute.xlu0 %2422
          %2424 = vrot.lane.b32.xlu0 %v2175, 111
          %v2425 = vpop.permute.xlu0 %2424
          %v2426 = vsel %vm1525, %v2419, %v2423
          %v2427 = vsel %vm1525, %v2421, %v2425
          %v2428 = vsel %vm1525, %v2423, %v2419
          %v2429 = vsel %vm1525, %v2425, %v2421
          %v2430 = vmul.f32 %v2426, %v1545
          %v2431 = vmul.f32 %v2428, %v1549
          %v2432 = vmul.f32 %v2427, %v1545
          %v2433 = vmul.f32 %v2429, %v1549
          %2434 = vset.pattern.permute.xlu0 8
          %2435 = vperm.xlu0 %2434, %v2178
          %v2436 = vpop.permute.xlu0 %2435
          %2438 = vset.pattern.permute.xlu0 8
          %2439 = vperm.xlu0 %2438, %v2179
          %v2440 = vpop.permute.xlu0 %2439
          %v2442 = vmul.f32 %v2436, %v2430
          %v2443 = vmul.f32 %v2436, %v2431
          %v2444 = vmul.f32 %v2440, %v2432
          %v2445 = vmul.f32 %v2440, %v2433
          %v2446 = vadd.f32 %v2414, %v2442
          %v2447 = vadd.f32 %v2415, %v2443
          %v2448 = vadd.f32 %v2416, %v2444
          %v2449 = vadd.f32 %v2417, %v2445
          %v2450 = vmul.f32 %v2446, 0.5
          %v2451 = vmul.f32 %v2447, 0.5
          %v2452 = vmul.f32 %v2446, %v2446
          %v2453 = vmul.f32 %v2447, %v2447
          %v2454 = vmul.f32 %v2452, %v2446
          %v2455 = vmul.f32 %v2453, %v2447
          %v2456 = vmul.f32 %v2454, 0.044715
          %v2457 = vmul.f32 %v2455, 0.044715
          %v2458 = vadd.f32 %v2446, %v2456
          %v2459 = vadd.f32 %v2447, %v2457
          %v2460 = vmul.f32 %v2458, 0.7978846
          %v2461 = vmul.f32 %v2459, 0.7978846
          %v2462 = vtanh.pop %v2460
          %v2463 = vtanh.pop %v2461
          %v2464 = vadd.f32 %v2462, 1.0
          %v2465 = vadd.f32 %v2463, 1.0
          %v2466 = vmul.f32 %v2450, %v2464
          %v2467 = vmul.f32 %v2451, %v2465
          %v2468 = vmul.f32 %v2466, %v2448
          %v2469 = vmul.f32 %v2467, %v2449
          %s2470 = scalar_lea.vmem %s9, %s466
          %v2471 = vld [vmem:[%s2470] sm:$0xff]
          %v2472 = vld [vmem:[%s2470 + $0x8] sm:$0xff]
          %vm2473 = vcmask 64512
          %v2475 = vsel %vm2473, %v2471, 0
          %v2478 = vsel %vm2473, %v2472, 0
          %2480 = vmatprep.subr.mxu0 0.0
          %2481 = vmatpush1.msra.mxu0 0.0
          %2482 = vmatprep.subr.mxu0 0.0
          %2483 = vmatpush1.msra.mxu0 0.0
          %2484 = vmatprep.subr.mxu0 0.0
          %2485 = vmatpush1.msra.mxu0 0.0
          %2486 = vmatprep.subr.mxu0 0.0
          %2487 = vmatpush1.msra.mxu0 0.0
          %2488 = vmatprep.subr.mxu0 0.0
          %2489 = vmatpush1.msra.mxu0 0.0
          %2490 = vmatprep.subr.mxu0 0.0
          %2491 = vmatpush1.msra.mxu0 0.0
          %2492 = vmatprep.subr.mxu0 0.0
          %2493 = vmatpush1.msra.mxu0 0.0
          %2494 = vmatprep.subr.mxu0 0.0
          %2495 = vmatpush1.msra.mxu0 0.0
          %2496 = vmatprep.subr.mxu0 0.0
          %2497 = vmatpush1.msra.mxu0 0.0
          %2498 = vmatprep.subr.mxu0 0.0
          %2499 = vmatpush1.msra.mxu0 0.0
          %2500 = vmatprep.subr.mxu0 0.0
          %2501 = vmatpush1.msra.mxu0 0.0
          %2502 = vmatprep.subr.mxu0 0.0
          %2503 = vmatpush1.msra.mxu0 0.0
          %2504 = vmatprep.subr.mxu0 0.0
          %2505 = vmatpush1.msra.mxu0 0.0
          %2506 = vmatprep.subr.mxu0 0.0
          %2507 = vmatpush1.msra.mxu0 0.0
          %2508 = vmatprep.subr.mxu0 0.0
          %2509 = vmatpush1.msra.mxu0 0.0
          %2510 = vmatprep.subr.mxu0 %v2469
          %2511 = vmatpush1.msra.mxu0 %v2468
          %2512 = vmatprep.subr.mxu0 0.0
          %2513 = vmatpush2.msra.mxu0 0.0
          %2514 = vmatprep.subr.mxu0 0.0
          %2515 = vmatpush2.msra.mxu0 0.0
          %2516 = vmatprep.subr.mxu0 0.0
          %2517 = vmatpush2.msra.mxu0 0.0
          %2518 = vmatprep.subr.mxu0 0.0
          %2519 = vmatpush2.msra.mxu0 0.0
          %2520 = vmatprep.subr.mxu0 0.0
          %2521 = vmatpush2.msra.mxu0 0.0
          %2522 = vmatprep.subr.mxu0 0.0
          %2523 = vmatpush2.msra.mxu0 0.0
          %2524 = vmatprep.subr.mxu0 0.0
          %2525 = vmatpush2.msra.mxu0 0.0
          %2526 = vmatprep.subr.mxu0 0.0
          %2527 = vmatpush2.msra.mxu0 0.0
          %2528 = vmatprep.subr.mxu0 0.0
          %2529 = vmatpush2.msra.mxu0 0.0
          %2530 = vmatprep.subr.mxu0 0.0
          %2531 = vmatpush2.msra.mxu0 0.0
          %2532 = vmatprep.subr.mxu0 0.0
          %2533 = vmatpush2.msra.mxu0 0.0
          %2534 = vmatprep.subr.mxu0 0.0
          %2535 = vmatpush2.msra.mxu0 0.0
          %2536 = vmatprep.subr.mxu0 0.0
          %2537 = vmatpush2.msra.mxu0 0.0
          %2538 = vmatprep.subr.mxu0 0.0
          %2539 = vmatpush2.msra.mxu0 0.0
          %2540 = vmatprep.subr.mxu0 0.0
          %2541 = vmatpush2.msra.mxu0 0.0
          %2542 = vmatprep.subr.mxu0 0.0
          %2543 = vmatpush2.msra.mxu0 0.0
          %2544 = vmatprep.mubr.f32.mxu0 0.0
          %2545 = vmatmul.mubr.f32.gmra.mxu0 %v2475
          %v2546 = vpop.f32.mrf.mxu0
          %v2547 = vadd.f32 0.0, %v2546
          %v2548 = vpop.f32.mrf.mxu0
          %v2549 = vadd.f32 0.0, %v2548
          %2550 = vmatprep.mubr.f32.mxu0 0.0
          %2551 = vmatmul.mubr.f32.gmra.mxu0 %v2478
          %v2552 = vpop.f32.mrf.mxu0
          %v2553 = vadd.f32 0.0, %v2552
          %v2554 = vpop.f32.mrf.mxu0
          %v2555 = vadd.f32 0.0, %v2554
          %2556 = vdwg.mxu0
          %v2557 = vadd.f32 %v2083, %v2547
          %v2558 = vadd.f32 %v2084, %v2549
          %v2559 = vadd.f32 %v2085, %v2553
          %v2560 = vadd.f32 %v2086, %v2555
        $region69: #{se_block_forward.1} parent=59 // loop_footer
          %s457 = sadd.s32 1, %s453
        $region70: #{se_block_forward.1} parent=59 // loop_footer_branch
          %452 = sbr.rel target = $region66
        $region71: #{se_block_forward.1} parent=59 // loop_exit
          _
        %2561 = vst [vmem:[%s428] sm:$0xff] %v458
        %2562 = vst [vmem:[%s428 + $0x8] sm:$0xff] %v459
        %2563 = vst [vmem:[%s428 + $0x10] sm:$0xff] %v460
        %2564 = vst [vmem:[%s428 + $0x18] sm:$0xff] %v461
        %2565 = vst [vmem:[%s433] sm:$0xff] %v462
        %2566 = vst [vmem:[%s433 + $0x8] sm:$0xff] %v463
        %2567 = vst [vmem:[%s433 + $0x10] sm:$0xff] %v464
        %2568 = vst [vmem:[%s433 + $0x18] sm:$0xff] %v465
        %p2569 = scmp.lt.s32.totalorder %s24, 1
        %s2570 = scalar_select %p2569, %s24, 1
        %s2571 = smul.addr %s2570, 4
        %s2572 = smul.addr %s2571, 8
        %s2573 = scalar_lea.vmem %s10, %s2572
        %p2574 = scmp.lt.s32.totalorder %s24, 1
        %s2575 = scalar_select %p2574, %s24, 1
        %s2576 = smul.addr %s2575, 4
        %s2577 = smul.addr %s2576, 8
        %s2578 = scalar_lea.vmem %s11, %s2577
        // Predicated region
        $region72: #{se_block_forward.1} parent=59 // pred_check
          %p2579 = pneg %p262
        $region73: #{se_block_forward.1} parent=59 // pred_check_branch
          %2581 = sbr.rel (%p2579) target = $region75
        $region74: #{se_block_forward.1} parent=59 // pred_region
          _
        $region75: #{se_block_forward.1} parent=59 // pred_fallthru
          _
        // Predicated region
        $region76: #{se_block_forward.1} parent=59 // pred_check
          %p2582 = pneg %p288
        $region77: #{se_block_forward.1} parent=59 // pred_check_branch
          %2584 = sbr.rel (%p2582) target = $region79
        $region78: #{se_block_forward.1} parent=59 // pred_region
          _
        $region79: #{se_block_forward.1} parent=59 // pred_fallthru
          _
      $region60: #{se_block_forward.1} parent=5 // pred_fallthru
        _
      %p2585 = scmp.le.s32.totalorder 2, %s19
      // Predicated region
      $region80: #{se_block_forward.1} parent=5 // pred_check
        %p2586 = pneg %p2585
      $region81: #{se_block_forward.1} parent=5 // pred_check_branch
        %2588 = sbr.rel (%p2586) target = $region83
      $region82: #{se_block_forward.1} parent=5 // pred_region
        %s2589 = ssub.s32 %s19, 2
        // Predicated region
        $region84: #{se_block_forward.1} parent=82 // pred_check
          %p2590 = pneg %p268
        $region85: #{se_block_forward.1} parent=82 // pred_check_branch
          %2592 = sbr.rel (%p2590) target = $region87
        $region86: #{se_block_forward.1} parent=82 // pred_region
          %p2593 = scmp.lt.s32.totalorder %s25, 1
          %s2594 = scalar_select %p2593, %s25, 1
          %s2595 = smul.addr %s2594, 4
          %s2596 = smul.addr %s2595, 8
          %s2597 = scalar_lea.vmem %s10, %s2596
        $region87: #{se_block_forward.1} parent=82 // pred_fallthru
          _
        // Predicated region
        $region88: #{se_block_forward.1} parent=82 // pred_check
          %p2598 = pneg %p294
        $region89: #{se_block_forward.1} parent=82 // pred_check_branch
          %2600 = sbr.rel (%p2598) target = $region91
        $region90: #{se_block_forward.1} parent=82 // pred_region
          %p2601 = scmp.lt.s32.totalorder %s25, 1
          %s2602 = scalar_select %p2601, %s25, 1
          %s2603 = smul.addr %s2602, 4
          %s2604 = smul.addr %s2603, 8
          %s2605 = scalar_lea.vmem %s11, %s2604
        $region91: #{se_block_forward.1} parent=82 // pred_fallthru
          _
      $region83: #{se_block_forward.1} parent=5 // pred_fallthru
        _
    $region6: #{se_block_forward.1} parent=1 // loop_footer
      %s23 = sadd.s32 1, %s19
    $region7: #{se_block_forward.1} parent=1 // loop_footer_branch
      %18 = sbr.rel target = $region3
    $region8: #{se_block_forward.1} parent=1 // loop_exit
      _
    %2606 = vsyncpa [#allocation3], 1
    %s2607 = scalar_lea.sflag [#allocation3], 1
    %2608 = vsyncpa %s2607, 1

</llo_original>
